<compile_context>
chip_gen: v6e
topology: v6e:2x2x1
jax: 0.10.0
libtpu: 0.0.40
codegen_flags: <defaults>
</compile_context>

<pallas_src>
import functools

import jax
import jax.numpy as jnp
from jax.experimental import pallas as pl
from jax.experimental.pallas import tpu as pltpu


LANE = 128                       # TPU lane width; channel dims are padded to this.
TILE_M_MAX = 512                 # rows per matmul grid step (512-1024 is the sweet spot)
_VMEM_LIMIT = 48 * 1024 * 1024   # explicit scoped-VMEM budget (safe on v7x's 64 MiB)


def _round_up(x, m):
    return ((x + m - 1) // m) * m


# ---------------------------------------------------------------------------
# Pallas kernels
# ---------------------------------------------------------------------------

def _mm_bias_act_kernel(x_ref, w_ref, b_ref, o_ref, *, relu):
    # x: (TILE_M, K) f32, w: (K, Coutp) bf16, b: (1, Coutp) f32, o: (TILE_M, Coutp) f32
    y = jnp.dot(x_ref[...].astype(jnp.bfloat16), w_ref[...],
                preferred_element_type=jnp.float32)       # MXU in bf16, f32 accumulate
    y = y + b_ref[...]                                     # bias + activation in f32
    if relu:
        y = jnp.maximum(y, 0.0)
    o_ref[...] = y


def _dw3x3_relu_kernel(x_ref, w_ref, b_ref, o_ref):
    # x: (Hp, Wp, CT) padded image (halo included), w: (3, 3, CT), b: (1, CT),
    # o: (H, W, CT) stride-1 output.  Taps are generated in-kernel (no 9x taps tensor).
    H, W, CT = o_ref.shape
    xb = x_ref[...]                       # single VMEM load of the padded image block
    wv = w_ref[...]
    acc = jnp.zeros((H, W, CT), jnp.float32)
    for kh in range(3):                   # static unroll over the 9 taps (VPU MACs, f32)
        for kw in range(3):
            tap = xb[kh:kh + H, kw:kw + W, :]
            acc = acc + tap * wv[kh, kw].reshape(1, 1, CT)
    acc = acc + b_ref[...].reshape(1, 1, CT)
    o_ref[...] = jnp.maximum(acc, 0.0)


def _gap_linear_kernel(x_ref, w_ref, b_ref, o_ref):
    # x: (BN, HW, Cp) f32, w: (Cp, Kp) bf16, b: (1, Kp) f32, o: (BN, Kp) f32
    pooled = jnp.mean(x_ref[...], axis=1)                  # global average pool
    y = jnp.dot(pooled.astype(jnp.bfloat16), w_ref[...],
                preferred_element_type=jnp.float32)
    o_ref[...] = y + b_ref[...]


# ---------------------------------------------------------------------------
# Pallas call wrappers
# ---------------------------------------------------------------------------

def _matmul_bias_act(x, w, b, *, relu):
    """Tiled (M, K) @ (K, Coutp) + bias (+ ReLU).  M axis is tiled & pipelined."""
    M, K = x.shape
    Coutp = w.shape[1]
    tm = min(TILE_M_MAX, _round_up(M, 8))
    Mp = _round_up(M, tm)
    if Mp != M:
        x = jnp.pad(x, ((0, Mp - M), (0, 0)))
    out = pl.pallas_call(
        functools.partial(_mm_bias_act_kernel, relu=relu),
        out_shape=jax.ShapeDtypeStruct((Mp, Coutp), jnp.float32),
        grid=(Mp // tm,),
        in_specs=[
            pl.BlockSpec((tm, K), lambda i: (i, 0)),       # activations: tiled over M
            pl.BlockSpec((K, Coutp), lambda i: (0, 0)),    # weights: resident
            pl.BlockSpec((1, Coutp), lambda i: (0, 0)),    # bias: resident
        ],
        out_specs=pl.BlockSpec((tm, Coutp), lambda i: (i, 0)),
        compiler_params=pltpu.CompilerParams(
            dimension_semantics=("parallel",),
            vmem_limit_bytes=_VMEM_LIMIT),
    )(x, w, b)
    return out[:M]


def conv3x3_s2_relu(x, wmat, b):
    """Stage0 dense 3x3, stride 2, pad 1.  Cin=3, so the tiny K=27 im2col is kept
    (a few KB); the matmul itself is the tiled Pallas kernel."""
    N, H, W, Cin = x.shape
    k, stride, pad = 3, 2, 1
    Ho = (H + 2 * pad - k) // stride + 1
    Wo = (W + 2 * pad - k) // stride + 1
    xp = jnp.pad(x, ((0, 0), (pad, pad), (pad, pad), (0, 0)))
    taps = []
    for kh in range(k):
        for kw in range(k):
            taps.append(jax.lax.slice(
                xp, (0, kh, kw, 0),
                (N, kh + (Ho - 1) * stride + 1, kw + (Wo - 1) * stride + 1, Cin),
                (1, stride, stride, 1)))
    # channel order (kh, kw, cin) matches w.reshape(9*Cin, Cout)
    patches = jnp.concatenate(taps, axis=-1).reshape(N * Ho * Wo, k * k * Cin)
    out = _matmul_bias_act(patches, wmat, b, relu=True)
    return out.reshape(N, Ho, Wo, wmat.shape[1])


def pwconv_relu(x, w, b):
    """Pointwise 1x1 conv (groups=1): a tiled matmul on the NHWC activation, no im2col."""
    N, H, W, Cp = x.shape
    out = _matmul_bias_act(x.reshape(N * H * W, Cp), w, b, relu=True)
    return out.reshape(N, H, W, w.shape[1])


def dwconv3x3_relu(x, w, b, stride):
    """Depthwise 3x3 conv (groups=C), padding 1.  One padded image (halo included) per
    grid step; taps generated in-kernel.  Stride-2 output is subsampled outside."""
    N, H, W, Cp = x.shape
    xp = jnp.pad(x, ((0, 0), (1, 1), (1, 1), (0, 0)))
    Hp, Wp = H + 2, W + 2
    CT = LANE
    y = pl.pallas_call(
        _dw3x3_relu_kernel,
        out_shape=jax.ShapeDtypeStruct((N, H, W, Cp), jnp.float32),
        grid=(N, Cp // CT),
        in_specs=[
            pl.BlockSpec((None, Hp, Wp, CT), lambda n, c: (n, 0, 0, c)),  # padded image
            pl.BlockSpec((3, 3, CT), lambda n, c: (0, 0, c)),             # per-ch weights
            pl.BlockSpec((1, CT), lambda n, c: (0, c)),                   # bias
        ],
        out_specs=pl.BlockSpec((None, H, W, CT), lambda n, c: (n, 0, 0, c)),
        compiler_params=pltpu.CompilerParams(
            dimension_semantics=("parallel", "parallel"),
            vmem_limit_bytes=_VMEM_LIMIT),
    )(xp, w, b)
    if stride > 1:
        y = y[:, ::stride, ::stride, :]
    return y


def gap_linear(x, w, b, n_classes):
    """AdaptiveAvgPool2d(1) + flatten + Linear (no activation)."""
    N, H, W, Cp = x.shape
    Kp = w.shape[1]
    BN = 8
    Np = _round_up(N, BN)
    xr = x.reshape(N, H * W, Cp)
    if Np != N:
        xr = jnp.pad(xr, ((0, Np - N), (0, 0), (0, 0)))
    out = pl.pallas_call(
        _gap_linear_kernel,
        out_shape=jax.ShapeDtypeStruct((Np, Kp), jnp.float32),
        grid=(Np // BN,),
        in_specs=[
            pl.BlockSpec((BN, H * W, Cp), lambda i: (i, 0, 0)),
            pl.BlockSpec((Cp, Kp), lambda i: (0, 0)),
            pl.BlockSpec((1, Kp), lambda i: (0, 0)),
        ],
        out_specs=pl.BlockSpec((BN, Kp), lambda i: (i, 0)),
        compiler_params=pltpu.CompilerParams(
            dimension_semantics=("parallel",),
            vmem_limit_bytes=_VMEM_LIMIT),
    )(xr, w, b)
    return out[:N, :n_classes]


# ---------------------------------------------------------------------------
# MobileOne model definition (mirrors the PyTorch constructor logic)
# ---------------------------------------------------------------------------

def build_mobileone_config(num_blocks_per_stage, width_multipliers):
    assert len(width_multipliers) == 4
    blocks = []
    in_planes = min(64, int(64 * width_multipliers[0]))
    # stage0: in=3, out=in_planes, k=3, s=2, p=1, groups=1
    blocks.append(dict(kind="conv3x3", cin=3, cout=in_planes, stride=2))
    stage_planes = [
        int(64 * width_multipliers[0]),
        int(128 * width_multipliers[1]),
        int(256 * width_multipliers[2]),
        int(512 * width_multipliers[3]),
    ]
    for planes, nb in zip(stage_planes, num_blocks_per_stage):
        strides = [2] + [1] * (nb - 1)
        for s in strides:
            # depthwise 3x3 (groups = in_planes), then pointwise 1x1 (groups = 1)
            blocks.append(dict(kind="dw3x3", cin=in_planes, cout=in_planes, stride=s))
            blocks.append(dict(kind="pw1x1", cin=in_planes, cout=planes, stride=1))
            in_planes = planes
    return blocks, in_planes


def init_params(key, blocks, final_channels, num_classes):
    """Random reparameterized weights; padded to lane-dense (multiple-of-128) channel
    dims.  Zero padding keeps the padded lanes exactly zero through the whole net."""
    params = []
    for blk in blocks:
        key, kw_, kb_ = jax.random.split(key, 3)
        cin, cout = blk["cin"], blk["cout"]
        if blk["kind"] == "conv3x3":
            coutp = _round_up(cout, LANE)
            w = jax.random.normal(kw_, (3, 3, cin, cout), jnp.float32)
            w = w / jnp.sqrt(jnp.float32(9 * cin))
            wmat = w.reshape(9 * cin, cout)                       # (kh, kw, cin) order
            wmat = jnp.pad(wmat, ((0, 0), (0, coutp - cout))).astype(jnp.bfloat16)
            b = 0.01 * jax.random.normal(kb_, (cout,), jnp.float32)
            bp = jnp.pad(b, (0, coutp - cout)).reshape(1, coutp)
            params.append(dict(w=wmat, b=bp))
        elif blk["kind"] == "dw3x3":
            cp = _round_up(cin, LANE)
            w = jax.random.normal(kw_, (3, 3, cin), jnp.float32) / 3.0
            wp = jnp.pad(w, ((0, 0), (0, 0), (0, cp - cin)))      # f32 (VPU path)
            b = 0.01 * jax.random.normal(kb_, (cin,), jnp.float32)
            bp = jnp.pad(b, (0, cp - cin)).reshape(1, cp)
            params.append(dict(w=wp, b=bp))
        else:  # pw1x1
            cinp, coutp = _round_up(cin, LANE), _round_up(cout, LANE)
            w = jax.random.normal(kw_, (cin, cout), jnp.float32)
            w = w / jnp.sqrt(jnp.float32(cin))
            wp = jnp.pad(w, ((0, cinp - cin), (0, coutp - cout))).astype(jnp.bfloat16)
            b = 0.01 * jax.random.normal(kb_, (cout,), jnp.float32)
            bp = jnp.pad(b, (0, coutp - cout)).reshape(1, coutp)
            params.append(dict(w=wp, b=bp))
    key, kw_, kb_ = jax.random.split(key, 3)
    cp, kp = _round_up(final_channels, LANE), _round_up(num_classes, LANE)
    wl = jax.random.normal(kw_, (final_channels, num_classes), jnp.float32)
    wl = wl / jnp.sqrt(jnp.float32(final_channels))
    wlp = jnp.pad(wl, ((0, cp - final_channels), (0, kp - num_classes))).astype(jnp.bfloat16)
    bl = 0.01 * jax.random.normal(kb_, (num_classes,), jnp.float32)
    blp = jnp.pad(bl, (0, kp - num_classes)).reshape(1, kp)
    return params, (wlp, blp)


def mobileone_forward(x_nchw, params, head_params, blocks, num_classes):
    # layout: NCHW (PyTorch) -> NHWC for all Pallas kernels.
    x = jnp.transpose(x_nchw, (0, 2, 3, 1)).astype(jnp.float32)
    for blk, p in zip(blocks, params):
        if blk["kind"] == "conv3x3":
            x = conv3x3_s2_relu(x, p["w"], p["b"])
        elif blk["kind"] == "dw3x3":
            x = dwconv3x3_relu(x, p["w"], p["b"], stride=blk["stride"])
        else:  # pw1x1: kernel 1, stride 1, padding 0
            x = pwconv_relu(x, p["w"], p["b"])
    wl, bl = head_params
    return gap_linear(x, wl, bl, num_classes)   # (N, num_classes)


# ---------------------------------------------------------------------------
# Main
# ---------------------------------------------------------------------------

if __name__ == "__main__":
    # Small configuration consistent with the constructor:
    #   width_multipliers=(0.25,)*4, num_blocks_per_stage=(1,1,1,1), num_classes=16
    num_blocks_per_stage = (1, 1, 1, 1)
    width_multipliers = (0.25, 0.25, 0.25, 0.25)
    num_classes = 16

    blocks, final_c = build_mobileone_config(num_blocks_per_stage, width_multipliers)

    key = jax.random.PRNGKey(0)
    key, kx = jax.random.split(key)
    x = jax.random.normal(kx, (2, 3, 32, 32), jnp.float32)  # NCHW, like PyTorch

    params, head_params = init_params(key, blocks, final_c, num_classes)

    @jax.jit
    def run(x_in, prm, head):
        return mobileone_forward(x_in, prm, head, blocks, num_classes)

    out = run(x, params, head_params)
    out = jax.block_until_ready(out)
    assert out.shape == (2, num_classes), out.shape
    assert bool(jnp.all(jnp.isfinite(out)))
    print("KERNEL_OK")
</pallas_src>

<mosaic_0001>
module attributes {stable_mosaic.version = 11 : i64} {
  func.func @_mm_bias_act_kernel(%arg0: i32, %arg1: memref<512x27xf32, #tpu.memory_space<vmem>>, %arg2: memref<27x128xbf16, #tpu.memory_space<vmem>>, %arg3: memref<1x128xf32, #tpu.memory_space<vmem>>, %arg4: memref<512x128xf32, #tpu.memory_space<vmem>>) attributes {dimension_semantics = [#tpu.dimension_semantics<parallel>], iteration_bounds = array<i64: 1>, scalar_prefetch = 0 : i64, scratch_operands = 0 : i64, tpu.core_type = #tpu.core_type<tc>, window_params = [{transform_indices = @transform_0, window_bounds = array<i64: 512, 27>}, {pipeline_mode = #tpu.pipeline_mode<synchronous>, transform_indices = @transform_1, window_bounds = array<i64: 27, 128>}, {pipeline_mode = #tpu.pipeline_mode<synchronous>, transform_indices = @transform_2, window_bounds = array<i64: 1, 128>}, {transform_indices = @transform_3, window_bounds = array<i64: 512, 128>}]} {
    %c0 = arith.constant 0 : index
    %c0_0 = arith.constant 0 : index
    %0 = vector.load %arg1[%c0, %c0_0] : memref<512x27xf32, #tpu.memory_space<vmem>>, vector<512x27xf32>
    %1 = arith.truncf %0 : vector<512x27xf32> to vector<512x27xbf16>
    %c0_1 = arith.constant 0 : index
    %c0_2 = arith.constant 0 : index
    %2 = vector.load %arg2[%c0_1, %c0_2] : memref<27x128xbf16, #tpu.memory_space<vmem>>, vector<27x128xbf16>
    %cst = arith.constant dense<0.000000e+00> : vector<512x128xf32>
    %3 = tpu.matmul %1, %2, %cst {dimension_numbers = #tpu.dot_dimension_numbers<[1], [0], [0], [1], [0, 0, 1, 1], [], []>} : vector<512x27xbf16>, vector<27x128xbf16>, vector<512x128xf32> -> vector<512x128xf32>
    %c0_3 = arith.constant 0 : index
    %c0_4 = arith.constant 0 : index
    %4 = vector.load %arg3[%c0_3, %c0_4] : memref<1x128xf32, #tpu.memory_space<vmem>>, vector<1x128xf32>
    %5 = vector.broadcast %4 : vector<1x128xf32> to vector<512x128xf32>
    %6 = arith.addf %3, %5 : vector<512x128xf32>
    %cst_5 = arith.constant 0.000000e+00 : f32
    %7 = vector.broadcast %cst_5 : f32 to vector<512x128xf32>
    %8 = arith.maximumf %6, %7 : vector<512x128xf32>
    %c0_6 = arith.constant 0 : index
    %c0_7 = arith.constant 0 : index
    %9 = vector.load %arg4[%c0_6, %c0_7] : memref<512x128xf32, #tpu.memory_space<vmem>>, vector<512x128xf32>
    tpu.vector_store %arg4[%c0_6, %c0_7], %8 {strides = array<i32>} : memref<512x128xf32, #tpu.memory_space<vmem>>, vector<512x128xf32>,
    return
  }
  func.func @transform_0(%arg0: i32) -> (i32, i32) {
    %c0_i32 = arith.constant 0 : i32
    %c0_i32_0 = arith.constant 0 : i32
    return %arg0, %c0_i32 : i32, i32
  }
  func.func @transform_1(%arg0: i32) -> (i32, i32) {
    %c0_i32 = arith.constant 0 : i32
    %c0_i32_0 = arith.constant 0 : i32
    %c0_i32_1 = arith.constant 0 : i32
    return %c0_i32, %c0_i32_0 : i32, i32
  }
  func.func @transform_2(%arg0: i32) -> (i32, i32) {
    %c0_i32 = arith.constant 0 : i32
    %c0_i32_0 = arith.constant 0 : i32
    %c0_i32_1 = arith.constant 0 : i32
    return %c0_i32, %c0_i32_0 : i32, i32
  }
  func.func @transform_3(%arg0: i32) -> (i32, i32) {
    %c0_i32 = arith.constant 0 : i32
    %c0_i32_0 = arith.constant 0 : i32
    return %arg0, %c0_i32 : i32, i32
  }
}

module attributes {stable_mosaic.version = 11 : i64} {
  func.func @_dw3x3_relu_kernel(%arg0: i32, %arg1: i32, %arg2: memref<1x18x18x128xf32, #tpu.memory_space<vmem>>, %arg3: memref<3x3x128xf32, #tpu.memory_space<vmem>>, %arg4: memref<1x128xf32, #tpu.memory_space<vmem>>, %arg5: memref<1x16x16x128xf32, #tpu.memory_space<vmem>>) attributes {dimension_semantics = [#tpu.dimension_semantics<parallel>, #tpu.dimension_semantics<parallel>], iteration_bounds = array<i64: 2, 1>, scalar_prefetch = 0 : i64, scratch_operands = 0 : i64, tpu.core_type = #tpu.core_type<tc>, window_params = [{transform_indices = @transform_0, window_bounds = array<i64: 1, 18, 18, 128>}, {transform_indices = @transform_1, window_bounds = array<i64: 3, 3, 128>}, {transform_indices = @transform_2, window_bounds = array<i64: 1, 128>}, {transform_indices = @transform_3, window_bounds = array<i64: 1, 16, 16, 128>}]} {
    %c0 = arith.constant 0 : index
    %c0_0 = arith.constant 0 : index
    %c0_1 = arith.constant 0 : index
    %c0_2 = arith.constant 0 : index
    %0 = vector.load %arg2[%c0, %c0_0, %c0_1, %c0_2] : memref<1x18x18x128xf32, #tpu.memory_space<vmem>>, vector<1x18x18x128xf32>
    %1 = vector.shape_cast %0 : vector<1x18x18x128xf32> to vector<18x18x128xf32>
    %c0_3 = arith.constant 0 : index
    %c0_4 = arith.constant 0 : index
    %c0_5 = arith.constant 0 : index
    %2 = vector.load %arg3[%c0_3, %c0_4, %c0_5] : memref<3x3x128xf32, #tpu.memory_space<vmem>>, vector<3x3x128xf32>
    %cst = arith.constant 0.000000e+00 : f32
    %3 = vector.broadcast %cst : f32 to vector<16x16x128xf32>
    %4 = vector.extract_strided_slice %1 {offsets = [0, 0, 0], sizes = [16, 16, 128], strides = [1, 1, 1]} : vector<18x18x128xf32> to vector<16x16x128xf32>
    %5 = vector.extract_strided_slice %2 {offsets = [0, 0, 0], sizes = [1, 1, 128], strides = [1, 1, 1]} : vector<3x3x128xf32> to vector<1x1x128xf32>
    %6 = vector.shape_cast %5 : vector<1x1x128xf32> to vector<128xf32>
    %7 = vector.shape_cast %6 : vector<128xf32> to vector<1x1x128xf32>
    %8 = vector.broadcast %7 : vector<1x1x128xf32> to vector<16x16x128xf32>
    %9 = arith.mulf %4, %8 : vector<16x16x128xf32>
    %10 = arith.addf %3, %9 : vector<16x16x128xf32>
    %11 = vector.extract_strided_slice %1 {offsets = [0, 1, 0], sizes = [16, 16, 128], strides = [1, 1, 1]} : vector<18x18x128xf32> to vector<16x16x128xf32>
    %12 = vector.extract_strided_slice %2 {offsets = [0, 1, 0], sizes = [1, 1, 128], strides = [1, 1, 1]} : vector<3x3x128xf32> to vector<1x1x128xf32>
    %13 = vector.shape_cast %12 : vector<1x1x128xf32> to vector<128xf32>
    %14 = vector.shape_cast %13 : vector<128xf32> to vector<1x1x128xf32>
    %15 = vector.broadcast %14 : vector<1x1x128xf32> to vector<16x16x128xf32>
    %16 = arith.mulf %11, %15 : vector<16x16x128xf32>
    %17 = arith.addf %10, %16 : vector<16x16x128xf32>
    %18 = vector.extract_strided_slice %1 {offsets = [0, 2, 0], sizes = [16, 16, 128], strides = [1, 1, 1]} : vector<18x18x128xf32> to vector<16x16x128xf32>
    %19 = vector.extract_strided_slice %2 {offsets = [0, 2, 0], sizes = [1, 1, 128], strides = [1, 1, 1]} : vector<3x3x128xf32> to vector<1x1x128xf32>
    %20 = vector.shape_cast %19 : vector<1x1x128xf32> to vector<128xf32>
    %21 = vector.shape_cast %20 : vector<128xf32> to vector<1x1x128xf32>
    %22 = vector.broadcast %21 : vector<1x1x128xf32> to vector<16x16x128xf32>
    %23 = arith.mulf %18, %22 : vector<16x16x128xf32>
    %24 = arith.addf %17, %23 : vector<16x16x128xf32>
    %25 = vector.extract_strided_slice %1 {offsets = [1, 0, 0], sizes = [16, 16, 128], strides = [1, 1, 1]} : vector<18x18x128xf32> to vector<16x16x128xf32>
    %26 = vector.extract_strided_slice %2 {offsets = [1, 0, 0], sizes = [1, 1, 128], strides = [1, 1, 1]} : vector<3x3x128xf32> to vector<1x1x128xf32>
    %27 = vector.shape_cast %26 : vector<1x1x128xf32> to vector<128xf32>
    %28 = vector.shape_cast %27 : vector<128xf32> to vector<1x1x128xf32>
    %29 = vector.broadcast %28 : vector<1x1x128xf32> to vector<16x16x128xf32>
    %30 = arith.mulf %25, %29 : vector<16x16x128xf32>
    %31 = arith.addf %24, %30 : vector<16x16x128xf32>
    %32 = vector.extract_strided_slice %1 {offsets = [1, 1, 0], sizes = [16, 16, 128], strides = [1, 1, 1]} : vector<18x18x128xf32> to vector<16x16x128xf32>
    %33 = vector.extract_strided_slice %2 {offsets = [1, 1, 0], sizes = [1, 1, 128], strides = [1, 1, 1]} : vector<3x3x128xf32> to vector<1x1x128xf32>
    %34 = vector.shape_cast %33 : vector<1x1x128xf32> to vector<128xf32>
    %35 = vector.shape_cast %34 : vector<128xf32> to vector<1x1x128xf32>
    %36 = vector.broadcast %35 : vector<1x1x128xf32> to vector<16x16x128xf32>
    %37 = arith.mulf %32, %36 : vector<16x16x128xf32>
    %38 = arith.addf %31, %37 : vector<16x16x128xf32>
    %39 = vector.extract_strided_slice %1 {offsets = [1, 2, 0], sizes = [16, 16, 128], strides = [1, 1, 1]} : vector<18x18x128xf32> to vector<16x16x128xf32>
    %40 = vector.extract_strided_slice %2 {offsets = [1, 2, 0], sizes = [1, 1, 128], strides = [1, 1, 1]} : vector<3x3x128xf32> to vector<1x1x128xf32>
    %41 = vector.shape_cast %40 : vector<1x1x128xf32> to vector<128xf32>
    %42 = vector.shape_cast %41 : vector<128xf32> to vector<1x1x128xf32>
    %43 = vector.broadcast %42 : vector<1x1x128xf32> to vector<16x16x128xf32>
    %44 = arith.mulf %39, %43 : vector<16x16x128xf32>
    %45 = arith.addf %38, %44 : vector<16x16x128xf32>
    %46 = vector.extract_strided_slice %1 {offsets = [2, 0, 0], sizes = [16, 16, 128], strides = [1, 1, 1]} : vector<18x18x128xf32> to vector<16x16x128xf32>
    %47 = vector.extract_strided_slice %2 {offsets = [2, 0, 0], sizes = [1, 1, 128], strides = [1, 1, 1]} : vector<3x3x128xf32> to vector<1x1x128xf32>
    %48 = vector.shape_cast %47 : vector<1x1x128xf32> to vector<128xf32>
    %49 = vector.shape_cast %48 : vector<128xf32> to vector<1x1x128xf32>
    %50 = vector.broadcast %49 : vector<1x1x128xf32> to vector<16x16x128xf32>
    %51 = arith.mulf %46, %50 : vector<16x16x128xf32>
    %52 = arith.addf %45, %51 : vector<16x16x128xf32>
    %53 = vector.extract_strided_slice %1 {offsets = [2, 1, 0], sizes = [16, 16, 128], strides = [1, 1, 1]} : vector<18x18x128xf32> to vector<16x16x128xf32>
    %54 = vector.extract_strided_slice %2 {offsets = [2, 1, 0], sizes = [1, 1, 128], strides = [1, 1, 1]} : vector<3x3x128xf32> to vector<1x1x128xf32>
    %55 = vector.shape_cast %54 : vector<1x1x128xf32> to vector<128xf32>
    %56 = vector.shape_cast %55 : vector<128xf32> to vector<1x1x128xf32>
    %57 = vector.broadcast %56 : vector<1x1x128xf32> to vector<16x16x128xf32>
    %58 = arith.mulf %53, %57 : vector<16x16x128xf32>
    %59 = arith.addf %52, %58 : vector<16x16x128xf32>
    %60 = vector.extract_strided_slice %1 {offsets = [2, 2, 0], sizes = [16, 16, 128], strides = [1, 1, 1]} : vector<18x18x128xf32> to vector<16x16x128xf32>
    %61 = vector.extract_strided_slice %2 {offsets = [2, 2, 0], sizes = [1, 1, 128], strides = [1, 1, 1]} : vector<3x3x128xf32> to vector<1x1x128xf32>
    %62 = vector.shape_cast %61 : vector<1x1x128xf32> to vector<128xf32>
    %63 = vector.shape_cast %62 : vector<128xf32> to vector<1x1x128xf32>
    %64 = vector.broadcast %63 : vector<1x1x128xf32> to vector<16x16x128xf32>
    %65 = arith.mulf %60, %64 : vector<16x16x128xf32>
    %66 = arith.addf %59, %65 : vector<16x16x128xf32>
    %c0_6 = arith.constant 0 : index
    %c0_7 = arith.constant 0 : index
    %67 = vector.load %arg4[%c0_6, %c0_7] : memref<1x128xf32, #tpu.memory_space<vmem>>, vector<1x128xf32>
    %68 = vector.shape_cast %67 : vector<1x128xf32> to vector<1x1x128xf32>
    %69 = vector.broadcast %68 : vector<1x1x128xf32> to vector<16x16x128xf32>
    %70 = arith.addf %66, %69 : vector<16x16x128xf32>
    %cst_8 = arith.constant 0.000000e+00 : f32
    %71 = vector.broadcast %cst_8 : f32 to vector<16x16x128xf32>
    %72 = arith.maximumf %70, %71 : vector<16x16x128xf32>
    %c0_9 = arith.constant 0 : index
    %c0_10 = arith.constant 0 : index
    %c0_11 = arith.constant 0 : index
    %c0_12 = arith.constant 0 : index
    %73 = vector.load %arg5[%c0_9, %c0_10, %c0_11, %c0_12] : memref<1x16x16x128xf32, #tpu.memory_space<vmem>>, vector<1x16x16x128xf32>
    %74 = vector.shape_cast %73 : vector<1x16x16x128xf32> to vector<16x16x128xf32>
    %75 = vector.shape_cast %72 : vector<16x16x128xf32> to vector<1x16x16x128xf32>
    tpu.vector_store %arg5[%c0_9, %c0_10, %c0_11, %c0_12], %75 {strides = array<i32>} : memref<1x16x16x128xf32, #tpu.memory_space<vmem>>, vector<1x16x16x128xf32>,
    return
  }
  func.func @transform_0(%arg0: i32, %arg1: i32) -> (i32, i32, i32, i32) {
    %c0_i32 = arith.constant 0 : i32
    %c0_i32_0 = arith.constant 0 : i32
    %c0_i32_1 = arith.constant 0 : i32
    return %arg0, %c0_i32, %c0_i32_0, %arg1 : i32, i32, i32, i32
  }
  func.func @transform_1(%arg0: i32, %arg1: i32) -> (i32, i32, i32) {
    %c0_i32 = arith.constant 0 : i32
    %c0_i32_0 = arith.constant 0 : i32
    %c0_i32_1 = arith.constant 0 : i32
    return %c0_i32, %c0_i32_0, %arg1 : i32, i32, i32
  }
  func.func @transform_2(%arg0: i32, %arg1: i32) -> (i32, i32) {
    %c0_i32 = arith.constant 0 : i32
    %c0_i32_0 = arith.constant 0 : i32
    return %c0_i32, %arg1 : i32, i32
  }
  func.func @transform_3(%arg0: i32, %arg1: i32) -> (i32, i32, i32, i32) {
    %c0_i32 = arith.constant 0 : i32
    %c0_i32_0 = arith.constant 0 : i32
    %c0_i32_1 = arith.constant 0 : i32
    return %arg0, %c0_i32, %c0_i32_0, %arg1 : i32, i32, i32, i32
  }
}

module attributes {stable_mosaic.version = 11 : i64} {
  func.func @_mm_bias_act_kernel(%arg0: i32, %arg1: memref<128x128xf32, #tpu.memory_space<vmem>>, %arg2: memref<128x128xbf16, #tpu.memory_space<vmem>>, %arg3: memref<1x128xf32, #tpu.memory_space<vmem>>, %arg4: memref<128x128xf32, #tpu.memory_space<vmem>>) attributes {dimension_semantics = [#tpu.dimension_semantics<parallel>], iteration_bounds = array<i64: 1>, scalar_prefetch = 0 : i64, scratch_operands = 0 : i64, tpu.core_type = #tpu.core_type<tc>, window_params = [{transform_indices = @transform_0, window_bounds = array<i64: 128, 128>}, {pipeline_mode = #tpu.pipeline_mode<synchronous>, transform_indices = @transform_1, window_bounds = array<i64: 128, 128>}, {pipeline_mode = #tpu.pipeline_mode<synchronous>, transform_indices = @transform_2, window_bounds = array<i64: 1, 128>}, {transform_indices = @transform_3, window_bounds = array<i64: 128, 128>}]} {
    %c0 = arith.constant 0 : index
    %c0_0 = arith.constant 0 : index
    %0 = vector.load %arg1[%c0, %c0_0] : memref<128x128xf32, #tpu.memory_space<vmem>>, vector<128x128xf32>
    %1 = arith.truncf %0 : vector<128x128xf32> to vector<128x128xbf16>
    %c0_1 = arith.constant 0 : index
    %c0_2 = arith.constant 0 : index
    %2 = vector.load %arg2[%c0_1, %c0_2] : memref<128x128xbf16, #tpu.memory_space<vmem>>, vector<128x128xbf16>
    %cst = arith.constant dense<0.000000e+00> : vector<128x128xf32>
    %3 = tpu.matmul %1, %2, %cst {dimension_numbers = #tpu.dot_dimension_numbers<[1], [0], [0], [1], [0, 0, 1, 1], [], []>} : vector<128x128xbf16>, vector<128x128xbf16>, vector<128x128xf32> -> vector<128x128xf32>
    %c0_3 = arith.constant 0 : index
    %c0_4 = arith.constant 0 : index
    %4 = vector.load %arg3[%c0_3, %c0_4] : memref<1x128xf32, #tpu.memory_space<vmem>>, vector<1x128xf32>
    %5 = vector.broadcast %4 : vector<1x128xf32> to vector<128x128xf32>
    %6 = arith.addf %3, %5 : vector<128x128xf32>
    %cst_5 = arith.constant 0.000000e+00 : f32
    %7 = vector.broadcast %cst_5 : f32 to vector<128x128xf32>
    %8 = arith.maximumf %6, %7 : vector<128x128xf32>
    %c0_6 = arith.constant 0 : index
    %c0_7 = arith.constant 0 : index
    %9 = vector.load %arg4[%c0_6, %c0_7] : memref<128x128xf32, #tpu.memory_space<vmem>>, vector<128x128xf32>
    tpu.vector_store %arg4[%c0_6, %c0_7], %8 {strides = array<i32>} : memref<128x128xf32, #tpu.memory_space<vmem>>, vector<128x128xf32>,
    return
  }
  func.func @transform_0(%arg0: i32) -> (i32, i32) {
    %c0_i32 = arith.constant 0 : i32
    %c0_i32_0 = arith.constant 0 : i32
    return %arg0, %c0_i32 : i32, i32
  }
  func.func @transform_1(%arg0: i32) -> (i32, i32) {
    %c0_i32 = arith.constant 0 : i32
    %c0_i32_0 = arith.constant 0 : i32
    %c0_i32_1 = arith.constant 0 : i32
    return %c0_i32, %c0_i32_0 : i32, i32
  }
  func.func @transform_2(%arg0: i32) -> (i32, i32) {
    %c0_i32 = arith.constant 0 : i32
    %c0_i32_0 = arith.constant 0 : i32
    %c0_i32_1 = arith.constant 0 : i32
    return %c0_i32, %c0_i32_0 : i32, i32
  }
  func.func @transform_3(%arg0: i32) -> (i32, i32) {
    %c0_i32 = arith.constant 0 : i32
    %c0_i32_0 = arith.constant 0 : i32
    return %arg0, %c0_i32 : i32, i32
  }
}

module attributes {stable_mosaic.version = 11 : i64} {
  func.func @_dw3x3_relu_kernel(%arg0: i32, %arg1: i32, %arg2: memref<1x10x10x128xf32, #tpu.memory_space<vmem>>, %arg3: memref<3x3x128xf32, #tpu.memory_space<vmem>>, %arg4: memref<1x128xf32, #tpu.memory_space<vmem>>, %arg5: memref<1x8x8x128xf32, #tpu.memory_space<vmem>>) attributes {dimension_semantics = [#tpu.dimension_semantics<parallel>, #tpu.dimension_semantics<parallel>], iteration_bounds = array<i64: 2, 1>, scalar_prefetch = 0 : i64, scratch_operands = 0 : i64, tpu.core_type = #tpu.core_type<tc>, window_params = [{transform_indices = @transform_0, window_bounds = array<i64: 1, 10, 10, 128>}, {transform_indices = @transform_1, window_bounds = array<i64: 3, 3, 128>}, {transform_indices = @transform_2, window_bounds = array<i64: 1, 128>}, {transform_indices = @transform_3, window_bounds = array<i64: 1, 8, 8, 128>}]} {
    %c0 = arith.constant 0 : index
    %c0_0 = arith.constant 0 : index
    %c0_1 = arith.constant 0 : index
    %c0_2 = arith.constant 0 : index
    %0 = vector.load %arg2[%c0, %c0_0, %c0_1, %c0_2] : memref<1x10x10x128xf32, #tpu.memory_space<vmem>>, vector<1x10x10x128xf32>
    %1 = vector.shape_cast %0 : vector<1x10x10x128xf32> to vector<10x10x128xf32>
    %c0_3 = arith.constant 0 : index
    %c0_4 = arith.constant 0 : index
    %c0_5 = arith.constant 0 : index
    %2 = vector.load %arg3[%c0_3, %c0_4, %c0_5] : memref<3x3x128xf32, #tpu.memory_space<vmem>>, vector<3x3x128xf32>
    %cst = arith.constant 0.000000e+00 : f32
    %3 = vector.broadcast %cst : f32 to vector<8x8x128xf32>
    %4 = vector.extract_strided_slice %1 {offsets = [0, 0, 0], sizes = [8, 8, 128], strides = [1, 1, 1]} : vector<10x10x128xf32> to vector<8x8x128xf32>
    %5 = vector.extract_strided_slice %2 {offsets = [0, 0, 0], sizes = [1, 1, 128], strides = [1, 1, 1]} : vector<3x3x128xf32> to vector<1x1x128xf32>
    %6 = vector.shape_cast %5 : vector<1x1x128xf32> to vector<128xf32>
    %7 = vector.shape_cast %6 : vector<128xf32> to vector<1x1x128xf32>
    %8 = vector.broadcast %7 : vector<1x1x128xf32> to vector<8x8x128xf32>
    %9 = arith.mulf %4, %8 : vector<8x8x128xf32>
    %10 = arith.addf %3, %9 : vector<8x8x128xf32>
    %11 = vector.extract_strided_slice %1 {offsets = [0, 1, 0], sizes = [8, 8, 128], strides = [1, 1, 1]} : vector<10x10x128xf32> to vector<8x8x128xf32>
    %12 = vector.extract_strided_slice %2 {offsets = [0, 1, 0], sizes = [1, 1, 128], strides = [1, 1, 1]} : vector<3x3x128xf32> to vector<1x1x128xf32>
    %13 = vector.shape_cast %12 : vector<1x1x128xf32> to vector<128xf32>
    %14 = vector.shape_cast %13 : vector<128xf32> to vector<1x1x128xf32>
    %15 = vector.broadcast %14 : vector<1x1x128xf32> to vector<8x8x128xf32>
    %16 = arith.mulf %11, %15 : vector<8x8x128xf32>
    %17 = arith.addf %10, %16 : vector<8x8x128xf32>
    %18 = vector.extract_strided_slice %1 {offsets = [0, 2, 0], sizes = [8, 8, 128], strides = [1, 1, 1]} : vector<10x10x128xf32> to vector<8x8x128xf32>
    %19 = vector.extract_strided_slice %2 {offsets = [0, 2, 0], sizes = [1, 1, 128], strides = [1, 1, 1]} : vector<3x3x128xf32> to vector<1x1x128xf32>
    %20 = vector.shape_cast %19 : vector<1x1x128xf32> to vector<128xf32>
    %21 = vector.shape_cast %20 : vector<128xf32> to vector<1x1x128xf32>
    %22 = vector.broadcast %21 : vector<1x1x128xf32> to vector<8x8x128xf32>
    %23 = arith.mulf %18, %22 : vector<8x8x128xf32>
    %24 = arith.addf %17, %23 : vector<8x8x128xf32>
    %25 = vector.extract_strided_slice %1 {offsets = [1, 0, 0], sizes = [8, 8, 128], strides = [1, 1, 1]} : vector<10x10x128xf32> to vector<8x8x128xf32>
    %26 = vector.extract_strided_slice %2 {offsets = [1, 0, 0], sizes = [1, 1, 128], strides = [1, 1, 1]} : vector<3x3x128xf32> to vector<1x1x128xf32>
    %27 = vector.shape_cast %26 : vector<1x1x128xf32> to vector<128xf32>
    %28 = vector.shape_cast %27 : vector<128xf32> to vector<1x1x128xf32>
    %29 = vector.broadcast %28 : vector<1x1x128xf32> to vector<8x8x128xf32>
    %30 = arith.mulf %25, %29 : vector<8x8x128xf32>
    %31 = arith.addf %24, %30 : vector<8x8x128xf32>
    %32 = vector.extract_strided_slice %1 {offsets = [1, 1, 0], sizes = [8, 8, 128], strides = [1, 1, 1]} : vector<10x10x128xf32> to vector<8x8x128xf32>
    %33 = vector.extract_strided_slice %2 {offsets = [1, 1, 0], sizes = [1, 1, 128], strides = [1, 1, 1]} : vector<3x3x128xf32> to vector<1x1x128xf32>
    %34 = vector.shape_cast %33 : vector<1x1x128xf32> to vector<128xf32>
    %35 = vector.shape_cast %34 : vector<128xf32> to vector<1x1x128xf32>
    %36 = vector.broadcast %35 : vector<1x1x128xf32> to vector<8x8x128xf32>
    %37 = arith.mulf %32, %36 : vector<8x8x128xf32>
    %38 = arith.addf %31, %37 : vector<8x8x128xf32>
    %39 = vector.extract_strided_slice %1 {offsets = [1, 2, 0], sizes = [8, 8, 128], strides = [1, 1, 1]} : vector<10x10x128xf32> to vector<8x8x128xf32>
    %40 = vector.extract_strided_slice %2 {offsets = [1, 2, 0], sizes = [1, 1, 128], strides = [1, 1, 1]} : vector<3x3x128xf32> to vector<1x1x128xf32>
    %41 = vector.shape_cast %40 : vector<1x1x128xf32> to vector<128xf32>
    %42 = vector.shape_cast %41 : vector<128xf32> to vector<1x1x128xf32>
    %43 = vector.broadcast %42 : vector<1x1x128xf32> to vector<8x8x128xf32>
    %44 = arith.mulf %39, %43 : vector<8x8x128xf32>
    %45 = arith.addf %38, %44 : vector<8x8x128xf32>
    %46 = vector.extract_strided_slice %1 {offsets = [2, 0, 0], sizes = [8, 8, 128], strides = [1, 1, 1]} : vector<10x10x128xf32> to vector<8x8x128xf32>
    %47 = vector.extract_strided_slice %2 {offsets = [2, 0, 0], sizes = [1, 1, 128], strides = [1, 1, 1]} : vector<3x3x128xf32> to vector<1x1x128xf32>
    %48 = vector.shape_cast %47 : vector<1x1x128xf32> to vector<128xf32>
    %49 = vector.shape_cast %48 : vector<128xf32> to vector<1x1x128xf32>
    %50 = vector.broadcast %49 : vector<1x1x128xf32> to vector<8x8x128xf32>
    %51 = arith.mulf %46, %50 : vector<8x8x128xf32>
    %52 = arith.addf %45, %51 : vector<8x8x128xf32>
    %53 = vector.extract_strided_slice %1 {offsets = [2, 1, 0], sizes = [8, 8, 128], strides = [1, 1, 1]} : vector<10x10x128xf32> to vector<8x8x128xf32>
    %54 = vector.extract_strided_slice %2 {offsets = [2, 1, 0], sizes = [1, 1, 128], strides = [1, 1, 1]} : vector<3x3x128xf32> to vector<1x1x128xf32>
    %55 = vector.shape_cast %54 : vector<1x1x128xf32> to vector<128xf32>
    %56 = vector.shape_cast %55 : vector<128xf32> to vector<1x1x128xf32>
    %57 = vector.broadcast %56 : vector<1x1x128xf32> to vector<8x8x128xf32>
    %58 = arith.mulf %53, %57 : vector<8x8x128xf32>
    %59 = arith.addf %52, %58 : vector<8x8x128xf32>
    %60 = vector.extract_strided_slice %1 {offsets = [2, 2, 0], sizes = [8, 8, 128], strides = [1, 1, 1]} : vector<10x10x128xf32> to vector<8x8x128xf32>
    %61 = vector.extract_strided_slice %2 {offsets = [2, 2, 0], sizes = [1, 1, 128], strides = [1, 1, 1]} : vector<3x3x128xf32> to vector<1x1x128xf32>
    %62 = vector.shape_cast %61 : vector<1x1x128xf32> to vector<128xf32>
    %63 = vector.shape_cast %62 : vector<128xf32> to vector<1x1x128xf32>
    %64 = vector.broadcast %63 : vector<1x1x128xf32> to vector<8x8x128xf32>
    %65 = arith.mulf %60, %64 : vector<8x8x128xf32>
    %66 = arith.addf %59, %65 : vector<8x8x128xf32>
    %c0_6 = arith.constant 0 : index
    %c0_7 = arith.constant 0 : index
    %67 = vector.load %arg4[%c0_6, %c0_7] : memref<1x128xf32, #tpu.memory_space<vmem>>, vector<1x128xf32>
    %68 = vector.shape_cast %67 : vector<1x128xf32> to vector<1x1x128xf32>
    %69 = vector.broadcast %68 : vector<1x1x128xf32> to vector<8x8x128xf32>
    %70 = arith.addf %66, %69 : vector<8x8x128xf32>
    %cst_8 = arith.constant 0.000000e+00 : f32
    %71 = vector.broadcast %cst_8 : f32 to vector<8x8x128xf32>
    %72 = arith.maximumf %70, %71 : vector<8x8x128xf32>
    %c0_9 = arith.constant 0 : index
    %c0_10 = arith.constant 0 : index
    %c0_11 = arith.constant 0 : index
    %c0_12 = arith.constant 0 : index
    %73 = vector.load %arg5[%c0_9, %c0_10, %c0_11, %c0_12] : memref<1x8x8x128xf32, #tpu.memory_space<vmem>>, vector<1x8x8x128xf32>
    %74 = vector.shape_cast %73 : vector<1x8x8x128xf32> to vector<8x8x128xf32>
    %75 = vector.shape_cast %72 : vector<8x8x128xf32> to vector<1x8x8x128xf32>
    tpu.vector_store %arg5[%c0_9, %c0_10, %c0_11, %c0_12], %75 {strides = array<i32>} : memref<1x8x8x128xf32, #tpu.memory_space<vmem>>, vector<1x8x8x128xf32>,
    return
  }
  func.func @transform_0(%arg0: i32, %arg1: i32) -> (i32, i32, i32, i32) {
    %c0_i32 = arith.constant 0 : i32
    %c0_i32_0 = arith.constant 0 : i32
    %c0_i32_1 = arith.constant 0 : i32
    return %arg0, %c0_i32, %c0_i32_0, %arg1 : i32, i32, i32, i32
  }
  func.func @transform_1(%arg0: i32, %arg1: i32) -> (i32, i32, i32) {
    %c0_i32 = arith.constant 0 : i32
    %c0_i32_0 = arith.constant 0 : i32
    %c0_i32_1 = arith.constant 0 : i32
    return %c0_i32, %c0_i32_0, %arg1 : i32, i32, i32
  }
  func.func @transform_2(%arg0: i32, %arg1: i32) -> (i32, i32) {
    %c0_i32 = arith.constant 0 : i32
    %c0_i32_0 = arith.constant 0 : i32
    return %c0_i32, %arg1 : i32, i32
  }
  func.func @transform_3(%arg0: i32, %arg1: i32) -> (i32, i32, i32, i32) {
    %c0_i32 = arith.constant 0 : i32
    %c0_i32_0 = arith.constant 0 : i32
    %c0_i32_1 = arith.constant 0 : i32
    return %arg0, %c0_i32, %c0_i32_0, %arg1 : i32, i32, i32, i32
  }
}

module attributes {stable_mosaic.version = 11 : i64} {
  func.func @_mm_bias_act_kernel(%arg0: i32, %arg1: memref<32x128xf32, #tpu.memory_space<vmem>>, %arg2: memref<128x128xbf16, #tpu.memory_space<vmem>>, %arg3: memref<1x128xf32, #tpu.memory_space<vmem>>, %arg4: memref<32x128xf32, #tpu.memory_space<vmem>>) attributes {dimension_semantics = [#tpu.dimension_semantics<parallel>], iteration_bounds = array<i64: 1>, scalar_prefetch = 0 : i64, scratch_operands = 0 : i64, tpu.core_type = #tpu.core_type<tc>, window_params = [{transform_indices = @transform_0, window_bounds = array<i64: 32, 128>}, {pipeline_mode = #tpu.pipeline_mode<synchronous>, transform_indices = @transform_1, window_bounds = array<i64: 128, 128>}, {pipeline_mode = #tpu.pipeline_mode<synchronous>, transform_indices = @transform_2, window_bounds = array<i64: 1, 128>}, {transform_indices = @transform_3, window_bounds = array<i64: 32, 128>}]} {
    %c0 = arith.constant 0 : index
    %c0_0 = arith.constant 0 : index
    %0 = vector.load %arg1[%c0, %c0_0] : memref<32x128xf32, #tpu.memory_space<vmem>>, vector<32x128xf32>
    %1 = arith.truncf %0 : vector<32x128xf32> to vector<32x128xbf16>
    %c0_1 = arith.constant 0 : index
    %c0_2 = arith.constant 0 : index
    %2 = vector.load %arg2[%c0_1, %c0_2] : memref<128x128xbf16, #tpu.memory_space<vmem>>, vector<128x128xbf16>
    %cst = arith.constant dense<0.000000e+00> : vector<32x128xf32>
    %3 = tpu.matmul %1, %2, %cst {dimension_numbers = #tpu.dot_dimension_numbers<[1], [0], [0], [1], [0, 0, 1, 1], [], []>} : vector<32x128xbf16>, vector<128x128xbf16>, vector<32x128xf32> -> vector<32x128xf32>
    %c0_3 = arith.constant 0 : index
    %c0_4 = arith.constant 0 : index
    %4 = vector.load %arg3[%c0_3, %c0_4] : memref<1x128xf32, #tpu.memory_space<vmem>>, vector<1x128xf32>
    %5 = vector.broadcast %4 : vector<1x128xf32> to vector<32x128xf32>
    %6 = arith.addf %3, %5 : vector<32x128xf32>
    %cst_5 = arith.constant 0.000000e+00 : f32
    %7 = vector.broadcast %cst_5 : f32 to vector<32x128xf32>
    %8 = arith.maximumf %6, %7 : vector<32x128xf32>
    %c0_6 = arith.constant 0 : index
    %c0_7 = arith.constant 0 : index
    %9 = vector.load %arg4[%c0_6, %c0_7] : memref<32x128xf32, #tpu.memory_space<vmem>>, vector<32x128xf32>
    tpu.vector_store %arg4[%c0_6, %c0_7], %8 {strides = array<i32>} : memref<32x128xf32, #tpu.memory_space<vmem>>, vector<32x128xf32>,
    return
  }
  func.func @transform_0(%arg0: i32) -> (i32, i32) {
    %c0_i32 = arith.constant 0 : i32
    %c0_i32_0 = arith.constant 0 : i32
    return %arg0, %c0_i32 : i32, i32
  }
  func.func @transform_1(%arg0: i32) -> (i32, i32) {
    %c0_i32 = arith.constant 0 : i32
    %c0_i32_0 = arith.constant 0 : i32
    %c0_i32_1 = arith.constant 0 : i32
    return %c0_i32, %c0_i32_0 : i32, i32
  }
  func.func @transform_2(%arg0: i32) -> (i32, i32) {
    %c0_i32 = arith.constant 0 : i32
    %c0_i32_0 = arith.constant 0 : i32
    %c0_i32_1 = arith.constant 0 : i32
    return %c0_i32, %c0_i32_0 : i32, i32
  }
  func.func @transform_3(%arg0: i32) -> (i32, i32) {
    %c0_i32 = arith.constant 0 : i32
    %c0_i32_0 = arith.constant 0 : i32
    return %arg0, %c0_i32 : i32, i32
  }
}

module attributes {stable_mosaic.version = 11 : i64} {
  func.func @_dw3x3_relu_kernel(%arg0: i32, %arg1: i32, %arg2: memref<1x6x6x128xf32, #tpu.memory_space<vmem>>, %arg3: memref<3x3x128xf32, #tpu.memory_space<vmem>>, %arg4: memref<1x128xf32, #tpu.memory_space<vmem>>, %arg5: memref<1x4x4x128xf32, #tpu.memory_space<vmem>>) attributes {dimension_semantics = [#tpu.dimension_semantics<parallel>, #tpu.dimension_semantics<parallel>], iteration_bounds = array<i64: 2, 1>, scalar_prefetch = 0 : i64, scratch_operands = 0 : i64, tpu.core_type = #tpu.core_type<tc>, window_params = [{transform_indices = @transform_0, window_bounds = array<i64: 1, 6, 6, 128>}, {transform_indices = @transform_1, window_bounds = array<i64: 3, 3, 128>}, {transform_indices = @transform_2, window_bounds = array<i64: 1, 128>}, {transform_indices = @transform_3, window_bounds = array<i64: 1, 4, 4, 128>}]} {
    %c0 = arith.constant 0 : index
    %c0_0 = arith.constant 0 : index
    %c0_1 = arith.constant 0 : index
    %c0_2 = arith.constant 0 : index
    %0 = vector.load %arg2[%c0, %c0_0, %c0_1, %c0_2] : memref<1x6x6x128xf32, #tpu.memory_space<vmem>>, vector<1x6x6x128xf32>
    %1 = vector.shape_cast %0 : vector<1x6x6x128xf32> to vector<6x6x128xf32>
    %c0_3 = arith.constant 0 : index
    %c0_4 = arith.constant 0 : index
    %c0_5 = arith.constant 0 : index
    %2 = vector.load %arg3[%c0_3, %c0_4, %c0_5] : memref<3x3x128xf32, #tpu.memory_space<vmem>>, vector<3x3x128xf32>
    %cst = arith.constant 0.000000e+00 : f32
    %3 = vector.broadcast %cst : f32 to vector<4x4x128xf32>
    %4 = vector.extract_strided_slice %1 {offsets = [0, 0, 0], sizes = [4, 4, 128], strides = [1, 1, 1]} : vector<6x6x128xf32> to vector<4x4x128xf32>
    %5 = vector.extract_strided_slice %2 {offsets = [0, 0, 0], sizes = [1, 1, 128], strides = [1, 1, 1]} : vector<3x3x128xf32> to vector<1x1x128xf32>
    %6 = vector.shape_cast %5 : vector<1x1x128xf32> to vector<128xf32>
    %7 = vector.shape_cast %6 : vector<128xf32> to vector<1x1x128xf32>
    %8 = vector.broadcast %7 : vector<1x1x128xf32> to vector<4x4x128xf32>
    %9 = arith.mulf %4, %8 : vector<4x4x128xf32>
    %10 = arith.addf %3, %9 : vector<4x4x128xf32>
    %11 = vector.extract_strided_slice %1 {offsets = [0, 1, 0], sizes = [4, 4, 128], strides = [1, 1, 1]} : vector<6x6x128xf32> to vector<4x4x128xf32>
    %12 = vector.extract_strided_slice %2 {offsets = [0, 1, 0], sizes = [1, 1, 128], strides = [1, 1, 1]} : vector<3x3x128xf32> to vector<1x1x128xf32>
    %13 = vector.shape_cast %12 : vector<1x1x128xf32> to vector<128xf32>
    %14 = vector.shape_cast %13 : vector<128xf32> to vector<1x1x128xf32>
    %15 = vector.broadcast %14 : vector<1x1x128xf32> to vector<4x4x128xf32>
    %16 = arith.mulf %11, %15 : vector<4x4x128xf32>
    %17 = arith.addf %10, %16 : vector<4x4x128xf32>
    %18 = vector.extract_strided_slice %1 {offsets = [0, 2, 0], sizes = [4, 4, 128], strides = [1, 1, 1]} : vector<6x6x128xf32> to vector<4x4x128xf32>
    %19 = vector.extract_strided_slice %2 {offsets = [0, 2, 0], sizes = [1, 1, 128], strides = [1, 1, 1]} : vector<3x3x128xf32> to vector<1x1x128xf32>
    %20 = vector.shape_cast %19 : vector<1x1x128xf32> to vector<128xf32>
    %21 = vector.shape_cast %20 : vector<128xf32> to vector<1x1x128xf32>
    %22 = vector.broadcast %21 : vector<1x1x128xf32> to vector<4x4x128xf32>
    %23 = arith.mulf %18, %22 : vector<4x4x128xf32>
    %24 = arith.addf %17, %23 : vector<4x4x128xf32>
    %25 = vector.extract_strided_slice %1 {offsets = [1, 0, 0], sizes = [4, 4, 128], strides = [1, 1, 1]} : vector<6x6x128xf32> to vector<4x4x128xf32>
    %26 = vector.extract_strided_slice %2 {offsets = [1, 0, 0], sizes = [1, 1, 128], strides = [1, 1, 1]} : vector<3x3x128xf32> to vector<1x1x128xf32>
    %27 = vector.shape_cast %26 : vector<1x1x128xf32> to vector<128xf32>
    %28 = vector.shape_cast %27 : vector<128xf32> to vector<1x1x128xf32>
    %29 = vector.broadcast %28 : vector<1x1x128xf32> to vector<4x4x128xf32>
    %30 = arith.mulf %25, %29 : vector<4x4x128xf32>
    %31 = arith.addf %24, %30 : vector<4x4x128xf32>
    %32 = vector.extract_strided_slice %1 {offsets = [1, 1, 0], sizes = [4, 4, 128], strides = [1, 1, 1]} : vector<6x6x128xf32> to vector<4x4x128xf32>
    %33 = vector.extract_strided_slice %2 {offsets = [1, 1, 0], sizes = [1, 1, 128], strides = [1, 1, 1]} : vector<3x3x128xf32> to vector<1x1x128xf32>
    %34 = vector.shape_cast %33 : vector<1x1x128xf32> to vector<128xf32>
    %35 = vector.shape_cast %34 : vector<128xf32> to vector<1x1x128xf32>
    %36 = vector.broadcast %35 : vector<1x1x128xf32> to vector<4x4x128xf32>
    %37 = arith.mulf %32, %36 : vector<4x4x128xf32>
    %38 = arith.addf %31, %37 : vector<4x4x128xf32>
    %39 = vector.extract_strided_slice %1 {offsets = [1, 2, 0], sizes = [4, 4, 128], strides = [1, 1, 1]} : vector<6x6x128xf32> to vector<4x4x128xf32>
    %40 = vector.extract_strided_slice %2 {offsets = [1, 2, 0], sizes = [1, 1, 128], strides = [1, 1, 1]} : vector<3x3x128xf32> to vector<1x1x128xf32>
    %41 = vector.shape_cast %40 : vector<1x1x128xf32> to vector<128xf32>
    %42 = vector.shape_cast %41 : vector<128xf32> to vector<1x1x128xf32>
    %43 = vector.broadcast %42 : vector<1x1x128xf32> to vector<4x4x128xf32>
    %44 = arith.mulf %39, %43 : vector<4x4x128xf32>
    %45 = arith.addf %38, %44 : vector<4x4x128xf32>
    %46 = vector.extract_strided_slice %1 {offsets = [2, 0, 0], sizes = [4, 4, 128], strides = [1, 1, 1]} : vector<6x6x128xf32> to vector<4x4x128xf32>
    %47 = vector.extract_strided_slice %2 {offsets = [2, 0, 0], sizes = [1, 1, 128], strides = [1, 1, 1]} : vector<3x3x128xf32> to vector<1x1x128xf32>
    %48 = vector.shape_cast %47 : vector<1x1x128xf32> to vector<128xf32>
    %49 = vector.shape_cast %48 : vector<128xf32> to vector<1x1x128xf32>
    %50 = vector.broadcast %49 : vector<1x1x128xf32> to vector<4x4x128xf32>
    %51 = arith.mulf %46, %50 : vector<4x4x128xf32>
    %52 = arith.addf %45, %51 : vector<4x4x128xf32>
    %53 = vector.extract_strided_slice %1 {offsets = [2, 1, 0], sizes = [4, 4, 128], strides = [1, 1, 1]} : vector<6x6x128xf32> to vector<4x4x128xf32>
    %54 = vector.extract_strided_slice %2 {offsets = [2, 1, 0], sizes = [1, 1, 128], strides = [1, 1, 1]} : vector<3x3x128xf32> to vector<1x1x128xf32>
    %55 = vector.shape_cast %54 : vector<1x1x128xf32> to vector<128xf32>
    %56 = vector.shape_cast %55 : vector<128xf32> to vector<1x1x128xf32>
    %57 = vector.broadcast %56 : vector<1x1x128xf32> to vector<4x4x128xf32>
    %58 = arith.mulf %53, %57 : vector<4x4x128xf32>
    %59 = arith.addf %52, %58 : vector<4x4x128xf32>
    %60 = vector.extract_strided_slice %1 {offsets = [2, 2, 0], sizes = [4, 4, 128], strides = [1, 1, 1]} : vector<6x6x128xf32> to vector<4x4x128xf32>
    %61 = vector.extract_strided_slice %2 {offsets = [2, 2, 0], sizes = [1, 1, 128], strides = [1, 1, 1]} : vector<3x3x128xf32> to vector<1x1x128xf32>
    %62 = vector.shape_cast %61 : vector<1x1x128xf32> to vector<128xf32>
    %63 = vector.shape_cast %62 : vector<128xf32> to vector<1x1x128xf32>
    %64 = vector.broadcast %63 : vector<1x1x128xf32> to vector<4x4x128xf32>
    %65 = arith.mulf %60, %64 : vector<4x4x128xf32>
    %66 = arith.addf %59, %65 : vector<4x4x128xf32>
    %c0_6 = arith.constant 0 : index
    %c0_7 = arith.constant 0 : index
    %67 = vector.load %arg4[%c0_6, %c0_7] : memref<1x128xf32, #tpu.memory_space<vmem>>, vector<1x128xf32>
    %68 = vector.shape_cast %67 : vector<1x128xf32> to vector<1x1x128xf32>
    %69 = vector.broadcast %68 : vector<1x1x128xf32> to vector<4x4x128xf32>
    %70 = arith.addf %66, %69 : vector<4x4x128xf32>
    %cst_8 = arith.constant 0.000000e+00 : f32
    %71 = vector.broadcast %cst_8 : f32 to vector<4x4x128xf32>
    %72 = arith.maximumf %70, %71 : vector<4x4x128xf32>
    %c0_9 = arith.constant 0 : index
    %c0_10 = arith.constant 0 : index
    %c0_11 = arith.constant 0 : index
    %c0_12 = arith.constant 0 : index
    %73 = vector.load %arg5[%c0_9, %c0_10, %c0_11, %c0_12] : memref<1x4x4x128xf32, #tpu.memory_space<vmem>>, vector<1x4x4x128xf32>
    %74 = vector.shape_cast %73 : vector<1x4x4x128xf32> to vector<4x4x128xf32>
    %75 = vector.shape_cast %72 : vector<4x4x128xf32> to vector<1x4x4x128xf32>
    tpu.vector_store %arg5[%c0_9, %c0_10, %c0_11, %c0_12], %75 {strides = array<i32>} : memref<1x4x4x128xf32, #tpu.memory_space<vmem>>, vector<1x4x4x128xf32>,
    return
  }
  func.func @transform_0(%arg0: i32, %arg1: i32) -> (i32, i32, i32, i32) {
    %c0_i32 = arith.constant 0 : i32
    %c0_i32_0 = arith.constant 0 : i32
    %c0_i32_1 = arith.constant 0 : i32
    return %arg0, %c0_i32, %c0_i32_0, %arg1 : i32, i32, i32, i32
  }
  func.func @transform_1(%arg0: i32, %arg1: i32) -> (i32, i32, i32) {
    %c0_i32 = arith.constant 0 : i32
    %c0_i32_0 = arith.constant 0 : i32
    %c0_i32_1 = arith.constant 0 : i32
    return %c0_i32, %c0_i32_0, %arg1 : i32, i32, i32
  }
  func.func @transform_2(%arg0: i32, %arg1: i32) -> (i32, i32) {
    %c0_i32 = arith.constant 0 : i32
    %c0_i32_0 = arith.constant 0 : i32
    return %c0_i32, %arg1 : i32, i32
  }
  func.func @transform_3(%arg0: i32, %arg1: i32) -> (i32, i32, i32, i32) {
    %c0_i32 = arith.constant 0 : i32
    %c0_i32_0 = arith.constant 0 : i32
    %c0_i32_1 = arith.constant 0 : i32
    return %arg0, %c0_i32, %c0_i32_0, %arg1 : i32, i32, i32, i32
  }
}

module attributes {stable_mosaic.version = 11 : i64} {
  func.func @_mm_bias_act_kernel(%arg0: i32, %arg1: memref<8x128xf32, #tpu.memory_space<vmem>>, %arg2: memref<128x128xbf16, #tpu.memory_space<vmem>>, %arg3: memref<1x128xf32, #tpu.memory_space<vmem>>, %arg4: memref<8x128xf32, #tpu.memory_space<vmem>>) attributes {dimension_semantics = [#tpu.dimension_semantics<parallel>], iteration_bounds = array<i64: 1>, scalar_prefetch = 0 : i64, scratch_operands = 0 : i64, tpu.core_type = #tpu.core_type<tc>, window_params = [{transform_indices = @transform_0, window_bounds = array<i64: 8, 128>}, {pipeline_mode = #tpu.pipeline_mode<synchronous>, transform_indices = @transform_1, window_bounds = array<i64: 128, 128>}, {pipeline_mode = #tpu.pipeline_mode<synchronous>, transform_indices = @transform_2, window_bounds = array<i64: 1, 128>}, {transform_indices = @transform_3, window_bounds = array<i64: 8, 128>}]} {
    %c0 = arith.constant 0 : index
    %c0_0 = arith.constant 0 : index
    %0 = vector.load %arg1[%c0, %c0_0] : memref<8x128xf32, #tpu.memory_space<vmem>>, vector<8x128xf32>
    %1 = arith.truncf %0 : vector<8x128xf32> to vector<8x128xbf16>
    %c0_1 = arith.constant 0 : index
    %c0_2 = arith.constant 0 : index
    %2 = vector.load %arg2[%c0_1, %c0_2] : memref<128x128xbf16, #tpu.memory_space<vmem>>, vector<128x128xbf16>
    %cst = arith.constant dense<0.000000e+00> : vector<8x128xf32>
    %3 = tpu.matmul %1, %2, %cst {dimension_numbers = #tpu.dot_dimension_numbers<[1], [0], [0], [1], [0, 0, 1, 1], [], []>} : vector<8x128xbf16>, vector<128x128xbf16>, vector<8x128xf32> -> vector<8x128xf32>
    %c0_3 = arith.constant 0 : index
    %c0_4 = arith.constant 0 : index
    %4 = vector.load %arg3[%c0_3, %c0_4] : memref<1x128xf32, #tpu.memory_space<vmem>>, vector<1x128xf32>
    %5 = vector.broadcast %4 : vector<1x128xf32> to vector<8x128xf32>
    %6 = arith.addf %3, %5 : vector<8x128xf32>
    %cst_5 = arith.constant 0.000000e+00 : f32
    %7 = vector.broadcast %cst_5 : f32 to vector<8x128xf32>
    %8 = arith.maximumf %6, %7 : vector<8x128xf32>
    %c0_6 = arith.constant 0 : index
    %c0_7 = arith.constant 0 : index
    %9 = vector.load %arg4[%c0_6, %c0_7] : memref<8x128xf32, #tpu.memory_space<vmem>>, vector<8x128xf32>
    tpu.vector_store %arg4[%c0_6, %c0_7], %8 {strides = array<i32>} : memref<8x128xf32, #tpu.memory_space<vmem>>, vector<8x128xf32>,
    return
  }
  func.func @transform_0(%arg0: i32) -> (i32, i32) {
    %c0_i32 = arith.constant 0 : i32
    %c0_i32_0 = arith.constant 0 : i32
    return %arg0, %c0_i32 : i32, i32
  }
  func.func @transform_1(%arg0: i32) -> (i32, i32) {
    %c0_i32 = arith.constant 0 : i32
    %c0_i32_0 = arith.constant 0 : i32
    %c0_i32_1 = arith.constant 0 : i32
    return %c0_i32, %c0_i32_0 : i32, i32
  }
  func.func @transform_2(%arg0: i32) -> (i32, i32) {
    %c0_i32 = arith.constant 0 : i32
    %c0_i32_0 = arith.constant 0 : i32
    %c0_i32_1 = arith.constant 0 : i32
    return %c0_i32, %c0_i32_0 : i32, i32
  }
  func.func @transform_3(%arg0: i32) -> (i32, i32) {
    %c0_i32 = arith.constant 0 : i32
    %c0_i32_0 = arith.constant 0 : i32
    return %arg0, %c0_i32 : i32, i32
  }
}

module attributes {stable_mosaic.version = 11 : i64} {
  func.func @_dw3x3_relu_kernel(%arg0: i32, %arg1: i32, %arg2: memref<1x4x4x128xf32, #tpu.memory_space<vmem>>, %arg3: memref<3x3x128xf32, #tpu.memory_space<vmem>>, %arg4: memref<1x128xf32, #tpu.memory_space<vmem>>, %arg5: memref<1x2x2x128xf32, #tpu.memory_space<vmem>>) attributes {dimension_semantics = [#tpu.dimension_semantics<parallel>, #tpu.dimension_semantics<parallel>], iteration_bounds = array<i64: 2, 1>, scalar_prefetch = 0 : i64, scratch_operands = 0 : i64, tpu.core_type = #tpu.core_type<tc>, window_params = [{transform_indices = @transform_0, window_bounds = array<i64: 1, 4, 4, 128>}, {transform_indices = @transform_1, window_bounds = array<i64: 3, 3, 128>}, {transform_indices = @transform_2, window_bounds = array<i64: 1, 128>}, {transform_indices = @transform_3, window_bounds = array<i64: 1, 2, 2, 128>}]} {
    %c0 = arith.constant 0 : index
    %c0_0 = arith.constant 0 : index
    %c0_1 = arith.constant 0 : index
    %c0_2 = arith.constant 0 : index
    %0 = vector.load %arg2[%c0, %c0_0, %c0_1, %c0_2] : memref<1x4x4x128xf32, #tpu.memory_space<vmem>>, vector<1x4x4x128xf32>
    %1 = vector.shape_cast %0 : vector<1x4x4x128xf32> to vector<4x4x128xf32>
    %c0_3 = arith.constant 0 : index
    %c0_4 = arith.constant 0 : index
    %c0_5 = arith.constant 0 : index
    %2 = vector.load %arg3[%c0_3, %c0_4, %c0_5] : memref<3x3x128xf32, #tpu.memory_space<vmem>>, vector<3x3x128xf32>
    %cst = arith.constant 0.000000e+00 : f32
    %3 = vector.broadcast %cst : f32 to vector<2x2x128xf32>
    %4 = vector.extract_strided_slice %1 {offsets = [0, 0, 0], sizes = [2, 2, 128], strides = [1, 1, 1]} : vector<4x4x128xf32> to vector<2x2x128xf32>
    %5 = vector.extract_strided_slice %2 {offsets = [0, 0, 0], sizes = [1, 1, 128], strides = [1, 1, 1]} : vector<3x3x128xf32> to vector<1x1x128xf32>
    %6 = vector.shape_cast %5 : vector<1x1x128xf32> to vector<128xf32>
    %7 = vector.shape_cast %6 : vector<128xf32> to vector<1x1x128xf32>
    %8 = vector.broadcast %7 : vector<1x1x128xf32> to vector<2x2x128xf32>
    %9 = arith.mulf %4, %8 : vector<2x2x128xf32>
    %10 = arith.addf %3, %9 : vector<2x2x128xf32>
    %11 = vector.extract_strided_slice %1 {offsets = [0, 1, 0], sizes = [2, 2, 128], strides = [1, 1, 1]} : vector<4x4x128xf32> to vector<2x2x128xf32>
    %12 = vector.extract_strided_slice %2 {offsets = [0, 1, 0], sizes = [1, 1, 128], strides = [1, 1, 1]} : vector<3x3x128xf32> to vector<1x1x128xf32>
    %13 = vector.shape_cast %12 : vector<1x1x128xf32> to vector<128xf32>
    %14 = vector.shape_cast %13 : vector<128xf32> to vector<1x1x128xf32>
    %15 = vector.broadcast %14 : vector<1x1x128xf32> to vector<2x2x128xf32>
    %16 = arith.mulf %11, %15 : vector<2x2x128xf32>
    %17 = arith.addf %10, %16 : vector<2x2x128xf32>
    %18 = vector.extract_strided_slice %1 {offsets = [0, 2, 0], sizes = [2, 2, 128], strides = [1, 1, 1]} : vector<4x4x128xf32> to vector<2x2x128xf32>
    %19 = vector.extract_strided_slice %2 {offsets = [0, 2, 0], sizes = [1, 1, 128], strides = [1, 1, 1]} : vector<3x3x128xf32> to vector<1x1x128xf32>
    %20 = vector.shape_cast %19 : vector<1x1x128xf32> to vector<128xf32>
    %21 = vector.shape_cast %20 : vector<128xf32> to vector<1x1x128xf32>
    %22 = vector.broadcast %21 : vector<1x1x128xf32> to vector<2x2x128xf32>
    %23 = arith.mulf %18, %22 : vector<2x2x128xf32>
    %24 = arith.addf %17, %23 : vector<2x2x128xf32>
    %25 = vector.extract_strided_slice %1 {offsets = [1, 0, 0], sizes = [2, 2, 128], strides = [1, 1, 1]} : vector<4x4x128xf32> to vector<2x2x128xf32>
    %26 = vector.extract_strided_slice %2 {offsets = [1, 0, 0], sizes = [1, 1, 128], strides = [1, 1, 1]} : vector<3x3x128xf32> to vector<1x1x128xf32>
    %27 = vector.shape_cast %26 : vector<1x1x128xf32> to vector<128xf32>
    %28 = vector.shape_cast %27 : vector<128xf32> to vector<1x1x128xf32>
    %29 = vector.broadcast %28 : vector<1x1x128xf32> to vector<2x2x128xf32>
    %30 = arith.mulf %25, %29 : vector<2x2x128xf32>
    %31 = arith.addf %24, %30 : vector<2x2x128xf32>
    %32 = vector.extract_strided_slice %1 {offsets = [1, 1, 0], sizes = [2, 2, 128], strides = [1, 1, 1]} : vector<4x4x128xf32> to vector<2x2x128xf32>
    %33 = vector.extract_strided_slice %2 {offsets = [1, 1, 0], sizes = [1, 1, 128], strides = [1, 1, 1]} : vector<3x3x128xf32> to vector<1x1x128xf32>
    %34 = vector.shape_cast %33 : vector<1x1x128xf32> to vector<128xf32>
    %35 = vector.shape_cast %34 : vector<128xf32> to vector<1x1x128xf32>
    %36 = vector.broadcast %35 : vector<1x1x128xf32> to vector<2x2x128xf32>
    %37 = arith.mulf %32, %36 : vector<2x2x128xf32>
    %38 = arith.addf %31, %37 : vector<2x2x128xf32>
    %39 = vector.extract_strided_slice %1 {offsets = [1, 2, 0], sizes = [2, 2, 128], strides = [1, 1, 1]} : vector<4x4x128xf32> to vector<2x2x128xf32>
    %40 = vector.extract_strided_slice %2 {offsets = [1, 2, 0], sizes = [1, 1, 128], strides = [1, 1, 1]} : vector<3x3x128xf32> to vector<1x1x128xf32>
    %41 = vector.shape_cast %40 : vector<1x1x128xf32> to vector<128xf32>
    %42 = vector.shape_cast %41 : vector<128xf32> to vector<1x1x128xf32>
    %43 = vector.broadcast %42 : vector<1x1x128xf32> to vector<2x2x128xf32>
    %44 = arith.mulf %39, %43 : vector<2x2x128xf32>
    %45 = arith.addf %38, %44 : vector<2x2x128xf32>
    %46 = vector.extract_strided_slice %1 {offsets = [2, 0, 0], sizes = [2, 2, 128], strides = [1, 1, 1]} : vector<4x4x128xf32> to vector<2x2x128xf32>
    %47 = vector.extract_strided_slice %2 {offsets = [2, 0, 0], sizes = [1, 1, 128], strides = [1, 1, 1]} : vector<3x3x128xf32> to vector<1x1x128xf32>
    %48 = vector.shape_cast %47 : vector<1x1x128xf32> to vector<128xf32>
    %49 = vector.shape_cast %48 : vector<128xf32> to vector<1x1x128xf32>
    %50 = vector.broadcast %49 : vector<1x1x128xf32> to vector<2x2x128xf32>
    %51 = arith.mulf %46, %50 : vector<2x2x128xf32>
    %52 = arith.addf %45, %51 : vector<2x2x128xf32>
    %53 = vector.extract_strided_slice %1 {offsets = [2, 1, 0], sizes = [2, 2, 128], strides = [1, 1, 1]} : vector<4x4x128xf32> to vector<2x2x128xf32>
    %54 = vector.extract_strided_slice %2 {offsets = [2, 1, 0], sizes = [1, 1, 128], strides = [1, 1, 1]} : vector<3x3x128xf32> to vector<1x1x128xf32>
    %55 = vector.shape_cast %54 : vector<1x1x128xf32> to vector<128xf32>
    %56 = vector.shape_cast %55 : vector<128xf32> to vector<1x1x128xf32>
    %57 = vector.broadcast %56 : vector<1x1x128xf32> to vector<2x2x128xf32>
    %58 = arith.mulf %53, %57 : vector<2x2x128xf32>
    %59 = arith.addf %52, %58 : vector<2x2x128xf32>
    %60 = vector.extract_strided_slice %1 {offsets = [2, 2, 0], sizes = [2, 2, 128], strides = [1, 1, 1]} : vector<4x4x128xf32> to vector<2x2x128xf32>
    %61 = vector.extract_strided_slice %2 {offsets = [2, 2, 0], sizes = [1, 1, 128], strides = [1, 1, 1]} : vector<3x3x128xf32> to vector<1x1x128xf32>
    %62 = vector.shape_cast %61 : vector<1x1x128xf32> to vector<128xf32>
    %63 = vector.shape_cast %62 : vector<128xf32> to vector<1x1x128xf32>
    %64 = vector.broadcast %63 : vector<1x1x128xf32> to vector<2x2x128xf32>
    %65 = arith.mulf %60, %64 : vector<2x2x128xf32>
    %66 = arith.addf %59, %65 : vector<2x2x128xf32>
    %c0_6 = arith.constant 0 : index
    %c0_7 = arith.constant 0 : index
    %67 = vector.load %arg4[%c0_6, %c0_7] : memref<1x128xf32, #tpu.memory_space<vmem>>, vector<1x128xf32>
    %68 = vector.shape_cast %67 : vector<1x128xf32> to vector<1x1x128xf32>
    %69 = vector.broadcast %68 : vector<1x1x128xf32> to vector<2x2x128xf32>
    %70 = arith.addf %66, %69 : vector<2x2x128xf32>
    %cst_8 = arith.constant 0.000000e+00 : f32
    %71 = vector.broadcast %cst_8 : f32 to vector<2x2x128xf32>
    %72 = arith.maximumf %70, %71 : vector<2x2x128xf32>
    %c0_9 = arith.constant 0 : index
    %c0_10 = arith.constant 0 : index
    %c0_11 = arith.constant 0 : index
    %c0_12 = arith.constant 0 : index
    %73 = vector.load %arg5[%c0_9, %c0_10, %c0_11, %c0_12] : memref<1x2x2x128xf32, #tpu.memory_space<vmem>>, vector<1x2x2x128xf32>
    %74 = vector.shape_cast %73 : vector<1x2x2x128xf32> to vector<2x2x128xf32>
    %75 = vector.shape_cast %72 : vector<2x2x128xf32> to vector<1x2x2x128xf32>
    tpu.vector_store %arg5[%c0_9, %c0_10, %c0_11, %c0_12], %75 {strides = array<i32>} : memref<1x2x2x128xf32, #tpu.memory_space<vmem>>, vector<1x2x2x128xf32>,
    return
  }
  func.func @transform_0(%arg0: i32, %arg1: i32) -> (i32, i32, i32, i32) {
    %c0_i32 = arith.constant 0 : i32
    %c0_i32_0 = arith.constant 0 : i32
    %c0_i32_1 = arith.constant 0 : i32
    return %arg0, %c0_i32, %c0_i32_0, %arg1 : i32, i32, i32, i32
  }
  func.func @transform_1(%arg0: i32, %arg1: i32) -> (i32, i32, i32) {
    %c0_i32 = arith.constant 0 : i32
    %c0_i32_0 = arith.constant 0 : i32
    %c0_i32_1 = arith.constant 0 : i32
    return %c0_i32, %c0_i32_0, %arg1 : i32, i32, i32
  }
  func.func @transform_2(%arg0: i32, %arg1: i32) -> (i32, i32) {
    %c0_i32 = arith.constant 0 : i32
    %c0_i32_0 = arith.constant 0 : i32
    return %c0_i32, %arg1 : i32, i32
  }
  func.func @transform_3(%arg0: i32, %arg1: i32) -> (i32, i32, i32, i32) {
    %c0_i32 = arith.constant 0 : i32
    %c0_i32_0 = arith.constant 0 : i32
    %c0_i32_1 = arith.constant 0 : i32
    return %arg0, %c0_i32, %c0_i32_0, %arg1 : i32, i32, i32, i32
  }
}

module attributes {stable_mosaic.version = 11 : i64} {
  func.func @_gap_linear_kernel(%arg0: i32, %arg1: memref<8x1x128xf32, #tpu.memory_space<vmem>>, %arg2: memref<128x128xbf16, #tpu.memory_space<vmem>>, %arg3: memref<1x128xf32, #tpu.memory_space<vmem>>, %arg4: memref<8x128xf32, #tpu.memory_space<vmem>>) attributes {dimension_semantics = [#tpu.dimension_semantics<parallel>], iteration_bounds = array<i64: 1>, scalar_prefetch = 0 : i64, scratch_operands = 0 : i64, tpu.core_type = #tpu.core_type<tc>, window_params = [{transform_indices = @transform_0, window_bounds = array<i64: 8, 1, 128>}, {pipeline_mode = #tpu.pipeline_mode<synchronous>, transform_indices = @transform_1, window_bounds = array<i64: 128, 128>}, {pipeline_mode = #tpu.pipeline_mode<synchronous>, transform_indices = @transform_2, window_bounds = array<i64: 1, 128>}, {transform_indices = @transform_3, window_bounds = array<i64: 8, 128>}]} {
    %c0 = arith.constant 0 : index
    %c0_0 = arith.constant 0 : index
    %c0_1 = arith.constant 0 : index
    %0 = vector.load %arg1[%c0, %c0_0, %c0_1] : memref<8x1x128xf32, #tpu.memory_space<vmem>>, vector<8x1x128xf32>
    %cst = arith.constant dense<0.000000e+00> : vector<8x128xf32>
    %1 = vector.multi_reduction <add>, %0, %cst [1] : vector<8x1x128xf32> to vector<8x128xf32>
    %cst_2 = arith.constant 1.000000e+00 : f32
    %2 = vector.broadcast %cst_2 : f32 to vector<8x128xf32>
    %3 = arith.divf %1, %2 : vector<8x128xf32>
    %4 = arith.truncf %3 : vector<8x128xf32> to vector<8x128xbf16>
    %c0_3 = arith.constant 0 : index
    %c0_4 = arith.constant 0 : index
    %5 = vector.load %arg2[%c0_3, %c0_4] : memref<128x128xbf16, #tpu.memory_space<vmem>>, vector<128x128xbf16>
    %cst_5 = arith.constant dense<0.000000e+00> : vector<8x128xf32>
    %6 = tpu.matmul %4, %5, %cst_5 {dimension_numbers = #tpu.dot_dimension_numbers<[1], [0], [0], [1], [0, 0, 1, 1], [], []>} : vector<8x128xbf16>, vector<128x128xbf16>, vector<8x128xf32> -> vector<8x128xf32>
    %c0_6 = arith.constant 0 : index
    %c0_7 = arith.constant 0 : index
    %7 = vector.load %arg3[%c0_6, %c0_7] : memref<1x128xf32, #tpu.memory_space<vmem>>, vector<1x128xf32>
    %8 = vector.broadcast %7 : vector<1x128xf32> to vector<8x128xf32>
    %9 = arith.addf %6, %8 : vector<8x128xf32>
    %c0_8 = arith.constant 0 : index
    %c0_9 = arith.constant 0 : index
    %10 = vector.load %arg4[%c0_8, %c0_9] : memref<8x128xf32, #tpu.memory_space<vmem>>, vector<8x128xf32>
    tpu.vector_store %arg4[%c0_8, %c0_9], %9 {strides = array<i32>} : memref<8x128xf32, #tpu.memory_space<vmem>>, vector<8x128xf32>,
    return
  }
  func.func @transform_0(%arg0: i32) -> (i32, i32, i32) {
    %c0_i32 = arith.constant 0 : i32
    %c0_i32_0 = arith.constant 0 : i32
    %c0_i32_1 = arith.constant 0 : i32
    return %arg0, %c0_i32, %c0_i32_0 : i32, i32, i32
  }
  func.func @transform_1(%arg0: i32) -> (i32, i32) {
    %c0_i32 = arith.constant 0 : i32
    %c0_i32_0 = arith.constant 0 : i32
    %c0_i32_1 = arith.constant 0 : i32
    return %c0_i32, %c0_i32_0 : i32, i32
  }
  func.func @transform_2(%arg0: i32) -> (i32, i32) {
    %c0_i32 = arith.constant 0 : i32
    %c0_i32_0 = arith.constant 0 : i32
    %c0_i32_1 = arith.constant 0 : i32
    return %c0_i32, %c0_i32_0 : i32, i32
  }
  func.func @transform_3(%arg0: i32) -> (i32, i32) {
    %c0_i32 = arith.constant 0 : i32
    %c0_i32_0 = arith.constant 0 : i32
    return %arg0, %c0_i32 : i32, i32
  }
}

</mosaic_0001>

<llo_original>
// kernel: run.10
$region0: #{run.10}
  #allocation0 [shape = 'u32[]', space=smem, size = 0x4, offset = 0x4, fixed_abs, tag = 'smem constant byte address 0x4 - core index']
  #allocation1 [shape = 'u32[144,128]{1,0:T(1,128)}', space=vmem, size = 0x12000, scoped, tag = 'internal scratch']
  %s0 = inlined_call_operand.vmem [shape: f32[512,27], index: 0, kind: input, shape index: {}]
  %s1 = inlined_call_operand.vmem [shape: bf16[27,128], index: 1, kind: input, shape index: {}]
  %s2 = inlined_call_operand.vmem [shape: f32[1,128], index: 2, kind: input, shape index: {}]
  %s3 = inlined_call_operand.vmem [shape: f32[512,128], index: 3, kind: output, shape index: {}]
  %s4 = sld [smem:[#allocation0]]
  $region22: #{run.10} parent=0
    _
  %s6 = ssub.s32 1, %s4
  %s7 = scalar_select 0, %s6, %s4
  // Predicated region
  $region2: #{run.10} parent=0 // pred_check
    _
  $region3: #{run.10} parent=0 // pred_check_branch
    %9 = sbr.rel (0) target = $region5
  $region4: #{run.10} parent=0 // pred_region
    _
  $region5: #{run.10} parent=0 // pred_fallthru
    _
  // Predicated region
  $region6: #{run.10} parent=0 // pred_check
    _
  $region7: #{run.10} parent=0 // pred_check_branch
    %11 = sbr.rel (0) target = $region9
  $region8: #{run.10} parent=0 // pred_region
    _
  $region9: #{run.10} parent=0 // pred_fallthru
    _
  // Predicated region
  $region10: #{run.10} parent=0 // pred_check
    _
  $region11: #{run.10} parent=0 // pred_check_branch
    %13 = sbr.rel (0) target = $region13
  $region12: #{run.10} parent=0 // pred_region
    _
  $region13: #{run.10} parent=0 // pred_fallthru
    _
  %v15 = vld [vmem:[%s0] sm:$0xff]
  %v16 = vld [vmem:[%s0 + $0x8] sm:$0xff]
  %v17 = vld [vmem:[%s0 + $0x10] sm:$0xff]
  %v18 = vld [vmem:[%s0 + $0x18] sm:$0xff]
  %v19 = vld [vmem:[%s0 + $0x20] sm:$0xff]
  %v20 = vld [vmem:[%s0 + $0x28] sm:$0xff]
  %v21 = vld [vmem:[%s0 + $0x30] sm:$0xff]
  %v22 = vld [vmem:[%s0 + $0x38] sm:$0xff]
  %v23 = vld [vmem:[%s0 + $0x40] sm:$0xff]
  %v24 = vld [vmem:[%s0 + $0x48] sm:$0xff]
  %v25 = vld [vmem:[%s0 + $0x50] sm:$0xff]
  %v26 = vld [vmem:[%s0 + $0x58] sm:$0xff]
  %v27 = vld [vmem:[%s0 + $0x60] sm:$0xff]
  %v28 = vld [vmem:[%s0 + $0x68] sm:$0xff]
  %v29 = vld [vmem:[%s0 + $0x70] sm:$0xff]
  %v30 = vld [vmem:[%s0 + $0x78] sm:$0xff]
  %v31 = vld [vmem:[%s0 + $0x80] sm:$0xff]
  %v32 = vld [vmem:[%s0 + $0x88] sm:$0xff]
  %v33 = vld [vmem:[%s0 + $0x90] sm:$0xff]
  %v34 = vld [vmem:[%s0 + $0x98] sm:$0xff]
  %v35 = vld [vmem:[%s0 + $0xa0] sm:$0xff]
  %v36 = vld [vmem:[%s0 + $0xa8] sm:$0xff]
  %v37 = vld [vmem:[%s0 + $0xb0] sm:$0xff]
  %v38 = vld [vmem:[%s0 + $0xb8] sm:$0xff]
  %v39 = vld [vmem:[%s0 + $0xc0] sm:$0xff]
  %v40 = vld [vmem:[%s0 + $0xc8] sm:$0xff]
  %v41 = vld [vmem:[%s0 + $0xd0] sm:$0xff]
  %v42 = vld [vmem:[%s0 + $0xd8] sm:$0xff]
  %v43 = vld [vmem:[%s0 + $0xe0] sm:$0xff]
  %v44 = vld [vmem:[%s0 + $0xe8] sm:$0xff]
  %v45 = vld [vmem:[%s0 + $0xf0] sm:$0xff]
  %v46 = vld [vmem:[%s0 + $0xf8] sm:$0xff]
  %v47 = vld [vmem:[%s0 + $0x100] sm:$0xff]
  %v48 = vld [vmem:[%s0 + $0x108] sm:$0xff]
  %v49 = vld [vmem:[%s0 + $0x110] sm:$0xff]
  %v50 = vld [vmem:[%s0 + $0x118] sm:$0xff]
  %v51 = vld [vmem:[%s0 + $0x120] sm:$0xff]
  %v52 = vld [vmem:[%s0 + $0x128] sm:$0xff]
  %v53 = vld [vmem:[%s0 + $0x130] sm:$0xff]
  %v54 = vld [vmem:[%s0 + $0x138] sm:$0xff]
  %v55 = vld [vmem:[%s0 + $0x140] sm:$0xff]
  %v56 = vld [vmem:[%s0 + $0x148] sm:$0xff]
  %v57 = vld [vmem:[%s0 + $0x150] sm:$0xff]
  %v58 = vld [vmem:[%s0 + $0x158] sm:$0xff]
  %v59 = vld [vmem:[%s0 + $0x160] sm:$0xff]
  %v60 = vld [vmem:[%s0 + $0x168] sm:$0xff]
  %v61 = vld [vmem:[%s0 + $0x170] sm:$0xff]
  %v62 = vld [vmem:[%s0 + $0x178] sm:$0xff]
  %v63 = vld [vmem:[%s0 + $0x180] sm:$0xff]
  %v64 = vld [vmem:[%s0 + $0x188] sm:$0xff]
  %v65 = vld [vmem:[%s0 + $0x190] sm:$0xff]
  %v66 = vld [vmem:[%s0 + $0x198] sm:$0xff]
  %v67 = vld [vmem:[%s0 + $0x1a0] sm:$0xff]
  %v68 = vld [vmem:[%s0 + $0x1a8] sm:$0xff]
  %v69 = vld [vmem:[%s0 + $0x1b0] sm:$0xff]
  %v70 = vld [vmem:[%s0 + $0x1b8] sm:$0xff]
  %v71 = vld [vmem:[%s0 + $0x1c0] sm:$0xff]
  %v72 = vld [vmem:[%s0 + $0x1c8] sm:$0xff]
  %v73 = vld [vmem:[%s0 + $0x1d0] sm:$0xff]
  %v74 = vld [vmem:[%s0 + $0x1d8] sm:$0xff]
  %v75 = vld [vmem:[%s0 + $0x1e0] sm:$0xff]
  %v76 = vld [vmem:[%s0 + $0x1e8] sm:$0xff]
  %v77 = vld [vmem:[%s0 + $0x1f0] sm:$0xff]
  %v78 = vld [vmem:[%s0 + $0x1f8] sm:$0xff]
  %v79 = vpack.c.bf16 %v16, %v15
  %v80 = vpack.c.bf16 %v18, %v17
  %v81 = vpack.c.bf16 %v20, %v19
  %v82 = vpack.c.bf16 %v22, %v21
  %v83 = vpack.c.bf16 %v24, %v23
  %v84 = vpack.c.bf16 %v26, %v25
  %v85 = vpack.c.bf16 %v28, %v27
  %v86 = vpack.c.bf16 %v30, %v29
  %v87 = vpack.c.bf16 %v32, %v31
  %v88 = vpack.c.bf16 %v34, %v33
  %v89 = vpack.c.bf16 %v36, %v35
  %v90 = vpack.c.bf16 %v38, %v37
  %v91 = vpack.c.bf16 %v40, %v39
  %v92 = vpack.c.bf16 %v42, %v41
  %v93 = vpack.c.bf16 %v44, %v43
  %v94 = vpack.c.bf16 %v46, %v45
  %v95 = vpack.c.bf16 %v48, %v47
  %v96 = vpack.c.bf16 %v50, %v49
  %v97 = vpack.c.bf16 %v52, %v51
  %v98 = vpack.c.bf16 %v54, %v53
  %v99 = vpack.c.bf16 %v56, %v55
  %v100 = vpack.c.bf16 %v58, %v57
  %v101 = vpack.c.bf16 %v60, %v59
  %v102 = vpack.c.bf16 %v62, %v61
  %v103 = vpack.c.bf16 %v64, %v63
  %v104 = vpack.c.bf16 %v66, %v65
  %v105 = vpack.c.bf16 %v68, %v67
  %v106 = vpack.c.bf16 %v70, %v69
  %v107 = vpack.c.bf16 %v72, %v71
  %v108 = vpack.c.bf16 %v74, %v73
  %v109 = vpack.c.bf16 %v76, %v75
  %v110 = vpack.c.bf16 %v78, %v77
  %v111 = vld [vmem:[%s1] sm:$0xf]
  %v112 = vld [vmem:[%s1 + $0x4] sm:$0xf]
  %v113 = vld [vmem:[%s1 + $0x8] sm:$0xf]
  %v114 = vld [vmem:[%s1 + $0xc] sm:$0x3]
  %v115 = vld [vmem:[%s2] sm:$0x1]
  %v117 = vlaneseq
  %v118 = vshrl.u32 %v117, 7
  %v119 = vsub.s32 0, %v118
  %v120 = vrot.slane %v115, %v119
  %v126 = vunpack.c.l.b16 %v111
  %v127 = vunpack.c.l.b16 %v112
  %v128 = vunpack.c.l.b16 %v113
  %v129 = vunpack.c.l.b16 %v114
  %v130 = vpack.c.b16 %v127, %v126
  %v131 = vpack.c.b16 %v129, %v128
  %vm133 = vcmask 220160
  %v135 = vsel %vm133, %v79, 0
  %v138 = vsel %vm133, %v80, 0
  %v141 = vsel %vm133, %v81, 0
  %v144 = vsel %vm133, %v82, 0
  %v147 = vsel %vm133, %v83, 0
  %v150 = vsel %vm133, %v84, 0
  %v153 = vsel %vm133, %v85, 0
  %v156 = vsel %vm133, %v86, 0
  %v159 = vsel %vm133, %v87, 0
  %v162 = vsel %vm133, %v88, 0
  %v165 = vsel %vm133, %v89, 0
  %v168 = vsel %vm133, %v90, 0
  %v171 = vsel %vm133, %v91, 0
  %v174 = vsel %vm133, %v92, 0
  %v177 = vsel %vm133, %v93, 0
  %v180 = vsel %vm133, %v94, 0
  %v183 = vsel %vm133, %v95, 0
  %v186 = vsel %vm133, %v96, 0
  %v189 = vsel %vm133, %v97, 0
  %v192 = vsel %vm133, %v98, 0
  %v195 = vsel %vm133, %v99, 0
  %v198 = vsel %vm133, %v100, 0
  %v201 = vsel %vm133, %v101, 0
  %v204 = vsel %vm133, %v102, 0
  %v207 = vsel %vm133, %v103, 0
  %v210 = vsel %vm133, %v104, 0
  %v213 = vsel %vm133, %v105, 0
  %v216 = vsel %vm133, %v106, 0
  %v219 = vsel %vm133, %v107, 0
  %v222 = vsel %vm133, %v108, 0
  %v225 = vsel %vm133, %v109, 0
  %v228 = vsel %vm133, %v110, 0
  %vm230 = vcmask 1044480
  %vm231 = vcmask 1045504
  %v232 = vsel %vm230, 4294967295, 65535
  %v233 = vsel %vm231, %v232, 0
  %v235 = vand.u32 %v131, %v233
  %237 = vmatprep.subr.bf16.mxu0 0
  %238 = vmatpush1.bf16.msra.mxu0 0
  %239 = vmatprep.subr.bf16.mxu0 0
  %240 = vmatpush1.bf16.msra.mxu0 0
  %241 = vmatprep.subr.bf16.mxu0 0
  %242 = vmatpush1.bf16.msra.mxu0 0
  %243 = vmatprep.subr.bf16.mxu0 0
  %244 = vmatpush1.bf16.msra.mxu0 0
  %245 = vmatprep.subr.bf16.mxu0 0
  %246 = vmatpush1.bf16.msra.mxu0 0
  %247 = vmatprep.subr.bf16.mxu0 0
  %248 = vmatpush1.bf16.msra.mxu0 0
  %249 = vmatprep.subr.bf16.mxu0 0
  %250 = vmatpush1.bf16.msra.mxu0 %v235
  %251 = vmatprep.subr.bf16.mxu0 0
  %252 = vmatpush1.bf16.msra.mxu0 %v130
  %253 = vmatprep.subr.bf16.mxu0 0
  %254 = vmatpush2.bf16.msra.mxu0 0
  %255 = vmatprep.subr.bf16.mxu0 0
  %256 = vmatpush2.bf16.msra.mxu0 0
  %257 = vmatprep.subr.bf16.mxu0 0
  %258 = vmatpush2.bf16.msra.mxu0 0
  %259 = vmatprep.subr.bf16.mxu0 0
  %260 = vmatpush2.bf16.msra.mxu0 0
  %261 = vmatprep.subr.bf16.mxu0 0
  %262 = vmatpush2.bf16.msra.mxu0 0
  %263 = vmatprep.subr.bf16.mxu0 0
  %264 = vmatpush2.bf16.msra.mxu0 0
  %265 = vmatprep.subr.bf16.mxu0 0
  %266 = vmatpush2.bf16.msra.mxu0 0
  %267 = vmatprep.subr.bf16.mxu0 0
  %268 = vmatpush2.bf16.msra.mxu0 0
  %269 = vmatprep.mubr.bf16.mxu0 0
  %270 = vmatmul.mubr.bf16.gmra.mxu0 %v135
  %v271 = vpop.f32.mrf.mxu0
  %v272 = vadd.f32 %v120, %v271
  %v273 = vpop.f32.mrf.mxu0
  %v274 = vpop.f32.mrf.mxu0
  %v275 = vadd.f32 %v120, %v274
  %v276 = vpop.f32.mrf.mxu0
  %277 = vmatprep.mubr.bf16.mxu0 0
  %278 = vmatmul.mubr.bf16.gmra.mxu0 %v138
  %v279 = vpop.f32.mrf.mxu0
  %v280 = vadd.f32 %v120, %v279
  %v281 = vpop.f32.mrf.mxu0
  %v282 = vpop.f32.mrf.mxu0
  %v283 = vadd.f32 %v120, %v282
  %v284 = vpop.f32.mrf.mxu0
  %285 = vmatprep.mubr.bf16.mxu0 0
  %286 = vmatmul.mubr.bf16.gmra.mxu0 %v141
  %v287 = vpop.f32.mrf.mxu0
  %v288 = vadd.f32 %v120, %v287
  %v289 = vpop.f32.mrf.mxu0
  %v290 = vpop.f32.mrf.mxu0
  %v291 = vadd.f32 %v120, %v290
  %v292 = vpop.f32.mrf.mxu0
  %293 = vmatprep.mubr.bf16.mxu0 0
  %294 = vmatmul.mubr.bf16.gmra.mxu0 %v144
  %v295 = vpop.f32.mrf.mxu0
  %v296 = vadd.f32 %v120, %v295
  %v297 = vpop.f32.mrf.mxu0
  %v298 = vpop.f32.mrf.mxu0
  %v299 = vadd.f32 %v120, %v298
  %v300 = vpop.f32.mrf.mxu0
  %301 = vmatprep.mubr.bf16.mxu0 0
  %302 = vmatmul.mubr.bf16.gmra.mxu0 %v147
  %v303 = vpop.f32.mrf.mxu0
  %v304 = vadd.f32 %v120, %v303
  %v305 = vpop.f32.mrf.mxu0
  %v306 = vpop.f32.mrf.mxu0
  %v307 = vadd.f32 %v120, %v306
  %v308 = vpop.f32.mrf.mxu0
  %309 = vmatprep.mubr.bf16.mxu0 0
  %310 = vmatmul.mubr.bf16.gmra.mxu0 %v150
  %v311 = vpop.f32.mrf.mxu0
  %v312 = vadd.f32 %v120, %v311
  %v313 = vpop.f32.mrf.mxu0
  %v314 = vpop.f32.mrf.mxu0
  %v315 = vadd.f32 %v120, %v314
  %v316 = vpop.f32.mrf.mxu0
  %317 = vmatprep.mubr.bf16.mxu0 0
  %318 = vmatmul.mubr.bf16.gmra.mxu0 %v153
  %v319 = vpop.f32.mrf.mxu0
  %v320 = vadd.f32 %v120, %v319
  %v321 = vpop.f32.mrf.mxu0
  %v322 = vpop.f32.mrf.mxu0
  %v323 = vadd.f32 %v120, %v322
  %v324 = vpop.f32.mrf.mxu0
  %325 = vmatprep.mubr.bf16.mxu0 0
  %326 = vmatmul.mubr.bf16.gmra.mxu0 %v156
  %v327 = vpop.f32.mrf.mxu0
  %v328 = vadd.f32 %v120, %v327
  %v329 = vpop.f32.mrf.mxu0
  %v330 = vpop.f32.mrf.mxu0
  %v331 = vadd.f32 %v120, %v330
  %v332 = vpop.f32.mrf.mxu0
  %333 = vmatprep.mubr.bf16.mxu0 0
  %334 = vmatmul.mubr.bf16.gmra.mxu0 %v159
  %v335 = vpop.f32.mrf.mxu0
  %v336 = vadd.f32 %v120, %v335
  %v337 = vpop.f32.mrf.mxu0
  %v338 = vpop.f32.mrf.mxu0
  %v339 = vadd.f32 %v120, %v338
  %v340 = vpop.f32.mrf.mxu0
  %341 = vmatprep.mubr.bf16.mxu0 0
  %342 = vmatmul.mubr.bf16.gmra.mxu0 %v162
  %v343 = vpop.f32.mrf.mxu0
  %v344 = vadd.f32 %v120, %v343
  %v345 = vpop.f32.mrf.mxu0
  %v346 = vpop.f32.mrf.mxu0
  %v347 = vadd.f32 %v120, %v346
  %v348 = vpop.f32.mrf.mxu0
  %349 = vmatprep.mubr.bf16.mxu0 0
  %350 = vmatmul.mubr.bf16.gmra.mxu0 %v165
  %v351 = vpop.f32.mrf.mxu0
  %v352 = vadd.f32 %v120, %v351
  %v353 = vpop.f32.mrf.mxu0
  %v354 = vpop.f32.mrf.mxu0
  %v355 = vadd.f32 %v120, %v354
  %v356 = vpop.f32.mrf.mxu0
  %357 = vmatprep.mubr.bf16.mxu0 0
  %358 = vmatmul.mubr.bf16.gmra.mxu0 %v168
  %v359 = vpop.f32.mrf.mxu0
  %v360 = vadd.f32 %v120, %v359
  %v361 = vpop.f32.mrf.mxu0
  %v362 = vpop.f32.mrf.mxu0
  %v363 = vadd.f32 %v120, %v362
  %v364 = vpop.f32.mrf.mxu0
  %365 = vmatprep.mubr.bf16.mxu0 0
  %366 = vmatmul.mubr.bf16.gmra.mxu0 %v171
  %v367 = vpop.f32.mrf.mxu0
  %v368 = vadd.f32 %v120, %v367
  %v369 = vpop.f32.mrf.mxu0
  %v370 = vpop.f32.mrf.mxu0
  %v371 = vadd.f32 %v120, %v370
  %v372 = vpop.f32.mrf.mxu0
  %373 = vmatprep.mubr.bf16.mxu0 0
  %374 = vmatmul.mubr.bf16.gmra.mxu0 %v174
  %v375 = vpop.f32.mrf.mxu0
  %v376 = vadd.f32 %v120, %v375
  %v377 = vpop.f32.mrf.mxu0
  %v378 = vpop.f32.mrf.mxu0
  %v379 = vadd.f32 %v120, %v378
  %v380 = vpop.f32.mrf.mxu0
  %381 = vmatprep.mubr.bf16.mxu0 0
  %382 = vmatmul.mubr.bf16.gmra.mxu0 %v177
  %v383 = vpop.f32.mrf.mxu0
  %v384 = vadd.f32 %v120, %v383
  %v385 = vpop.f32.mrf.mxu0
  %v386 = vpop.f32.mrf.mxu0
  %v387 = vadd.f32 %v120, %v386
  %v388 = vpop.f32.mrf.mxu0
  %389 = vmatprep.mubr.bf16.mxu0 0
  %390 = vmatmul.mubr.bf16.gmra.mxu0 %v180
  %v391 = vpop.f32.mrf.mxu0
  %v392 = vadd.f32 %v120, %v391
  %v393 = vpop.f32.mrf.mxu0
  %v394 = vpop.f32.mrf.mxu0
  %v395 = vadd.f32 %v120, %v394
  %v396 = vpop.f32.mrf.mxu0
  %397 = vmatprep.mubr.bf16.mxu0 0
  %398 = vmatmul.mubr.bf16.gmra.mxu0 %v183
  %v399 = vpop.f32.mrf.mxu0
  %v400 = vadd.f32 %v120, %v399
  %v401 = vpop.f32.mrf.mxu0
  %v402 = vpop.f32.mrf.mxu0
  %v403 = vadd.f32 %v120, %v402
  %v404 = vpop.f32.mrf.mxu0
  %405 = vmatprep.mubr.bf16.mxu0 0
  %406 = vmatmul.mubr.bf16.gmra.mxu0 %v186
  %v407 = vpop.f32.mrf.mxu0
  %v408 = vadd.f32 %v120, %v407
  %v409 = vpop.f32.mrf.mxu0
  %v410 = vpop.f32.mrf.mxu0
  %v411 = vadd.f32 %v120, %v410
  %v412 = vpop.f32.mrf.mxu0
  %413 = vmatprep.mubr.bf16.mxu0 0
  %414 = vmatmul.mubr.bf16.gmra.mxu0 %v189
  %v415 = vpop.f32.mrf.mxu0
  %v416 = vadd.f32 %v120, %v415
  %v417 = vpop.f32.mrf.mxu0
  %v418 = vpop.f32.mrf.mxu0
  %v419 = vadd.f32 %v120, %v418
  %v420 = vpop.f32.mrf.mxu0
  %421 = vmatprep.mubr.bf16.mxu0 0
  %422 = vmatmul.mubr.bf16.gmra.mxu0 %v192
  %v423 = vpop.f32.mrf.mxu0
  %v424 = vadd.f32 %v120, %v423
  %v425 = vpop.f32.mrf.mxu0
  %v426 = vpop.f32.mrf.mxu0
  %v427 = vadd.f32 %v120, %v426
  %v428 = vpop.f32.mrf.mxu0
  %429 = vmatprep.mubr.bf16.mxu0 0
  %430 = vmatmul.mubr.bf16.gmra.mxu0 %v195
  %v431 = vpop.f32.mrf.mxu0
  %v432 = vadd.f32 %v120, %v431
  %v433 = vpop.f32.mrf.mxu0
  %v434 = vpop.f32.mrf.mxu0
  %v435 = vadd.f32 %v120, %v434
  %v436 = vpop.f32.mrf.mxu0
  %437 = vmatprep.mubr.bf16.mxu0 0
  %438 = vmatmul.mubr.bf16.gmra.mxu0 %v198
  %v439 = vpop.f32.mrf.mxu0
  %v440 = vadd.f32 %v120, %v439
  %v441 = vpop.f32.mrf.mxu0
  %v442 = vpop.f32.mrf.mxu0
  %v443 = vadd.f32 %v120, %v442
  %v444 = vpop.f32.mrf.mxu0
  %445 = vmatprep.mubr.bf16.mxu0 0
  %446 = vmatmul.mubr.bf16.gmra.mxu0 %v201
  %v447 = vpop.f32.mrf.mxu0
  %v448 = vadd.f32 %v120, %v447
  %v449 = vpop.f32.mrf.mxu0
  %v450 = vpop.f32.mrf.mxu0
  %v451 = vadd.f32 %v120, %v450
  %v452 = vpop.f32.mrf.mxu0
  %453 = vmatprep.mubr.bf16.mxu0 0
  %454 = vmatmul.mubr.bf16.gmra.mxu0 %v204
  %v455 = vpop.f32.mrf.mxu0
  %v456 = vadd.f32 %v120, %v455
  %v457 = vpop.f32.mrf.mxu0
  %v458 = vpop.f32.mrf.mxu0
  %v459 = vadd.f32 %v120, %v458
  %v460 = vpop.f32.mrf.mxu0
  %461 = vmatprep.mubr.bf16.mxu0 0
  %462 = vmatmul.mubr.bf16.gmra.mxu0 %v207
  %v463 = vpop.f32.mrf.mxu0
  %v464 = vadd.f32 %v120, %v463
  %v465 = vpop.f32.mrf.mxu0
  %v466 = vpop.f32.mrf.mxu0
  %v467 = vadd.f32 %v120, %v466
  %v468 = vpop.f32.mrf.mxu0
  %469 = vmatprep.mubr.bf16.mxu0 0
  %470 = vmatmul.mubr.bf16.gmra.mxu0 %v210
  %v471 = vpop.f32.mrf.mxu0
  %v472 = vadd.f32 %v120, %v471
  %v473 = vpop.f32.mrf.mxu0
  %v474 = vpop.f32.mrf.mxu0
  %v475 = vadd.f32 %v120, %v474
  %v476 = vpop.f32.mrf.mxu0
  %477 = vmatprep.mubr.bf16.mxu0 0
  %478 = vmatmul.mubr.bf16.gmra.mxu0 %v213
  %v479 = vpop.f32.mrf.mxu0
  %v480 = vadd.f32 %v120, %v479
  %v481 = vpop.f32.mrf.mxu0
  %v482 = vpop.f32.mrf.mxu0
  %v483 = vadd.f32 %v120, %v482
  %v484 = vpop.f32.mrf.mxu0
  %485 = vmatprep.mubr.bf16.mxu0 0
  %486 = vmatmul.mubr.bf16.gmra.mxu0 %v216
  %v487 = vpop.f32.mrf.mxu0
  %v488 = vadd.f32 %v120, %v487
  %v489 = vpop.f32.mrf.mxu0
  %v490 = vpop.f32.mrf.mxu0
  %v491 = vadd.f32 %v120, %v490
  %v492 = vpop.f32.mrf.mxu0
  %493 = vmatprep.mubr.bf16.mxu0 0
  %494 = vmatmul.mubr.bf16.gmra.mxu0 %v219
  %v495 = vpop.f32.mrf.mxu0
  %v496 = vadd.f32 %v120, %v495
  %v497 = vpop.f32.mrf.mxu0
  %v498 = vpop.f32.mrf.mxu0
  %v499 = vadd.f32 %v120, %v498
  %v500 = vpop.f32.mrf.mxu0
  %501 = vmatprep.mubr.bf16.mxu0 0
  %502 = vmatmul.mubr.bf16.gmra.mxu0 %v222
  %v503 = vpop.f32.mrf.mxu0
  %v504 = vadd.f32 %v120, %v503
  %v505 = vpop.f32.mrf.mxu0
  %v506 = vpop.f32.mrf.mxu0
  %v507 = vadd.f32 %v120, %v506
  %v508 = vpop.f32.mrf.mxu0
  %509 = vmatprep.mubr.bf16.mxu0 0
  %510 = vmatmul.mubr.bf16.gmra.mxu0 %v225
  %v511 = vpop.f32.mrf.mxu0
  %v512 = vadd.f32 %v120, %v511
  %v513 = vpop.f32.mrf.mxu0
  %v514 = vpop.f32.mrf.mxu0
  %v515 = vadd.f32 %v120, %v514
  %v516 = vpop.f32.mrf.mxu0
  %517 = vmatprep.mubr.bf16.mxu0 0
  %518 = vmatmul.mubr.bf16.gmra.mxu0 %v228
  %v519 = vpop.f32.mrf.mxu0
  %v520 = vadd.f32 %v120, %v519
  %v521 = vpop.f32.mrf.mxu0
  %v522 = vpop.f32.mrf.mxu0
  %v523 = vadd.f32 %v120, %v522
  %v524 = vpop.f32.mrf.mxu0
  %525 = vdwg.mxu0
  %v526 = vmax.f32 %v272, 0.0
  %v527 = vmax.f32 %v275, 0.0
  %v528 = vmax.f32 %v280, 0.0
  %v529 = vmax.f32 %v283, 0.0
  %v530 = vmax.f32 %v288, 0.0
  %v531 = vmax.f32 %v291, 0.0
  %v532 = vmax.f32 %v296, 0.0
  %v533 = vmax.f32 %v299, 0.0
  %v534 = vmax.f32 %v304, 0.0
  %v535 = vmax.f32 %v307, 0.0
  %v536 = vmax.f32 %v312, 0.0
  %v537 = vmax.f32 %v315, 0.0
  %v538 = vmax.f32 %v320, 0.0
  %v539 = vmax.f32 %v323, 0.0
  %v540 = vmax.f32 %v328, 0.0
  %v541 = vmax.f32 %v331, 0.0
  %v542 = vmax.f32 %v336, 0.0
  %v543 = vmax.f32 %v339, 0.0
  %v544 = vmax.f32 %v344, 0.0
  %v545 = vmax.f32 %v347, 0.0
  %v546 = vmax.f32 %v352, 0.0
  %v547 = vmax.f32 %v355, 0.0
  %v548 = vmax.f32 %v360, 0.0
  %v549 = vmax.f32 %v363, 0.0
  %v550 = vmax.f32 %v368, 0.0
  %v551 = vmax.f32 %v371, 0.0
  %v552 = vmax.f32 %v376, 0.0
  %v553 = vmax.f32 %v379, 0.0
  %v554 = vmax.f32 %v384, 0.0
  %v555 = vmax.f32 %v387, 0.0
  %v556 = vmax.f32 %v392, 0.0
  %v557 = vmax.f32 %v395, 0.0
  %v558 = vmax.f32 %v400, 0.0
  %v559 = vmax.f32 %v403, 0.0
  %v560 = vmax.f32 %v408, 0.0
  %v561 = vmax.f32 %v411, 0.0
  %v562 = vmax.f32 %v416, 0.0
  %v563 = vmax.f32 %v419, 0.0
  %v564 = vmax.f32 %v424, 0.0
  %v565 = vmax.f32 %v427, 0.0
  %v566 = vmax.f32 %v432, 0.0
  %v567 = vmax.f32 %v435, 0.0
  %v568 = vmax.f32 %v440, 0.0
  %v569 = vmax.f32 %v443, 0.0
  %v570 = vmax.f32 %v448, 0.0
  %v571 = vmax.f32 %v451, 0.0
  %v572 = vmax.f32 %v456, 0.0
  %v573 = vmax.f32 %v459, 0.0
  %v574 = vmax.f32 %v464, 0.0
  %v575 = vmax.f32 %v467, 0.0
  %v576 = vmax.f32 %v472, 0.0
  %v577 = vmax.f32 %v475, 0.0
  %v578 = vmax.f32 %v480, 0.0
  %v579 = vmax.f32 %v483, 0.0
  %v580 = vmax.f32 %v488, 0.0
  %v581 = vmax.f32 %v491, 0.0
  %v582 = vmax.f32 %v496, 0.0
  %v583 = vmax.f32 %v499, 0.0
  %v584 = vmax.f32 %v504, 0.0
  %v585 = vmax.f32 %v507, 0.0
  %v586 = vmax.f32 %v512, 0.0
  %v587 = vmax.f32 %v515, 0.0
  %v588 = vmax.f32 %v520, 0.0
  %v589 = vmax.f32 %v523, 0.0
  %590 = vst [vmem:[%s3] sm:$0xff] %v526
  %591 = vst [vmem:[%s3 + $0x8] sm:$0xff] %v527
  %592 = vst [vmem:[%s3 + $0x10] sm:$0xff] %v528
  %593 = vst [vmem:[%s3 + $0x18] sm:$0xff] %v529
  %594 = vst [vmem:[%s3 + $0x20] sm:$0xff] %v530
  %595 = vst [vmem:[%s3 + $0x28] sm:$0xff] %v531
  %596 = vst [vmem:[%s3 + $0x30] sm:$0xff] %v532
  %597 = vst [vmem:[%s3 + $0x38] sm:$0xff] %v533
  %598 = vst [vmem:[%s3 + $0x40] sm:$0xff] %v534
  %599 = vst [vmem:[%s3 + $0x48] sm:$0xff] %v535
  %600 = vst [vmem:[%s3 + $0x50] sm:$0xff] %v536
  %601 = vst [vmem:[%s3 + $0x58] sm:$0xff] %v537
  %602 = vst [vmem:[%s3 + $0x60] sm:$0xff] %v538
  %603 = vst [vmem:[%s3 + $0x68] sm:$0xff] %v539
  %604 = vst [vmem:[%s3 + $0x70] sm:$0xff] %v540
  %605 = vst [vmem:[%s3 + $0x78] sm:$0xff] %v541
  %606 = vst [vmem:[%s3 + $0x80] sm:$0xff] %v542
  %607 = vst [vmem:[%s3 + $0x88] sm:$0xff] %v543
  %608 = vst [vmem:[%s3 + $0x90] sm:$0xff] %v544
  %609 = vst [vmem:[%s3 + $0x98] sm:$0xff] %v545
  %610 = vst [vmem:[%s3 + $0xa0] sm:$0xff] %v546
  %611 = vst [vmem:[%s3 + $0xa8] sm:$0xff] %v547
  %612 = vst [vmem:[%s3 + $0xb0] sm:$0xff] %v548
  %613 = vst [vmem:[%s3 + $0xb8] sm:$0xff] %v549
  %614 = vst [vmem:[%s3 + $0xc0] sm:$0xff] %v550
  %615 = vst [vmem:[%s3 + $0xc8] sm:$0xff] %v551
  %616 = vst [vmem:[%s3 + $0xd0] sm:$0xff] %v552
  %617 = vst [vmem:[%s3 + $0xd8] sm:$0xff] %v553
  %618 = vst [vmem:[%s3 + $0xe0] sm:$0xff] %v554
  %619 = vst [vmem:[%s3 + $0xe8] sm:$0xff] %v555
  %620 = vst [vmem:[%s3 + $0xf0] sm:$0xff] %v556
  %621 = vst [vmem:[%s3 + $0xf8] sm:$0xff] %v557
  %622 = vst [vmem:[%s3 + $0x100] sm:$0xff] %v558
  %623 = vst [vmem:[%s3 + $0x108] sm:$0xff] %v559
  %624 = vst [vmem:[%s3 + $0x110] sm:$0xff] %v560
  %625 = vst [vmem:[%s3 + $0x118] sm:$0xff] %v561
  %626 = vst [vmem:[%s3 + $0x120] sm:$0xff] %v562
  %627 = vst [vmem:[%s3 + $0x128] sm:$0xff] %v563
  %628 = vst [vmem:[%s3 + $0x130] sm:$0xff] %v564
  %629 = vst [vmem:[%s3 + $0x138] sm:$0xff] %v565
  %630 = vst [vmem:[%s3 + $0x140] sm:$0xff] %v566
  %631 = vst [vmem:[%s3 + $0x148] sm:$0xff] %v567
  %632 = vst [vmem:[%s3 + $0x150] sm:$0xff] %v568
  %633 = vst [vmem:[%s3 + $0x158] sm:$0xff] %v569
  %634 = vst [vmem:[%s3 + $0x160] sm:$0xff] %v570
  %635 = vst [vmem:[%s3 + $0x168] sm:$0xff] %v571
  %636 = vst [vmem:[%s3 + $0x170] sm:$0xff] %v572
  %637 = vst [vmem:[%s3 + $0x178] sm:$0xff] %v573
  %638 = vst [vmem:[%s3 + $0x180] sm:$0xff] %v574
  %639 = vst [vmem:[%s3 + $0x188] sm:$0xff] %v575
  %640 = vst [vmem:[%s3 + $0x190] sm:$0xff] %v576
  %641 = vst [vmem:[%s3 + $0x198] sm:$0xff] %v577
  %642 = vst [vmem:[%s3 + $0x1a0] sm:$0xff] %v578
  %643 = vst [vmem:[%s3 + $0x1a8] sm:$0xff] %v579
  %644 = vst [vmem:[%s3 + $0x1b0] sm:$0xff] %v580
  %645 = vst [vmem:[%s3 + $0x1b8] sm:$0xff] %v581
  %646 = vst [vmem:[%s3 + $0x1c0] sm:$0xff] %v582
  %647 = vst [vmem:[%s3 + $0x1c8] sm:$0xff] %v583
  %648 = vst [vmem:[%s3 + $0x1d0] sm:$0xff] %v584
  %649 = vst [vmem:[%s3 + $0x1d8] sm:$0xff] %v585
  %650 = vst [vmem:[%s3 + $0x1e0] sm:$0xff] %v586
  %651 = vst [vmem:[%s3 + $0x1e8] sm:$0xff] %v587
  %652 = vst [vmem:[%s3 + $0x1f0] sm:$0xff] %v588
  %653 = vst [vmem:[%s3 + $0x1f8] sm:$0xff] %v589
  // Predicated region
  $region14: #{run.10} parent=0 // pred_check
    _
  $region15: #{run.10} parent=0 // pred_check_branch
    %655 = sbr.rel (0) target = $region17
  $region16: #{run.10} parent=0 // pred_region
    _
  $region17: #{run.10} parent=0 // pred_fallthru
    _
  // Predicated region
  $region18: #{run.10} parent=0 // pred_check
    _
  $region19: #{run.10} parent=0 // pred_check_branch
    %657 = sbr.rel (0) target = $region21
  $region20: #{run.10} parent=0 // pred_region
    _
  $region21: #{run.10} parent=0 // pred_fallthru
    _

// kernel: run.12
$region0: #{run.12}
  #allocation0 [shape = 'u32[]', space=smem, size = 0x4, offset = 0x4, fixed_abs, tag = 'smem constant byte address 0x4 - core index']
  #allocation1 [shape = 'u32[144,128]{1,0:T(1,128)}', space=vmem, size = 0x12000, scoped, tag = 'internal scratch']
  %s0 = inlined_call_operand.vmem [shape: f32[128,128], index: 0, kind: input, shape index: {}]
  %s1 = inlined_call_operand.vmem [shape: bf16[128,128], index: 1, kind: input, shape index: {}]
  %s2 = inlined_call_operand.vmem [shape: f32[1,128], index: 2, kind: input, shape index: {}]
  %s3 = inlined_call_operand.vmem [shape: f32[128,128], index: 3, kind: output, shape index: {}]
  %s4 = sld [smem:[#allocation0]]
  $region22: #{run.12} parent=0
    _
  %s6 = ssub.s32 1, %s4
  %s7 = scalar_select 0, %s6, %s4
  // Predicated region
  $region2: #{run.12} parent=0 // pred_check
    _
  $region3: #{run.12} parent=0 // pred_check_branch
    %9 = sbr.rel (0) target = $region5
  $region4: #{run.12} parent=0 // pred_region
    _
  $region5: #{run.12} parent=0 // pred_fallthru
    _
  // Predicated region
  $region6: #{run.12} parent=0 // pred_check
    _
  $region7: #{run.12} parent=0 // pred_check_branch
    %11 = sbr.rel (0) target = $region9
  $region8: #{run.12} parent=0 // pred_region
    _
  $region9: #{run.12} parent=0 // pred_fallthru
    _
  // Predicated region
  $region10: #{run.12} parent=0 // pred_check
    _
  $region11: #{run.12} parent=0 // pred_check_branch
    %13 = sbr.rel (0) target = $region13
  $region12: #{run.12} parent=0 // pred_region
    _
  $region13: #{run.12} parent=0 // pred_fallthru
    _
  %v15 = vld [vmem:[%s0] sm:$0xff]
  %v16 = vld [vmem:[%s0 + $0x8] sm:$0xff]
  %v17 = vld [vmem:[%s0 + $0x10] sm:$0xff]
  %v18 = vld [vmem:[%s0 + $0x18] sm:$0xff]
  %v19 = vld [vmem:[%s0 + $0x20] sm:$0xff]
  %v20 = vld [vmem:[%s0 + $0x28] sm:$0xff]
  %v21 = vld [vmem:[%s0 + $0x30] sm:$0xff]
  %v22 = vld [vmem:[%s0 + $0x38] sm:$0xff]
  %v23 = vld [vmem:[%s0 + $0x40] sm:$0xff]
  %v24 = vld [vmem:[%s0 + $0x48] sm:$0xff]
  %v25 = vld [vmem:[%s0 + $0x50] sm:$0xff]
  %v26 = vld [vmem:[%s0 + $0x58] sm:$0xff]
  %v27 = vld [vmem:[%s0 + $0x60] sm:$0xff]
  %v28 = vld [vmem:[%s0 + $0x68] sm:$0xff]
  %v29 = vld [vmem:[%s0 + $0x70] sm:$0xff]
  %v30 = vld [vmem:[%s0 + $0x78] sm:$0xff]
  %v31 = vpack.c.bf16 %v16, %v15
  %v32 = vpack.c.bf16 %v18, %v17
  %v33 = vpack.c.bf16 %v20, %v19
  %v34 = vpack.c.bf16 %v22, %v21
  %v35 = vpack.c.bf16 %v24, %v23
  %v36 = vpack.c.bf16 %v26, %v25
  %v37 = vpack.c.bf16 %v28, %v27
  %v38 = vpack.c.bf16 %v30, %v29
  %v39 = vld [vmem:[%s1] sm:$0xf]
  %v40 = vld [vmem:[%s1 + $0x4] sm:$0xf]
  %v41 = vld [vmem:[%s1 + $0x8] sm:$0xf]
  %v42 = vld [vmem:[%s1 + $0xc] sm:$0xf]
  %v43 = vld [vmem:[%s1 + $0x10] sm:$0xf]
  %v44 = vld [vmem:[%s1 + $0x14] sm:$0xf]
  %v45 = vld [vmem:[%s1 + $0x18] sm:$0xf]
  %v46 = vld [vmem:[%s1 + $0x1c] sm:$0xf]
  %v47 = vld [vmem:[%s1 + $0x20] sm:$0xf]
  %v48 = vld [vmem:[%s1 + $0x24] sm:$0xf]
  %v49 = vld [vmem:[%s1 + $0x28] sm:$0xf]
  %v50 = vld [vmem:[%s1 + $0x2c] sm:$0xf]
  %v51 = vld [vmem:[%s1 + $0x30] sm:$0xf]
  %v52 = vld [vmem:[%s1 + $0x34] sm:$0xf]
  %v53 = vld [vmem:[%s1 + $0x38] sm:$0xf]
  %v54 = vld [vmem:[%s1 + $0x3c] sm:$0xf]
  %v55 = vld [vmem:[%s2] sm:$0x1]
  %v57 = vlaneseq
  %v58 = vshrl.u32 %v57, 7
  %v59 = vsub.s32 0, %v58
  %v60 = vrot.slane %v55, %v59
  %v78 = vunpack.c.l.b16 %v39
  %v79 = vunpack.c.l.b16 %v40
  %v80 = vunpack.c.l.b16 %v41
  %v81 = vunpack.c.l.b16 %v42
  %v82 = vunpack.c.l.b16 %v43
  %v83 = vunpack.c.l.b16 %v44
  %v84 = vunpack.c.l.b16 %v45
  %v85 = vunpack.c.l.b16 %v46
  %v86 = vunpack.c.l.b16 %v47
  %v87 = vunpack.c.l.b16 %v48
  %v88 = vunpack.c.l.b16 %v49
  %v89 = vunpack.c.l.b16 %v50
  %v90 = vunpack.c.l.b16 %v51
  %v91 = vunpack.c.l.b16 %v52
  %v92 = vunpack.c.l.b16 %v53
  %v93 = vunpack.c.l.b16 %v54
  %v94 = vpack.c.b16 %v79, %v78
  %v95 = vpack.c.b16 %v81, %v80
  %v96 = vpack.c.b16 %v83, %v82
  %v97 = vpack.c.b16 %v85, %v84
  %v98 = vpack.c.b16 %v87, %v86
  %v99 = vpack.c.b16 %v89, %v88
  %v100 = vpack.c.b16 %v91, %v90
  %v101 = vpack.c.b16 %v93, %v92
  %110 = vmatprep.subr.bf16.mxu0 0
  %111 = vmatpush1.bf16.msra.mxu0 %v101
  %112 = vmatprep.subr.bf16.mxu0 0
  %113 = vmatpush1.bf16.msra.mxu0 %v100
  %114 = vmatprep.subr.bf16.mxu0 0
  %115 = vmatpush1.bf16.msra.mxu0 %v99
  %116 = vmatprep.subr.bf16.mxu0 0
  %117 = vmatpush1.bf16.msra.mxu0 %v98
  %118 = vmatprep.subr.bf16.mxu0 0
  %119 = vmatpush1.bf16.msra.mxu0 %v97
  %120 = vmatprep.subr.bf16.mxu0 0
  %121 = vmatpush1.bf16.msra.mxu0 %v96
  %122 = vmatprep.subr.bf16.mxu0 0
  %123 = vmatpush1.bf16.msra.mxu0 %v95
  %124 = vmatprep.subr.bf16.mxu0 0
  %125 = vmatpush1.bf16.msra.mxu0 %v94
  %126 = vmatprep.subr.bf16.mxu0 0
  %127 = vmatpush2.bf16.msra.mxu0 0
  %128 = vmatprep.subr.bf16.mxu0 0
  %129 = vmatpush2.bf16.msra.mxu0 0
  %130 = vmatprep.subr.bf16.mxu0 0
  %131 = vmatpush2.bf16.msra.mxu0 0
  %132 = vmatprep.subr.bf16.mxu0 0
  %133 = vmatpush2.bf16.msra.mxu0 0
  %134 = vmatprep.subr.bf16.mxu0 0
  %135 = vmatpush2.bf16.msra.mxu0 0
  %136 = vmatprep.subr.bf16.mxu0 0
  %137 = vmatpush2.bf16.msra.mxu0 0
  %138 = vmatprep.subr.bf16.mxu0 0
  %139 = vmatpush2.bf16.msra.mxu0 0
  %140 = vmatprep.subr.bf16.mxu0 0
  %141 = vmatpush2.bf16.msra.mxu0 0
  %142 = vmatprep.mubr.bf16.mxu0 0
  %143 = vmatmul.mubr.bf16.gmra.mxu0 %v31
  %v144 = vpop.f32.mrf.mxu0
  %v145 = vadd.f32 %v60, %v144
  %v146 = vpop.f32.mrf.mxu0
  %v147 = vpop.f32.mrf.mxu0
  %v148 = vadd.f32 %v60, %v147
  %v149 = vpop.f32.mrf.mxu0
  %150 = vmatprep.mubr.bf16.mxu0 0
  %151 = vmatmul.mubr.bf16.gmra.mxu0 %v32
  %v152 = vpop.f32.mrf.mxu0
  %v153 = vadd.f32 %v60, %v152
  %v154 = vpop.f32.mrf.mxu0
  %v155 = vpop.f32.mrf.mxu0
  %v156 = vadd.f32 %v60, %v155
  %v157 = vpop.f32.mrf.mxu0
  %158 = vmatprep.mubr.bf16.mxu0 0
  %159 = vmatmul.mubr.bf16.gmra.mxu0 %v33
  %v160 = vpop.f32.mrf.mxu0
  %v161 = vadd.f32 %v60, %v160
  %v162 = vpop.f32.mrf.mxu0
  %v163 = vpop.f32.mrf.mxu0
  %v164 = vadd.f32 %v60, %v163
  %v165 = vpop.f32.mrf.mxu0
  %166 = vmatprep.mubr.bf16.mxu0 0
  %167 = vmatmul.mubr.bf16.gmra.mxu0 %v34
  %v168 = vpop.f32.mrf.mxu0
  %v169 = vadd.f32 %v60, %v168
  %v170 = vpop.f32.mrf.mxu0
  %v171 = vpop.f32.mrf.mxu0
  %v172 = vadd.f32 %v60, %v171
  %v173 = vpop.f32.mrf.mxu0
  %174 = vmatprep.mubr.bf16.mxu0 0
  %175 = vmatmul.mubr.bf16.gmra.mxu0 %v35
  %v176 = vpop.f32.mrf.mxu0
  %v177 = vadd.f32 %v60, %v176
  %v178 = vpop.f32.mrf.mxu0
  %v179 = vpop.f32.mrf.mxu0
  %v180 = vadd.f32 %v60, %v179
  %v181 = vpop.f32.mrf.mxu0
  %182 = vmatprep.mubr.bf16.mxu0 0
  %183 = vmatmul.mubr.bf16.gmra.mxu0 %v36
  %v184 = vpop.f32.mrf.mxu0
  %v185 = vadd.f32 %v60, %v184
  %v186 = vpop.f32.mrf.mxu0
  %v187 = vpop.f32.mrf.mxu0
  %v188 = vadd.f32 %v60, %v187
  %v189 = vpop.f32.mrf.mxu0
  %190 = vmatprep.mubr.bf16.mxu0 0
  %191 = vmatmul.mubr.bf16.gmra.mxu0 %v37
  %v192 = vpop.f32.mrf.mxu0
  %v193 = vadd.f32 %v60, %v192
  %v194 = vpop.f32.mrf.mxu0
  %v195 = vpop.f32.mrf.mxu0
  %v196 = vadd.f32 %v60, %v195
  %v197 = vpop.f32.mrf.mxu0
  %198 = vmatprep.mubr.bf16.mxu0 0
  %199 = vmatmul.mubr.bf16.gmra.mxu0 %v38
  %v200 = vpop.f32.mrf.mxu0
  %v201 = vadd.f32 %v60, %v200
  %v202 = vpop.f32.mrf.mxu0
  %v203 = vpop.f32.mrf.mxu0
  %v204 = vadd.f32 %v60, %v203
  %v205 = vpop.f32.mrf.mxu0
  %206 = vdwg.mxu0
  %v207 = vmax.f32 %v145, 0.0
  %v208 = vmax.f32 %v148, 0.0
  %v209 = vmax.f32 %v153, 0.0
  %v210 = vmax.f32 %v156, 0.0
  %v211 = vmax.f32 %v161, 0.0
  %v212 = vmax.f32 %v164, 0.0
  %v213 = vmax.f32 %v169, 0.0
  %v214 = vmax.f32 %v172, 0.0
  %v215 = vmax.f32 %v177, 0.0
  %v216 = vmax.f32 %v180, 0.0
  %v217 = vmax.f32 %v185, 0.0
  %v218 = vmax.f32 %v188, 0.0
  %v219 = vmax.f32 %v193, 0.0
  %v220 = vmax.f32 %v196, 0.0
  %v221 = vmax.f32 %v201, 0.0
  %v222 = vmax.f32 %v204, 0.0
  %223 = vst [vmem:[%s3] sm:$0xff] %v207
  %224 = vst [vmem:[%s3 + $0x8] sm:$0xff] %v208
  %225 = vst [vmem:[%s3 + $0x10] sm:$0xff] %v209
  %226 = vst [vmem:[%s3 + $0x18] sm:$0xff] %v210
  %227 = vst [vmem:[%s3 + $0x20] sm:$0xff] %v211
  %228 = vst [vmem:[%s3 + $0x28] sm:$0xff] %v212
  %229 = vst [vmem:[%s3 + $0x30] sm:$0xff] %v213
  %230 = vst [vmem:[%s3 + $0x38] sm:$0xff] %v214
  %231 = vst [vmem:[%s3 + $0x40] sm:$0xff] %v215
  %232 = vst [vmem:[%s3 + $0x48] sm:$0xff] %v216
  %233 = vst [vmem:[%s3 + $0x50] sm:$0xff] %v217
  %234 = vst [vmem:[%s3 + $0x58] sm:$0xff] %v218
  %235 = vst [vmem:[%s3 + $0x60] sm:$0xff] %v219
  %236 = vst [vmem:[%s3 + $0x68] sm:$0xff] %v220
  %237 = vst [vmem:[%s3 + $0x70] sm:$0xff] %v221
  %238 = vst [vmem:[%s3 + $0x78] sm:$0xff] %v222
  // Predicated region
  $region14: #{run.12} parent=0 // pred_check
    _
  $region15: #{run.12} parent=0 // pred_check_branch
    %240 = sbr.rel (0) target = $region17
  $region16: #{run.12} parent=0 // pred_region
    _
  $region17: #{run.12} parent=0 // pred_fallthru
    _
  // Predicated region
  $region18: #{run.12} parent=0 // pred_check
    _
  $region19: #{run.12} parent=0 // pred_check_branch
    %242 = sbr.rel (0) target = $region21
  $region20: #{run.12} parent=0 // pred_region
    _
  $region21: #{run.12} parent=0 // pred_fallthru
    _

// kernel: run.11
$region0: #{run.11}
  #allocation0 [shape = 'u32[]', space=smem, size = 0x4, offset = 0x4, fixed_abs, tag = 'smem constant byte address 0x4 - core index']
  #allocation1 [shape = 'u32[144,128]{1,0:T(1,128)}', space=vmem, size = 0x12000, scoped, tag = 'internal scratch']
  %s0 = inlined_call_operand.vmem [shape: f32[2,18,18,128], index: 0, kind: input, shape index: {}]
  %s1 = inlined_call_operand.vmem [shape: f32[3,3,128], index: 1, kind: input, shape index: {}]
  %s2 = inlined_call_operand.vmem [shape: f32[1,128], index: 2, kind: input, shape index: {}]
  %s3 = inlined_call_operand.vmem [shape: f32[2,16,16,128], index: 3, kind: output, shape index: {}]
  %s4 = sld [smem:[#allocation0]]
  $region45: #{run.11} parent=0
    _
  %s6 = ssub.s32 1, %s4
  %s7 = scalar_select 0, %s6, %s4
  loop: start=0, step=1, limit=4
  $region2: #{run.11} parent=0 // loop_pre_header
    _
  $region3: #{run.11} parent=0 // loop_header
    %s9 = sphi 0, %s13
    %p10 = scmp.ge.s32.totalorder %s9, 4
    %s16 = sphi 0, %s28
    %s17 = sphi 0, %s24
    %s18 = sphi 0, %s16
    %s19 = sphi 0, %s17
    %s20 = sphi 0, %s18
    %s21 = sphi 0, %s19
    %s33 = sphi 0, %s35
    %s36 = sphi 0, %s33
    %s37 = sphi 0, %s36
    %s53 = sphi 0, %s37
    %s59 = sphi 0, %s61
    %s62 = sphi 0, %s59
    %s63 = sphi 0, %s62
    %s79 = sphi 0, %s63
    %s85 = sphi 0, %s87
    %s88 = sphi 0, %s85
    %s89 = sphi 0, %s88
    %s105 = sphi 0, %s89
    %s113 = sphi 0, %s115
    %s116 = sphi 0, %s113
    %s117 = sphi 0, %s116
    %s133 = sphi 0, %s117
  $region4: #{run.11} parent=0 // loop_header_branch
    %12 = sbr.rel (%p10) target = $region8
  $region5: #{run.11} parent=0 // loop_body
    %s14 = ssub.s32 %s9, 1
    %s15 = ssub.s32 %s9, 2
    %s22 = sadd.s32 1, %s17
    %p23 = scmp.ge.s32.totalorder %s22, 1
    %s24 = scalar_select %p23, 0, %s22
    %s25 = sadd.s32 1, %s16
    %s26 = scalar_select %p23, %s25, %s16
    %p27 = scmp.ge.s32.totalorder %s26, 2
    %s28 = scalar_select %p27, 0, %s26
    %s29 = ssub.s32 %s16, %s28
    %s30 = ssub.s32 %s17, %s24
    %s31 = sor.u32 %s29, %s30
    %p32 = scmp.eq.s32.totalorder %s31, 0
    %s34 = sadd.s32 %s33, 1
    %s35 = scalar_select %p32, %s33, %s34
    %p38 = pneg %p32
    %p39 = scmp.eq.s32.totalorder %s9, 1
    %p40 = por %p38, %p39
    %p41 = scmp.ne.s32.totalorder %s33, %s36
    %p42 = scmp.eq.s32.totalorder %s9, 0
    %p43 = por %p41, %p42
    %p44 = scmp.ne.s32.totalorder %s33, %s36
    %p45 = scmp.eq.s32.totalorder %s14, 1
    %p46 = por %p44, %p45
    %p47 = scmp.ne.s32.totalorder %s36, %s37
    %p48 = scmp.eq.s32.totalorder %s14, 0
    %p49 = por %p47, %p48
    %p50 = scmp.ne.s32.totalorder %s36, %s37
    %p51 = scmp.eq.s32.totalorder %s15, 1
    %p52 = por %p50, %p51
    %p54 = scmp.ne.s32.totalorder %s37, %s53
    %p55 = scmp.eq.s32.totalorder %s15, 0
    %p56 = por %p54, %p55
    %s57 = ssub.s32 %s17, %s24
    %p58 = scmp.eq.s32.totalorder %s57, 0
    %s60 = sadd.s32 %s59, 1
    %s61 = scalar_select %p58, %s59, %s60
    %p64 = pneg %p58
    %p65 = scmp.eq.s32.totalorder %s9, 1
    %p66 = por %p64, %p65
    %p67 = scmp.ne.s32.totalorder %s59, %s62
    %p68 = scmp.eq.s32.totalorder %s9, 0
    %p69 = por %p67, %p68
    %p70 = scmp.ne.s32.totalorder %s59, %s62
    %p71 = scmp.eq.s32.totalorder %s14, 1
    %p72 = por %p70, %p71
    %p73 = scmp.ne.s32.totalorder %s62, %s63
    %p74 = scmp.eq.s32.totalorder %s14, 0
    %p75 = por %p73, %p74
    %p76 = scmp.ne.s32.totalorder %s62, %s63
    %p77 = scmp.eq.s32.totalorder %s15, 1
    %p78 = por %p76, %p77
    %p80 = scmp.ne.s32.totalorder %s63, %s79
    %p81 = scmp.eq.s32.totalorder %s15, 0
    %p82 = por %p80, %p81
    %s83 = ssub.s32 %s17, %s24
    %p84 = scmp.eq.s32.totalorder %s83, 0
    %s86 = sadd.s32 %s85, 1
    %s87 = scalar_select %p84, %s85, %s86
    %p90 = pneg %p84
    %p91 = scmp.eq.s32.totalorder %s9, 1
    %p92 = por %p90, %p91
    %p93 = scmp.ne.s32.totalorder %s85, %s88
    %p94 = scmp.eq.s32.totalorder %s9, 0
    %p95 = por %p93, %p94
    %p96 = scmp.ne.s32.totalorder %s85, %s88
    %p97 = scmp.eq.s32.totalorder %s14, 1
    %p98 = por %p96, %p97
    %p99 = scmp.ne.s32.totalorder %s88, %s89
    %p100 = scmp.eq.s32.totalorder %s14, 0
    %p101 = por %p99, %p100
    %p102 = scmp.ne.s32.totalorder %s88, %s89
    %p103 = scmp.eq.s32.totalorder %s15, 1
    %p104 = por %p102, %p103
    %p106 = scmp.ne.s32.totalorder %s89, %s105
    %p107 = scmp.eq.s32.totalorder %s15, 0
    %p108 = por %p106, %p107
    %s109 = ssub.s32 %s16, %s28
    %s110 = ssub.s32 %s17, %s24
    %s111 = sor.u32 %s109, %s110
    %p112 = scmp.eq.s32.totalorder %s111, 0
    %s114 = sadd.s32 %s113, 1
    %s115 = scalar_select %p112, %s113, %s114
    %p118 = pneg %p112
    %p119 = scmp.eq.s32.totalorder %s9, 1
    %p120 = por %p118, %p119
    %p121 = scmp.ne.s32.totalorder %s113, %s116
    %p122 = scmp.eq.s32.totalorder %s9, 0
    %p123 = por %p121, %p122
    %p124 = scmp.ne.s32.totalorder %s113, %s116
    %p125 = scmp.eq.s32.totalorder %s14, 1
    %p126 = por %p124, %p125
    %p127 = scmp.ne.s32.totalorder %s116, %s117
    %p128 = scmp.eq.s32.totalorder %s14, 0
    %p129 = por %p127, %p128
    %p130 = scmp.ne.s32.totalorder %s116, %s117
    %p131 = scmp.eq.s32.totalorder %s15, 1
    %p132 = por %p130, %p131
    %p134 = scmp.ne.s32.totalorder %s117, %s133
    %p135 = scmp.eq.s32.totalorder %s15, 0
    %p136 = por %p134, %p135
    %p137 = scmp.le.s32.totalorder 1, %s9
    %p138 = scmp.lt.s32.totalorder %s9, 3
    %p139 = pnand %p137, %p138
    %p140 = pneg %p139
    // Predicated region
    $region9: #{run.11} parent=5 // pred_check
      _
    $region10: #{run.11} parent=5 // pred_check_branch
      %142 = sbr.rel (%p139) target = $region12
    $region11: #{run.11} parent=5 // pred_region
      %s143 = ssub.s32 %s9, 1
      // Predicated region
      $region13: #{run.11} parent=11 // pred_check
        %p144 = pneg %p75
      $region14: #{run.11} parent=11 // pred_check_branch
        %146 = sbr.rel (%p144) target = $region16
      $region15: #{run.11} parent=11 // pred_region
        %p147 = scmp.lt.s32.totalorder %s19, 0
        %s148 = scalar_select %p147, %s19, 0
        %s149 = smul.addr %s148, 4
        %s150 = scalar_lea.vmem %s1, %s149
      $region16: #{run.11} parent=11 // pred_fallthru
        _
      // Predicated region
      $region17: #{run.11} parent=11 // pred_check
        %p151 = pneg %p101
      $region18: #{run.11} parent=11 // pred_check_branch
        %153 = sbr.rel (%p151) target = $region20
      $region19: #{run.11} parent=11 // pred_region
        %p154 = scmp.lt.s32.totalorder %s19, 0
        %s155 = scalar_select %p154, %s19, 0
        %s156 = scalar_lea.vmem %s2, %s155
      $region20: #{run.11} parent=11 // pred_fallthru
        _
    $region12: #{run.11} parent=5 // pred_fallthru
      _
    %p157 = scmp.lt.s32.totalorder %s9, 2
    // Predicated region
    $region21: #{run.11} parent=5 // pred_check
      %p158 = pneg %p157
    $region22: #{run.11} parent=5 // pred_check_branch
      %160 = sbr.rel (%p158) target = $region24
    $region23: #{run.11} parent=5 // pred_region
      // Predicated region
      $region25: #{run.11} parent=23 // pred_check
        %p161 = pneg %p43
      $region26: #{run.11} parent=23 // pred_check_branch
        %163 = sbr.rel (%p161) target = $region28
      $region27: #{run.11} parent=23 // pred_region
        %p164 = scmp.lt.s32.totalorder %s16, 1
        %s165 = scalar_select %p164, %s16, 1
        %p166 = scmp.lt.s32.totalorder %s17, 0
        %s167 = scalar_select %p166, %s17, 0
        %s168 = smul.addr %s165, 54
        %s169 = sadd.s32 %s167, %s168
        %s170 = smul.addr %s169, 8
        %s171 = scalar_lea.vmem %s0, %s170
      $region28: #{run.11} parent=23 // pred_fallthru
        _
    $region24: #{run.11} parent=5 // pred_fallthru
      _
    %p172 = scmp.le.s32.totalorder 1, %s9
    %p173 = scmp.lt.s32.totalorder %s9, 3
    %p174 = pnand %p172, %p173
    %p175 = pneg %p174
    // Predicated region
    $region29: #{run.11} parent=5 // pred_check
      _
    $region30: #{run.11} parent=5 // pred_check_branch
      %177 = sbr.rel (%p174) target = $region32
    $region31: #{run.11} parent=5 // pred_region
      %s178 = ssub.s32 %s9, 1
      %p179 = scmp.lt.s32.totalorder %s18, 1
      %s180 = scalar_select %p179, %s18, 1
      %p181 = scmp.lt.s32.totalorder %s19, 0
      %s182 = scalar_select %p181, %s19, 0
      %s183 = smul.addr %s180, 54
      %s184 = sadd.s32 %s182, %s183
      %s185 = smul.addr %s184, 8
      %s186 = scalar_lea.vmem %s0, %s185
      %p187 = pneg %p49
      %p188 = pneg %p46
      %p189 = scmp.lt.s32.totalorder %s19, 0
      %s190 = scalar_select %p189, %s19, 0
      %s191 = smul.addr %s190, 4
      %s192 = scalar_lea.vmem %s1, %s191
      %p193 = pneg %p75
      %p194 = pneg %p72
      %p195 = scmp.lt.s32.totalorder %s19, 0
      %s196 = scalar_select %p195, %s19, 0
      %s197 = scalar_lea.vmem %s2, %s196
      %p198 = pneg %p101
      %p199 = pneg %p98
      %p200 = pneg %p129
      %p201 = pneg %p126
      %p202 = scmp.lt.s32.totalorder %s18, 1
      %s203 = scalar_select %p202, %s18, 1
      %p204 = scmp.lt.s32.totalorder %s19, 0
      %s205 = scalar_select %p204, %s19, 0
      %s206 = smul.addr %s203, 32
      %s207 = sadd.s32 %s205, %s206
      %s208 = smul.addr %s207, 8
      %s209 = scalar_lea.vmem %s3, %s208
      %p210 = scmp.lt.s32.totalorder %s18, 1
      %s211 = scalar_select %p210, %s18, 1
      %p212 = scmp.lt.s32.totalorder %s19, 0
      %s213 = scalar_select %p212, %s19, 0
      %s214 = smul.addr %s211, 54
      %s215 = sadd.s32 %s213, %s214
      %s216 = smul.addr %s215, 8
      %s217 = scalar_lea.vmem %s0, %s216
      %p218 = scmp.lt.s32.totalorder %s19, 0
      %s219 = scalar_select %p218, %s19, 0
      %s220 = smul.addr %s219, 4
      %s221 = scalar_lea.vmem %s1, %s220
      %p222 = scmp.lt.s32.totalorder %s19, 0
      %s223 = scalar_select %p222, %s19, 0
      %s224 = scalar_lea.vmem %s2, %s223
      %p225 = scmp.lt.s32.totalorder %s18, 1
      %s226 = scalar_select %p225, %s18, 1
      %p227 = scmp.lt.s32.totalorder %s19, 0
      %s228 = scalar_select %p227, %s19, 0
      %s229 = smul.addr %s226, 32
      %s230 = sadd.s32 %s228, %s229
      %s231 = smul.addr %s230, 8
      %s232 = scalar_lea.vmem %s3, %s231
      %v233 = vld [vmem:[%s217] sm:$0xff]
      %v234 = vld [vmem:[%s217 + $0x8] sm:$0xff]
      %v235 = vld [vmem:[%s217 + $0x10] sm:$0x3]
      %v236 = vld [vmem:[%s217 + $0x18] sm:$0xff]
      %v237 = vld [vmem:[%s217 + $0x20] sm:$0xff]
      %v238 = vld [vmem:[%s217 + $0x28] sm:$0x3]
      %v239 = vld [vmem:[%s217 + $0x30] sm:$0xff]
      %v240 = vld [vmem:[%s217 + $0x38] sm:$0xff]
      %v241 = vld [vmem:[%s217 + $0x40] sm:$0x3]
      %v242 = vld [vmem:[%s217 + $0x48] sm:$0xff]
      %v243 = vld [vmem:[%s217 + $0x50] sm:$0xff]
      %v244 = vld [vmem:[%s217 + $0x58] sm:$0x3]
      %v245 = vld [vmem:[%s217 + $0x60] sm:$0xff]
      %v246 = vld [vmem:[%s217 + $0x68] sm:$0xff]
      %v247 = vld [vmem:[%s217 + $0x70] sm:$0x3]
      %v248 = vld [vmem:[%s217 + $0x78] sm:$0xff]
      %v249 = vld [vmem:[%s217 + $0x80] sm:$0xff]
      %v250 = vld [vmem:[%s217 + $0x88] sm:$0x3]
      %v251 = vld [vmem:[%s217 + $0x90] sm:$0xff]
      %v252 = vld [vmem:[%s217 + $0x98] sm:$0xff]
      %v253 = vld [vmem:[%s217 + $0xa0] sm:$0x3]
      %v254 = vld [vmem:[%s217 + $0xa8] sm:$0xff]
      %v255 = vld [vmem:[%s217 + $0xb0] sm:$0xff]
      %v256 = vld [vmem:[%s217 + $0xb8] sm:$0x3]
      %v257 = vld [vmem:[%s217 + $0xc0] sm:$0xff]
      %v258 = vld [vmem:[%s217 + $0xc8] sm:$0xff]
      %v259 = vld [vmem:[%s217 + $0xd0] sm:$0x3]
      %v260 = vld [vmem:[%s217 + $0xd8] sm:$0xff]
      %v261 = vld [vmem:[%s217 + $0xe0] sm:$0xff]
      %v262 = vld [vmem:[%s217 + $0xe8] sm:$0x3]
      %v263 = vld [vmem:[%s217 + $0xf0] sm:$0xff]
      %v264 = vld [vmem:[%s217 + $0xf8] sm:$0xff]
      %v265 = vld [vmem:[%s217 + $0x100] sm:$0x3]
      %v266 = vld [vmem:[%s217 + $0x108] sm:$0xff]
      %v267 = vld [vmem:[%s217 + $0x110] sm:$0xff]
      %v268 = vld [vmem:[%s217 + $0x118] sm:$0x3]
      %v269 = vld [vmem:[%s217 + $0x120] sm:$0xff]
      %v270 = vld [vmem:[%s217 + $0x128] sm:$0xff]
      %v271 = vld [vmem:[%s217 + $0x130] sm:$0x3]
      %v272 = vld [vmem:[%s217 + $0x138] sm:$0xff]
      %v273 = vld [vmem:[%s217 + $0x140] sm:$0xff]
      %v274 = vld [vmem:[%s217 + $0x148] sm:$0x3]
      %v275 = vld [vmem:[%s217 + $0x150] sm:$0xff]
      %v276 = vld [vmem:[%s217 + $0x158] sm:$0xff]
      %v277 = vld [vmem:[%s217 + $0x160] sm:$0x3]
      %v278 = vld [vmem:[%s217 + $0x168] sm:$0xff]
      %v279 = vld [vmem:[%s217 + $0x170] sm:$0xff]
      %v280 = vld [vmem:[%s217 + $0x178] sm:$0x3]
      %v281 = vld [vmem:[%s217 + $0x180] sm:$0xff]
      %v282 = vld [vmem:[%s217 + $0x188] sm:$0xff]
      %v283 = vld [vmem:[%s217 + $0x190] sm:$0x3]
      %v284 = vld [vmem:[%s217 + $0x198] sm:$0xff]
      %v285 = vld [vmem:[%s217 + $0x1a0] sm:$0xff]
      %v286 = vld [vmem:[%s217 + $0x1a8] sm:$0x3]
      %v287 = vld [vmem:[%s221] sm:$0x7]
      %v288 = vld [vmem:[%s221 + $0x4] sm:$0x7]
      %v289 = vld [vmem:[%s221 + $0x8] sm:$0x7]
      %v290 = vlaneseq
      %v291 = vshrl.u32 %v290, 7
      %v292 = vsub.s32 0, %v291
      %v293 = vrot.slane %v287, %v292
      %v294 = vmul.f32 %v233, %v293
      %v295 = vmul.f32 %v234, %v293
      %v296 = vmul.f32 %v236, %v293
      %v297 = vmul.f32 %v237, %v293
      %v298 = vmul.f32 %v239, %v293
      %v299 = vmul.f32 %v240, %v293
      %v300 = vmul.f32 %v242, %v293
      %v301 = vmul.f32 %v243, %v293
      %v302 = vmul.f32 %v245, %v293
      %v303 = vmul.f32 %v246, %v293
      %v304 = vmul.f32 %v248, %v293
      %v305 = vmul.f32 %v249, %v293
      %v306 = vmul.f32 %v251, %v293
      %v307 = vmul.f32 %v252, %v293
      %v308 = vmul.f32 %v254, %v293
      %v309 = vmul.f32 %v255, %v293
      %v310 = vmul.f32 %v257, %v293
      %v311 = vmul.f32 %v258, %v293
      %v312 = vmul.f32 %v260, %v293
      %v313 = vmul.f32 %v261, %v293
      %v314 = vmul.f32 %v263, %v293
      %v315 = vmul.f32 %v264, %v293
      %v316 = vmul.f32 %v266, %v293
      %v317 = vmul.f32 %v267, %v293
      %v318 = vmul.f32 %v269, %v293
      %v319 = vmul.f32 %v270, %v293
      %v320 = vmul.f32 %v272, %v293
      %v321 = vmul.f32 %v273, %v293
      %v322 = vmul.f32 %v275, %v293
      %v323 = vmul.f32 %v276, %v293
      %v324 = vmul.f32 %v278, %v293
      %v325 = vmul.f32 %v279, %v293
      %v326 = vadd.f32 %v294, 0.0
      %v327 = vadd.f32 %v295, 0.0
      %v328 = vadd.f32 %v296, 0.0
      %v329 = vadd.f32 %v297, 0.0
      %v330 = vadd.f32 %v298, 0.0
      %v331 = vadd.f32 %v299, 0.0
      %v332 = vadd.f32 %v300, 0.0
      %v333 = vadd.f32 %v301, 0.0
      %v334 = vadd.f32 %v302, 0.0
      %v335 = vadd.f32 %v303, 0.0
      %v336 = vadd.f32 %v304, 0.0
      %v337 = vadd.f32 %v305, 0.0
      %v338 = vadd.f32 %v306, 0.0
      %v339 = vadd.f32 %v307, 0.0
      %v340 = vadd.f32 %v308, 0.0
      %v341 = vadd.f32 %v309, 0.0
      %v342 = vadd.f32 %v310, 0.0
      %v343 = vadd.f32 %v311, 0.0
      %v344 = vadd.f32 %v312, 0.0
      %v345 = vadd.f32 %v313, 0.0
      %v346 = vadd.f32 %v314, 0.0
      %v347 = vadd.f32 %v315, 0.0
      %v348 = vadd.f32 %v316, 0.0
      %v349 = vadd.f32 %v317, 0.0
      %v350 = vadd.f32 %v318, 0.0
      %v351 = vadd.f32 %v319, 0.0
      %v352 = vadd.f32 %v320, 0.0
      %v353 = vadd.f32 %v321, 0.0
      %v354 = vadd.f32 %v322, 0.0
      %v355 = vadd.f32 %v323, 0.0
      %v356 = vadd.f32 %v324, 0.0
      %v357 = vadd.f32 %v325, 0.0
      %v358 = vlaneseq
      %v359 = vshrl.u32 %v358, 7
      %v360 = vsub.s32 1, %v359
      %v361 = vrot.slane %v287, %v360
      %v362 = vmul.f32 %v233, %v361
      %v363 = vmul.f32 %v234, %v361
      %v364 = vmul.f32 %v235, %v361
      %v365 = vmul.f32 %v236, %v361
      %v366 = vmul.f32 %v237, %v361
      %v367 = vmul.f32 %v238, %v361
      %v368 = vmul.f32 %v239, %v361
      %v369 = vmul.f32 %v240, %v361
      %v370 = vmul.f32 %v241, %v361
      %v371 = vmul.f32 %v242, %v361
      %v372 = vmul.f32 %v243, %v361
      %v373 = vmul.f32 %v244, %v361
      %v374 = vmul.f32 %v245, %v361
      %v375 = vmul.f32 %v246, %v361
      %v376 = vmul.f32 %v247, %v361
      %v377 = vmul.f32 %v248, %v361
      %v378 = vmul.f32 %v249, %v361
      %v379 = vmul.f32 %v250, %v361
      %v380 = vmul.f32 %v251, %v361
      %v381 = vmul.f32 %v252, %v361
      %v382 = vmul.f32 %v253, %v361
      %v383 = vmul.f32 %v254, %v361
      %v384 = vmul.f32 %v255, %v361
      %v385 = vmul.f32 %v256, %v361
      %v386 = vmul.f32 %v257, %v361
      %v387 = vmul.f32 %v258, %v361
      %v388 = vmul.f32 %v259, %v361
      %v389 = vmul.f32 %v260, %v361
      %v390 = vmul.f32 %v261, %v361
      %v391 = vmul.f32 %v262, %v361
      %v392 = vmul.f32 %v263, %v361
      %v393 = vmul.f32 %v264, %v361
      %v394 = vmul.f32 %v265, %v361
      %v395 = vmul.f32 %v266, %v361
      %v396 = vmul.f32 %v267, %v361
      %v397 = vmul.f32 %v268, %v361
      %v398 = vmul.f32 %v269, %v361
      %v399 = vmul.f32 %v270, %v361
      %v400 = vmul.f32 %v271, %v361
      %v401 = vmul.f32 %v272, %v361
      %v402 = vmul.f32 %v273, %v361
      %v403 = vmul.f32 %v274, %v361
      %v404 = vmul.f32 %v275, %v361
      %v405 = vmul.f32 %v276, %v361
      %v406 = vmul.f32 %v277, %v361
      %v407 = vmul.f32 %v278, %v361
      %v408 = vmul.f32 %v279, %v361
      %v409 = vmul.f32 %v280, %v361
      %vm458 = vcmask 1046528
      %v459 = vrot.slane %v362, 1
      %v460 = vrot.slane %v363, 1
      %v461 = vsel %vm458, %v459, %v460
      %v462 = vrot.slane %v364, 1
      %v463 = vsel %vm458, %v460, %v462
      %v464 = vrot.slane %v365, 1
      %v465 = vrot.slane %v366, 1
      %v466 = vsel %vm458, %v464, %v465
      %v467 = vrot.slane %v367, 1
      %v468 = vsel %vm458, %v465, %v467
      %v469 = vrot.slane %v368, 1
      %v470 = vrot.slane %v369, 1
      %v471 = vsel %vm458, %v469, %v470
      %v472 = vrot.slane %v370, 1
      %v473 = vsel %vm458, %v470, %v472
      %v474 = vrot.slane %v371, 1
      %v475 = vrot.slane %v372, 1
      %v476 = vsel %vm458, %v474, %v475
      %v477 = vrot.slane %v373, 1
      %v478 = vsel %vm458, %v475, %v477
      %v479 = vrot.slane %v374, 1
      %v480 = vrot.slane %v375, 1
      %v481 = vsel %vm458, %v479, %v480
      %v482 = vrot.slane %v376, 1
      %v483 = vsel %vm458, %v480, %v482
      %v484 = vrot.slane %v377, 1
      %v485 = vrot.slane %v378, 1
      %v486 = vsel %vm458, %v484, %v485
      %v487 = vrot.slane %v379, 1
      %v488 = vsel %vm458, %v485, %v487
      %v489 = vrot.slane %v380, 1
      %v490 = vrot.slane %v381, 1
      %v491 = vsel %vm458, %v489, %v490
      %v492 = vrot.slane %v382, 1
      %v493 = vsel %vm458, %v490, %v492
      %v494 = vrot.slane %v383, 1
      %v495 = vrot.slane %v384, 1
      %v496 = vsel %vm458, %v494, %v495
      %v497 = vrot.slane %v385, 1
      %v498 = vsel %vm458, %v495, %v497
      %v499 = vrot.slane %v386, 1
      %v500 = vrot.slane %v387, 1
      %v501 = vsel %vm458, %v499, %v500
      %v502 = vrot.slane %v388, 1
      %v503 = vsel %vm458, %v500, %v502
      %v504 = vrot.slane %v389, 1
      %v505 = vrot.slane %v390, 1
      %v506 = vsel %vm458, %v504, %v505
      %v507 = vrot.slane %v391, 1
      %v508 = vsel %vm458, %v505, %v507
      %v509 = vrot.slane %v392, 1
      %v510 = vrot.slane %v393, 1
      %v511 = vsel %vm458, %v509, %v510
      %v512 = vrot.slane %v394, 1
      %v513 = vsel %vm458, %v510, %v512
      %v514 = vrot.slane %v395, 1
      %v515 = vrot.slane %v396, 1
      %v516 = vsel %vm458, %v514, %v515
      %v517 = vrot.slane %v397, 1
      %v518 = vsel %vm458, %v515, %v517
      %v519 = vrot.slane %v398, 1
      %v520 = vrot.slane %v399, 1
      %v521 = vsel %vm458, %v519, %v520
      %v522 = vrot.slane %v400, 1
      %v523 = vsel %vm458, %v520, %v522
      %v524 = vrot.slane %v401, 1
      %v525 = vrot.slane %v402, 1
      %v526 = vsel %vm458, %v524, %v525
      %v527 = vrot.slane %v403, 1
      %v528 = vsel %vm458, %v525, %v527
      %v529 = vrot.slane %v404, 1
      %v530 = vrot.slane %v405, 1
      %v531 = vsel %vm458, %v529, %v530
      %v532 = vrot.slane %v406, 1
      %v533 = vsel %vm458, %v530, %v532
      %v534 = vrot.slane %v407, 1
      %v535 = vrot.slane %v408, 1
      %v536 = vsel %vm458, %v534, %v535
      %v537 = vrot.slane %v409, 1
      %v538 = vsel %vm458, %v535, %v537
      %v571 = vadd.f32 %v326, %v461
      %v572 = vadd.f32 %v327, %v463
      %v573 = vadd.f32 %v328, %v466
      %v574 = vadd.f32 %v329, %v468
      %v575 = vadd.f32 %v330, %v471
      %v576 = vadd.f32 %v331, %v473
      %v577 = vadd.f32 %v332, %v476
      %v578 = vadd.f32 %v333, %v478
      %v579 = vadd.f32 %v334, %v481
      %v580 = vadd.f32 %v335, %v483
      %v581 = vadd.f32 %v336, %v486
      %v582 = vadd.f32 %v337, %v488
      %v583 = vadd.f32 %v338, %v491
      %v584 = vadd.f32 %v339, %v493
      %v585 = vadd.f32 %v340, %v496
      %v586 = vadd.f32 %v341, %v498
      %v587 = vadd.f32 %v342, %v501
      %v588 = vadd.f32 %v343, %v503
      %v589 = vadd.f32 %v344, %v506
      %v590 = vadd.f32 %v345, %v508
      %v591 = vadd.f32 %v346, %v511
      %v592 = vadd.f32 %v347, %v513
      %v593 = vadd.f32 %v348, %v516
      %v594 = vadd.f32 %v349, %v518
      %v595 = vadd.f32 %v350, %v521
      %v596 = vadd.f32 %v351, %v523
      %v597 = vadd.f32 %v352, %v526
      %v598 = vadd.f32 %v353, %v528
      %v599 = vadd.f32 %v354, %v531
      %v600 = vadd.f32 %v355, %v533
      %v601 = vadd.f32 %v356, %v536
      %v602 = vadd.f32 %v357, %v538
      %v603 = vlaneseq
      %v604 = vshrl.u32 %v603, 7
      %v605 = vsub.s32 2, %v604
      %v606 = vrot.slane %v287, %v605
      %v607 = vmul.f32 %v233, %v606
      %v608 = vmul.f32 %v234, %v606
      %v609 = vmul.f32 %v235, %v606
      %v610 = vmul.f32 %v236, %v606
      %v611 = vmul.f32 %v237, %v606
      %v612 = vmul.f32 %v238, %v606
      %v613 = vmul.f32 %v239, %v606
      %v614 = vmul.f32 %v240, %v606
      %v615 = vmul.f32 %v241, %v606
      %v616 = vmul.f32 %v242, %v606
      %v617 = vmul.f32 %v243, %v606
      %v618 = vmul.f32 %v244, %v606
      %v619 = vmul.f32 %v245, %v606
      %v620 = vmul.f32 %v246, %v606
      %v621 = vmul.f32 %v247, %v606
      %v622 = vmul.f32 %v248, %v606
      %v623 = vmul.f32 %v249, %v606
      %v624 = vmul.f32 %v250, %v606
      %v625 = vmul.f32 %v251, %v606
      %v626 = vmul.f32 %v252, %v606
      %v627 = vmul.f32 %v253, %v606
      %v628 = vmul.f32 %v254, %v606
      %v629 = vmul.f32 %v255, %v606
      %v630 = vmul.f32 %v256, %v606
      %v631 = vmul.f32 %v257, %v606
      %v632 = vmul.f32 %v258, %v606
      %v633 = vmul.f32 %v259, %v606
      %v634 = vmul.f32 %v260, %v606
      %v635 = vmul.f32 %v261, %v606
      %v636 = vmul.f32 %v262, %v606
      %v637 = vmul.f32 %v263, %v606
      %v638 = vmul.f32 %v264, %v606
      %v639 = vmul.f32 %v265, %v606
      %v640 = vmul.f32 %v266, %v606
      %v641 = vmul.f32 %v267, %v606
      %v642 = vmul.f32 %v268, %v606
      %v643 = vmul.f32 %v269, %v606
      %v644 = vmul.f32 %v270, %v606
      %v645 = vmul.f32 %v271, %v606
      %v646 = vmul.f32 %v272, %v606
      %v647 = vmul.f32 %v273, %v606
      %v648 = vmul.f32 %v274, %v606
      %v649 = vmul.f32 %v275, %v606
      %v650 = vmul.f32 %v276, %v606
      %v651 = vmul.f32 %v277, %v606
      %v652 = vmul.f32 %v278, %v606
      %v653 = vmul.f32 %v279, %v606
      %v654 = vmul.f32 %v280, %v606
      %vm703 = vcmask 1045504
      %v704 = vrot.slane %v607, 2
      %v705 = vrot.slane %v608, 2
      %v706 = vsel %vm703, %v704, %v705
      %v707 = vrot.slane %v609, 2
      %v708 = vsel %vm703, %v705, %v707
      %v709 = vrot.slane %v610, 2
      %v710 = vrot.slane %v611, 2
      %v711 = vsel %vm703, %v709, %v710
      %v712 = vrot.slane %v612, 2
      %v713 = vsel %vm703, %v710, %v712
      %v714 = vrot.slane %v613, 2
      %v715 = vrot.slane %v614, 2
      %v716 = vsel %vm703, %v714, %v715
      %v717 = vrot.slane %v615, 2
      %v718 = vsel %vm703, %v715, %v717
      %v719 = vrot.slane %v616, 2
      %v720 = vrot.slane %v617, 2
      %v721 = vsel %vm703, %v719, %v720
      %v722 = vrot.slane %v618, 2
      %v723 = vsel %vm703, %v720, %v722
      %v724 = vrot.slane %v619, 2
      %v725 = vrot.slane %v620, 2
      %v726 = vsel %vm703, %v724, %v725
      %v727 = vrot.slane %v621, 2
      %v728 = vsel %vm703, %v725, %v727
      %v729 = vrot.slane %v622, 2
      %v730 = vrot.slane %v623, 2
      %v731 = vsel %vm703, %v729, %v730
      %v732 = vrot.slane %v624, 2
      %v733 = vsel %vm703, %v730, %v732
      %v734 = vrot.slane %v625, 2
      %v735 = vrot.slane %v626, 2
      %v736 = vsel %vm703, %v734, %v735
      %v737 = vrot.slane %v627, 2
      %v738 = vsel %vm703, %v735, %v737
      %v739 = vrot.slane %v628, 2
      %v740 = vrot.slane %v629, 2
      %v741 = vsel %vm703, %v739, %v740
      %v742 = vrot.slane %v630, 2
      %v743 = vsel %vm703, %v740, %v742
      %v744 = vrot.slane %v631, 2
      %v745 = vrot.slane %v632, 2
      %v746 = vsel %vm703, %v744, %v745
      %v747 = vrot.slane %v633, 2
      %v748 = vsel %vm703, %v745, %v747
      %v749 = vrot.slane %v634, 2
      %v750 = vrot.slane %v635, 2
      %v751 = vsel %vm703, %v749, %v750
      %v752 = vrot.slane %v636, 2
      %v753 = vsel %vm703, %v750, %v752
      %v754 = vrot.slane %v637, 2
      %v755 = vrot.slane %v638, 2
      %v756 = vsel %vm703, %v754, %v755
      %v757 = vrot.slane %v639, 2
      %v758 = vsel %vm703, %v755, %v757
      %v759 = vrot.slane %v640, 2
      %v760 = vrot.slane %v641, 2
      %v761 = vsel %vm703, %v759, %v760
      %v762 = vrot.slane %v642, 2
      %v763 = vsel %vm703, %v760, %v762
      %v764 = vrot.slane %v643, 2
      %v765 = vrot.slane %v644, 2
      %v766 = vsel %vm703, %v764, %v765
      %v767 = vrot.slane %v645, 2
      %v768 = vsel %vm703, %v765, %v767
      %v769 = vrot.slane %v646, 2
      %v770 = vrot.slane %v647, 2
      %v771 = vsel %vm703, %v769, %v770
      %v772 = vrot.slane %v648, 2
      %v773 = vsel %vm703, %v770, %v772
      %v774 = vrot.slane %v649, 2
      %v775 = vrot.slane %v650, 2
      %v776 = vsel %vm703, %v774, %v775
      %v777 = vrot.slane %v651, 2
      %v778 = vsel %vm703, %v775, %v777
      %v779 = vrot.slane %v652, 2
      %v780 = vrot.slane %v653, 2
      %v781 = vsel %vm703, %v779, %v780
      %v782 = vrot.slane %v654, 2
      %v783 = vsel %vm703, %v780, %v782
      %v816 = vadd.f32 %v571, %v706
      %v817 = vadd.f32 %v572, %v708
      %v818 = vadd.f32 %v573, %v711
      %v819 = vadd.f32 %v574, %v713
      %v820 = vadd.f32 %v575, %v716
      %v821 = vadd.f32 %v576, %v718
      %v822 = vadd.f32 %v577, %v721
      %v823 = vadd.f32 %v578, %v723
      %v824 = vadd.f32 %v579, %v726
      %v825 = vadd.f32 %v580, %v728
      %v826 = vadd.f32 %v581, %v731
      %v827 = vadd.f32 %v582, %v733
      %v828 = vadd.f32 %v583, %v736
      %v829 = vadd.f32 %v584, %v738
      %v830 = vadd.f32 %v585, %v741
      %v831 = vadd.f32 %v586, %v743
      %v832 = vadd.f32 %v587, %v746
      %v833 = vadd.f32 %v588, %v748
      %v834 = vadd.f32 %v589, %v751
      %v835 = vadd.f32 %v590, %v753
      %v836 = vadd.f32 %v591, %v756
      %v837 = vadd.f32 %v592, %v758
      %v838 = vadd.f32 %v593, %v761
      %v839 = vadd.f32 %v594, %v763
      %v840 = vadd.f32 %v595, %v766
      %v841 = vadd.f32 %v596, %v768
      %v842 = vadd.f32 %v597, %v771
      %v843 = vadd.f32 %v598, %v773
      %v844 = vadd.f32 %v599, %v776
      %v845 = vadd.f32 %v600, %v778
      %v846 = vadd.f32 %v601, %v781
      %v847 = vadd.f32 %v602, %v783
      %v848 = vlaneseq
      %v849 = vshrl.u32 %v848, 7
      %v850 = vsub.s32 0, %v849
      %v851 = vrot.slane %v288, %v850
      %v852 = vmul.f32 %v236, %v851
      %v853 = vmul.f32 %v237, %v851
      %v854 = vmul.f32 %v239, %v851
      %v855 = vmul.f32 %v240, %v851
      %v856 = vmul.f32 %v242, %v851
      %v857 = vmul.f32 %v243, %v851
      %v858 = vmul.f32 %v245, %v851
      %v859 = vmul.f32 %v246, %v851
      %v860 = vmul.f32 %v248, %v851
      %v861 = vmul.f32 %v249, %v851
      %v862 = vmul.f32 %v251, %v851
      %v863 = vmul.f32 %v252, %v851
      %v864 = vmul.f32 %v254, %v851
      %v865 = vmul.f32 %v255, %v851
      %v866 = vmul.f32 %v257, %v851
      %v867 = vmul.f32 %v258, %v851
      %v868 = vmul.f32 %v260, %v851
      %v869 = vmul.f32 %v261, %v851
      %v870 = vmul.f32 %v263, %v851
      %v871 = vmul.f32 %v264, %v851
      %v872 = vmul.f32 %v266, %v851
      %v873 = vmul.f32 %v267, %v851
      %v874 = vmul.f32 %v269, %v851
      %v875 = vmul.f32 %v270, %v851
      %v876 = vmul.f32 %v272, %v851
      %v877 = vmul.f32 %v273, %v851
      %v878 = vmul.f32 %v275, %v851
      %v879 = vmul.f32 %v276, %v851
      %v880 = vmul.f32 %v278, %v851
      %v881 = vmul.f32 %v279, %v851
      %v882 = vmul.f32 %v281, %v851
      %v883 = vmul.f32 %v282, %v851
      %v884 = vadd.f32 %v816, %v852
      %v885 = vadd.f32 %v817, %v853
      %v886 = vadd.f32 %v818, %v854
      %v887 = vadd.f32 %v819, %v855
      %v888 = vadd.f32 %v820, %v856
      %v889 = vadd.f32 %v821, %v857
      %v890 = vadd.f32 %v822, %v858
      %v891 = vadd.f32 %v823, %v859
      %v892 = vadd.f32 %v824, %v860
      %v893 = vadd.f32 %v825, %v861
      %v894 = vadd.f32 %v826, %v862
      %v895 = vadd.f32 %v827, %v863
      %v896 = vadd.f32 %v828, %v864
      %v897 = vadd.f32 %v829, %v865
      %v898 = vadd.f32 %v830, %v866
      %v899 = vadd.f32 %v831, %v867
      %v900 = vadd.f32 %v832, %v868
      %v901 = vadd.f32 %v833, %v869
      %v902 = vadd.f32 %v834, %v870
      %v903 = vadd.f32 %v835, %v871
      %v904 = vadd.f32 %v836, %v872
      %v905 = vadd.f32 %v837, %v873
      %v906 = vadd.f32 %v838, %v874
      %v907 = vadd.f32 %v839, %v875
      %v908 = vadd.f32 %v840, %v876
      %v909 = vadd.f32 %v841, %v877
      %v910 = vadd.f32 %v842, %v878
      %v911 = vadd.f32 %v843, %v879
      %v912 = vadd.f32 %v844, %v880
      %v913 = vadd.f32 %v845, %v881
      %v914 = vadd.f32 %v846, %v882
      %v915 = vadd.f32 %v847, %v883
      %v916 = vlaneseq
      %v917 = vshrl.u32 %v916, 7
      %v918 = vsub.s32 1, %v917
      %v919 = vrot.slane %v288, %v918
      %v920 = vmul.f32 %v236, %v919
      %v921 = vmul.f32 %v237, %v919
      %v922 = vmul.f32 %v238, %v919
      %v923 = vmul.f32 %v239, %v919
      %v924 = vmul.f32 %v240, %v919
      %v925 = vmul.f32 %v241, %v919
      %v926 = vmul.f32 %v242, %v919
      %v927 = vmul.f32 %v243, %v919
      %v928 = vmul.f32 %v244, %v919
      %v929 = vmul.f32 %v245, %v919
      %v930 = vmul.f32 %v246, %v919
      %v931 = vmul.f32 %v247, %v919
      %v932 = vmul.f32 %v248, %v919
      %v933 = vmul.f32 %v249, %v919
      %v934 = vmul.f32 %v250, %v919
      %v935 = vmul.f32 %v251, %v919
      %v936 = vmul.f32 %v252, %v919
      %v937 = vmul.f32 %v253, %v919
      %v938 = vmul.f32 %v254, %v919
      %v939 = vmul.f32 %v255, %v919
      %v940 = vmul.f32 %v256, %v919
      %v941 = vmul.f32 %v257, %v919
      %v942 = vmul.f32 %v258, %v919
      %v943 = vmul.f32 %v259, %v919
      %v944 = vmul.f32 %v260, %v919
      %v945 = vmul.f32 %v261, %v919
      %v946 = vmul.f32 %v262, %v919
      %v947 = vmul.f32 %v263, %v919
      %v948 = vmul.f32 %v264, %v919
      %v949 = vmul.f32 %v265, %v919
      %v950 = vmul.f32 %v266, %v919
      %v951 = vmul.f32 %v267, %v919
      %v952 = vmul.f32 %v268, %v919
      %v953 = vmul.f32 %v269, %v919
      %v954 = vmul.f32 %v270, %v919
      %v955 = vmul.f32 %v271, %v919
      %v956 = vmul.f32 %v272, %v919
      %v957 = vmul.f32 %v273, %v919
      %v958 = vmul.f32 %v274, %v919
      %v959 = vmul.f32 %v275, %v919
      %v960 = vmul.f32 %v276, %v919
      %v961 = vmul.f32 %v277, %v919
      %v962 = vmul.f32 %v278, %v919
      %v963 = vmul.f32 %v279, %v919
      %v964 = vmul.f32 %v280, %v919
      %v965 = vmul.f32 %v281, %v919
      %v966 = vmul.f32 %v282, %v919
      %v967 = vmul.f32 %v283, %v919
      %v1016 = vrot.slane %v920, 1
      %v1017 = vrot.slane %v921, 1
      %v1018 = vsel %vm458, %v1016, %v1017
      %v1019 = vrot.slane %v922, 1
      %v1020 = vsel %vm458, %v1017, %v1019
      %v1021 = vrot.slane %v923, 1
      %v1022 = vrot.slane %v924, 1
      %v1023 = vsel %vm458, %v1021, %v1022
      %v1024 = vrot.slane %v925, 1
      %v1025 = vsel %vm458, %v1022, %v1024
      %v1026 = vrot.slane %v926, 1
      %v1027 = vrot.slane %v927, 1
      %v1028 = vsel %vm458, %v1026, %v1027
      %v1029 = vrot.slane %v928, 1
      %v1030 = vsel %vm458, %v1027, %v1029
      %v1031 = vrot.slane %v929, 1
      %v1032 = vrot.slane %v930, 1
      %v1033 = vsel %vm458, %v1031, %v1032
      %v1034 = vrot.slane %v931, 1
      %v1035 = vsel %vm458, %v1032, %v1034
      %v1036 = vrot.slane %v932, 1
      %v1037 = vrot.slane %v933, 1
      %v1038 = vsel %vm458, %v1036, %v1037
      %v1039 = vrot.slane %v934, 1
      %v1040 = vsel %vm458, %v1037, %v1039
      %v1041 = vrot.slane %v935, 1
      %v1042 = vrot.slane %v936, 1
      %v1043 = vsel %vm458, %v1041, %v1042
      %v1044 = vrot.slane %v937, 1
      %v1045 = vsel %vm458, %v1042, %v1044
      %v1046 = vrot.slane %v938, 1
      %v1047 = vrot.slane %v939, 1
      %v1048 = vsel %vm458, %v1046, %v1047
      %v1049 = vrot.slane %v940, 1
      %v1050 = vsel %vm458, %v1047, %v1049
      %v1051 = vrot.slane %v941, 1
      %v1052 = vrot.slane %v942, 1
      %v1053 = vsel %vm458, %v1051, %v1052
      %v1054 = vrot.slane %v943, 1
      %v1055 = vsel %vm458, %v1052, %v1054
      %v1056 = vrot.slane %v944, 1
      %v1057 = vrot.slane %v945, 1
      %v1058 = vsel %vm458, %v1056, %v1057
      %v1059 = vrot.slane %v946, 1
      %v1060 = vsel %vm458, %v1057, %v1059
      %v1061 = vrot.slane %v947, 1
      %v1062 = vrot.slane %v948, 1
      %v1063 = vsel %vm458, %v1061, %v1062
      %v1064 = vrot.slane %v949, 1
      %v1065 = vsel %vm458, %v1062, %v1064
      %v1066 = vrot.slane %v950, 1
      %v1067 = vrot.slane %v951, 1
      %v1068 = vsel %vm458, %v1066, %v1067
      %v1069 = vrot.slane %v952, 1
      %v1070 = vsel %vm458, %v1067, %v1069
      %v1071 = vrot.slane %v953, 1
      %v1072 = vrot.slane %v954, 1
      %v1073 = vsel %vm458, %v1071, %v1072
      %v1074 = vrot.slane %v955, 1
      %v1075 = vsel %vm458, %v1072, %v1074
      %v1076 = vrot.slane %v956, 1
      %v1077 = vrot.slane %v957, 1
      %v1078 = vsel %vm458, %v1076, %v1077
      %v1079 = vrot.slane %v958, 1
      %v1080 = vsel %vm458, %v1077, %v1079
      %v1081 = vrot.slane %v959, 1
      %v1082 = vrot.slane %v960, 1
      %v1083 = vsel %vm458, %v1081, %v1082
      %v1084 = vrot.slane %v961, 1
      %v1085 = vsel %vm458, %v1082, %v1084
      %v1086 = vrot.slane %v962, 1
      %v1087 = vrot.slane %v963, 1
      %v1088 = vsel %vm458, %v1086, %v1087
      %v1089 = vrot.slane %v964, 1
      %v1090 = vsel %vm458, %v1087, %v1089
      %v1091 = vrot.slane %v965, 1
      %v1092 = vrot.slane %v966, 1
      %v1093 = vsel %vm458, %v1091, %v1092
      %v1094 = vrot.slane %v967, 1
      %v1095 = vsel %vm458, %v1092, %v1094
      %v1128 = vadd.f32 %v884, %v1018
      %v1129 = vadd.f32 %v885, %v1020
      %v1130 = vadd.f32 %v886, %v1023
      %v1131 = vadd.f32 %v887, %v1025
      %v1132 = vadd.f32 %v888, %v1028
      %v1133 = vadd.f32 %v889, %v1030
      %v1134 = vadd.f32 %v890, %v1033
      %v1135 = vadd.f32 %v891, %v1035
      %v1136 = vadd.f32 %v892, %v1038
      %v1137 = vadd.f32 %v893, %v1040
      %v1138 = vadd.f32 %v894, %v1043
      %v1139 = vadd.f32 %v895, %v1045
      %v1140 = vadd.f32 %v896, %v1048
      %v1141 = vadd.f32 %v897, %v1050
      %v1142 = vadd.f32 %v898, %v1053
      %v1143 = vadd.f32 %v899, %v1055
      %v1144 = vadd.f32 %v900, %v1058
      %v1145 = vadd.f32 %v901, %v1060
      %v1146 = vadd.f32 %v902, %v1063
      %v1147 = vadd.f32 %v903, %v1065
      %v1148 = vadd.f32 %v904, %v1068
      %v1149 = vadd.f32 %v905, %v1070
      %v1150 = vadd.f32 %v906, %v1073
      %v1151 = vadd.f32 %v907, %v1075
      %v1152 = vadd.f32 %v908, %v1078
      %v1153 = vadd.f32 %v909, %v1080
      %v1154 = vadd.f32 %v910, %v1083
      %v1155 = vadd.f32 %v911, %v1085
      %v1156 = vadd.f32 %v912, %v1088
      %v1157 = vadd.f32 %v913, %v1090
      %v1158 = vadd.f32 %v914, %v1093
      %v1159 = vadd.f32 %v915, %v1095
      %v1160 = vlaneseq
      %v1161 = vshrl.u32 %v1160, 7
      %v1162 = vsub.s32 2, %v1161
      %v1163 = vrot.slane %v288, %v1162
      %v1164 = vmul.f32 %v236, %v1163
      %v1165 = vmul.f32 %v237, %v1163
      %v1166 = vmul.f32 %v238, %v1163
      %v1167 = vmul.f32 %v239, %v1163
      %v1168 = vmul.f32 %v240, %v1163
      %v1169 = vmul.f32 %v241, %v1163
      %v1170 = vmul.f32 %v242, %v1163
      %v1171 = vmul.f32 %v243, %v1163
      %v1172 = vmul.f32 %v244, %v1163
      %v1173 = vmul.f32 %v245, %v1163
      %v1174 = vmul.f32 %v246, %v1163
      %v1175 = vmul.f32 %v247, %v1163
      %v1176 = vmul.f32 %v248, %v1163
      %v1177 = vmul.f32 %v249, %v1163
      %v1178 = vmul.f32 %v250, %v1163
      %v1179 = vmul.f32 %v251, %v1163
      %v1180 = vmul.f32 %v252, %v1163
      %v1181 = vmul.f32 %v253, %v1163
      %v1182 = vmul.f32 %v254, %v1163
      %v1183 = vmul.f32 %v255, %v1163
      %v1184 = vmul.f32 %v256, %v1163
      %v1185 = vmul.f32 %v257, %v1163
      %v1186 = vmul.f32 %v258, %v1163
      %v1187 = vmul.f32 %v259, %v1163
      %v1188 = vmul.f32 %v260, %v1163
      %v1189 = vmul.f32 %v261, %v1163
      %v1190 = vmul.f32 %v262, %v1163
      %v1191 = vmul.f32 %v263, %v1163
      %v1192 = vmul.f32 %v264, %v1163
      %v1193 = vmul.f32 %v265, %v1163
      %v1194 = vmul.f32 %v266, %v1163
      %v1195 = vmul.f32 %v267, %v1163
      %v1196 = vmul.f32 %v268, %v1163
      %v1197 = vmul.f32 %v269, %v1163
      %v1198 = vmul.f32 %v270, %v1163
      %v1199 = vmul.f32 %v271, %v1163
      %v1200 = vmul.f32 %v272, %v1163
      %v1201 = vmul.f32 %v273, %v1163
      %v1202 = vmul.f32 %v274, %v1163
      %v1203 = vmul.f32 %v275, %v1163
      %v1204 = vmul.f32 %v276, %v1163
      %v1205 = vmul.f32 %v277, %v1163
      %v1206 = vmul.f32 %v278, %v1163
      %v1207 = vmul.f32 %v279, %v1163
      %v1208 = vmul.f32 %v280, %v1163
      %v1209 = vmul.f32 %v281, %v1163
      %v1210 = vmul.f32 %v282, %v1163
      %v1211 = vmul.f32 %v283, %v1163
      %v1260 = vrot.slane %v1164, 2
      %v1261 = vrot.slane %v1165, 2
      %v1262 = vsel %vm703, %v1260, %v1261
      %v1263 = vrot.slane %v1166, 2
      %v1264 = vsel %vm703, %v1261, %v1263
      %v1265 = vrot.slane %v1167, 2
      %v1266 = vrot.slane %v1168, 2
      %v1267 = vsel %vm703, %v1265, %v1266
      %v1268 = vrot.slane %v1169, 2
      %v1269 = vsel %vm703, %v1266, %v1268
      %v1270 = vrot.slane %v1170, 2
      %v1271 = vrot.slane %v1171, 2
      %v1272 = vsel %vm703, %v1270, %v1271
      %v1273 = vrot.slane %v1172, 2
      %v1274 = vsel %vm703, %v1271, %v1273
      %v1275 = vrot.slane %v1173, 2
      %v1276 = vrot.slane %v1174, 2
      %v1277 = vsel %vm703, %v1275, %v1276
      %v1278 = vrot.slane %v1175, 2
      %v1279 = vsel %vm703, %v1276, %v1278
      %v1280 = vrot.slane %v1176, 2
      %v1281 = vrot.slane %v1177, 2
      %v1282 = vsel %vm703, %v1280, %v1281
      %v1283 = vrot.slane %v1178, 2
      %v1284 = vsel %vm703, %v1281, %v1283
      %v1285 = vrot.slane %v1179, 2
      %v1286 = vrot.slane %v1180, 2
      %v1287 = vsel %vm703, %v1285, %v1286
      %v1288 = vrot.slane %v1181, 2
      %v1289 = vsel %vm703, %v1286, %v1288
      %v1290 = vrot.slane %v1182, 2
      %v1291 = vrot.slane %v1183, 2
      %v1292 = vsel %vm703, %v1290, %v1291
      %v1293 = vrot.slane %v1184, 2
      %v1294 = vsel %vm703, %v1291, %v1293
      %v1295 = vrot.slane %v1185, 2
      %v1296 = vrot.slane %v1186, 2
      %v1297 = vsel %vm703, %v1295, %v1296
      %v1298 = vrot.slane %v1187, 2
      %v1299 = vsel %vm703, %v1296, %v1298
      %v1300 = vrot.slane %v1188, 2
      %v1301 = vrot.slane %v1189, 2
      %v1302 = vsel %vm703, %v1300, %v1301
      %v1303 = vrot.slane %v1190, 2
      %v1304 = vsel %vm703, %v1301, %v1303
      %v1305 = vrot.slane %v1191, 2
      %v1306 = vrot.slane %v1192, 2
      %v1307 = vsel %vm703, %v1305, %v1306
      %v1308 = vrot.slane %v1193, 2
      %v1309 = vsel %vm703, %v1306, %v1308
      %v1310 = vrot.slane %v1194, 2
      %v1311 = vrot.slane %v1195, 2
      %v1312 = vsel %vm703, %v1310, %v1311
      %v1313 = vrot.slane %v1196, 2
      %v1314 = vsel %vm703, %v1311, %v1313
      %v1315 = vrot.slane %v1197, 2
      %v1316 = vrot.slane %v1198, 2
      %v1317 = vsel %vm703, %v1315, %v1316
      %v1318 = vrot.slane %v1199, 2
      %v1319 = vsel %vm703, %v1316, %v1318
      %v1320 = vrot.slane %v1200, 2
      %v1321 = vrot.slane %v1201, 2
      %v1322 = vsel %vm703, %v1320, %v1321
      %v1323 = vrot.slane %v1202, 2
      %v1324 = vsel %vm703, %v1321, %v1323
      %v1325 = vrot.slane %v1203, 2
      %v1326 = vrot.slane %v1204, 2
      %v1327 = vsel %vm703, %v1325, %v1326
      %v1328 = vrot.slane %v1205, 2
      %v1329 = vsel %vm703, %v1326, %v1328
      %v1330 = vrot.slane %v1206, 2
      %v1331 = vrot.slane %v1207, 2
      %v1332 = vsel %vm703, %v1330, %v1331
      %v1333 = vrot.slane %v1208, 2
      %v1334 = vsel %vm703, %v1331, %v1333
      %v1335 = vrot.slane %v1209, 2
      %v1336 = vrot.slane %v1210, 2
      %v1337 = vsel %vm703, %v1335, %v1336
      %v1338 = vrot.slane %v1211, 2
      %v1339 = vsel %vm703, %v1336, %v1338
      %v1372 = vadd.f32 %v1128, %v1262
      %v1373 = vadd.f32 %v1129, %v1264
      %v1374 = vadd.f32 %v1130, %v1267
      %v1375 = vadd.f32 %v1131, %v1269
      %v1376 = vadd.f32 %v1132, %v1272
      %v1377 = vadd.f32 %v1133, %v1274
      %v1378 = vadd.f32 %v1134, %v1277
      %v1379 = vadd.f32 %v1135, %v1279
      %v1380 = vadd.f32 %v1136, %v1282
      %v1381 = vadd.f32 %v1137, %v1284
      %v1382 = vadd.f32 %v1138, %v1287
      %v1383 = vadd.f32 %v1139, %v1289
      %v1384 = vadd.f32 %v1140, %v1292
      %v1385 = vadd.f32 %v1141, %v1294
      %v1386 = vadd.f32 %v1142, %v1297
      %v1387 = vadd.f32 %v1143, %v1299
      %v1388 = vadd.f32 %v1144, %v1302
      %v1389 = vadd.f32 %v1145, %v1304
      %v1390 = vadd.f32 %v1146, %v1307
      %v1391 = vadd.f32 %v1147, %v1309
      %v1392 = vadd.f32 %v1148, %v1312
      %v1393 = vadd.f32 %v1149, %v1314
      %v1394 = vadd.f32 %v1150, %v1317
      %v1395 = vadd.f32 %v1151, %v1319
      %v1396 = vadd.f32 %v1152, %v1322
      %v1397 = vadd.f32 %v1153, %v1324
      %v1398 = vadd.f32 %v1154, %v1327
      %v1399 = vadd.f32 %v1155, %v1329
      %v1400 = vadd.f32 %v1156, %v1332
      %v1401 = vadd.f32 %v1157, %v1334
      %v1402 = vadd.f32 %v1158, %v1337
      %v1403 = vadd.f32 %v1159, %v1339
      %v1404 = vlaneseq
      %v1405 = vshrl.u32 %v1404, 7
      %v1406 = vsub.s32 0, %v1405
      %v1407 = vrot.slane %v289, %v1406
      %v1408 = vmul.f32 %v239, %v1407
      %v1409 = vmul.f32 %v240, %v1407
      %v1410 = vmul.f32 %v242, %v1407
      %v1411 = vmul.f32 %v243, %v1407
      %v1412 = vmul.f32 %v245, %v1407
      %v1413 = vmul.f32 %v246, %v1407
      %v1414 = vmul.f32 %v248, %v1407
      %v1415 = vmul.f32 %v249, %v1407
      %v1416 = vmul.f32 %v251, %v1407
      %v1417 = vmul.f32 %v252, %v1407
      %v1418 = vmul.f32 %v254, %v1407
      %v1419 = vmul.f32 %v255, %v1407
      %v1420 = vmul.f32 %v257, %v1407
      %v1421 = vmul.f32 %v258, %v1407
      %v1422 = vmul.f32 %v260, %v1407
      %v1423 = vmul.f32 %v261, %v1407
      %v1424 = vmul.f32 %v263, %v1407
      %v1425 = vmul.f32 %v264, %v1407
      %v1426 = vmul.f32 %v266, %v1407
      %v1427 = vmul.f32 %v267, %v1407
      %v1428 = vmul.f32 %v269, %v1407
      %v1429 = vmul.f32 %v270, %v1407
      %v1430 = vmul.f32 %v272, %v1407
      %v1431 = vmul.f32 %v273, %v1407
      %v1432 = vmul.f32 %v275, %v1407
      %v1433 = vmul.f32 %v276, %v1407
      %v1434 = vmul.f32 %v278, %v1407
      %v1435 = vmul.f32 %v279, %v1407
      %v1436 = vmul.f32 %v281, %v1407
      %v1437 = vmul.f32 %v282, %v1407
      %v1438 = vmul.f32 %v284, %v1407
      %v1439 = vmul.f32 %v285, %v1407
      %v1440 = vadd.f32 %v1372, %v1408
      %v1441 = vadd.f32 %v1373, %v1409
      %v1442 = vadd.f32 %v1374, %v1410
      %v1443 = vadd.f32 %v1375, %v1411
      %v1444 = vadd.f32 %v1376, %v1412
      %v1445 = vadd.f32 %v1377, %v1413
      %v1446 = vadd.f32 %v1378, %v1414
      %v1447 = vadd.f32 %v1379, %v1415
      %v1448 = vadd.f32 %v1380, %v1416
      %v1449 = vadd.f32 %v1381, %v1417
      %v1450 = vadd.f32 %v1382, %v1418
      %v1451 = vadd.f32 %v1383, %v1419
      %v1452 = vadd.f32 %v1384, %v1420
      %v1453 = vadd.f32 %v1385, %v1421
      %v1454 = vadd.f32 %v1386, %v1422
      %v1455 = vadd.f32 %v1387, %v1423
      %v1456 = vadd.f32 %v1388, %v1424
      %v1457 = vadd.f32 %v1389, %v1425
      %v1458 = vadd.f32 %v1390, %v1426
      %v1459 = vadd.f32 %v1391, %v1427
      %v1460 = vadd.f32 %v1392, %v1428
      %v1461 = vadd.f32 %v1393, %v1429
      %v1462 = vadd.f32 %v1394, %v1430
      %v1463 = vadd.f32 %v1395, %v1431
      %v1464 = vadd.f32 %v1396, %v1432
      %v1465 = vadd.f32 %v1397, %v1433
      %v1466 = vadd.f32 %v1398, %v1434
      %v1467 = vadd.f32 %v1399, %v1435
      %v1468 = vadd.f32 %v1400, %v1436
      %v1469 = vadd.f32 %v1401, %v1437
      %v1470 = vadd.f32 %v1402, %v1438
      %v1471 = vadd.f32 %v1403, %v1439
      %v1472 = vlaneseq
      %v1473 = vshrl.u32 %v1472, 7
      %v1474 = vsub.s32 1, %v1473
      %v1475 = vrot.slane %v289, %v1474
      %v1476 = vmul.f32 %v239, %v1475
      %v1477 = vmul.f32 %v240, %v1475
      %v1478 = vmul.f32 %v241, %v1475
      %v1479 = vmul.f32 %v242, %v1475
      %v1480 = vmul.f32 %v243, %v1475
      %v1481 = vmul.f32 %v244, %v1475
      %v1482 = vmul.f32 %v245, %v1475
      %v1483 = vmul.f32 %v246, %v1475
      %v1484 = vmul.f32 %v247, %v1475
      %v1485 = vmul.f32 %v248, %v1475
      %v1486 = vmul.f32 %v249, %v1475
      %v1487 = vmul.f32 %v250, %v1475
      %v1488 = vmul.f32 %v251, %v1475
      %v1489 = vmul.f32 %v252, %v1475
      %v1490 = vmul.f32 %v253, %v1475
      %v1491 = vmul.f32 %v254, %v1475
      %v1492 = vmul.f32 %v255, %v1475
      %v1493 = vmul.f32 %v256, %v1475
      %v1494 = vmul.f32 %v257, %v1475
      %v1495 = vmul.f32 %v258, %v1475
      %v1496 = vmul.f32 %v259, %v1475
      %v1497 = vmul.f32 %v260, %v1475
      %v1498 = vmul.f32 %v261, %v1475
      %v1499 = vmul.f32 %v262, %v1475
      %v1500 = vmul.f32 %v263, %v1475
      %v1501 = vmul.f32 %v264, %v1475
      %v1502 = vmul.f32 %v265, %v1475
      %v1503 = vmul.f32 %v266, %v1475
      %v1504 = vmul.f32 %v267, %v1475
      %v1505 = vmul.f32 %v268, %v1475
      %v1506 = vmul.f32 %v269, %v1475
      %v1507 = vmul.f32 %v270, %v1475
      %v1508 = vmul.f32 %v271, %v1475
      %v1509 = vmul.f32 %v272, %v1475
      %v1510 = vmul.f32 %v273, %v1475
      %v1511 = vmul.f32 %v274, %v1475
      %v1512 = vmul.f32 %v275, %v1475
      %v1513 = vmul.f32 %v276, %v1475
      %v1514 = vmul.f32 %v277, %v1475
      %v1515 = vmul.f32 %v278, %v1475
      %v1516 = vmul.f32 %v279, %v1475
      %v1517 = vmul.f32 %v280, %v1475
      %v1518 = vmul.f32 %v281, %v1475
      %v1519 = vmul.f32 %v282, %v1475
      %v1520 = vmul.f32 %v283, %v1475
      %v1521 = vmul.f32 %v284, %v1475
      %v1522 = vmul.f32 %v285, %v1475
      %v1523 = vmul.f32 %v286, %v1475
      %v1572 = vrot.slane %v1476, 1
      %v1573 = vrot.slane %v1477, 1
      %v1574 = vsel %vm458, %v1572, %v1573
      %v1575 = vrot.slane %v1478, 1
      %v1576 = vsel %vm458, %v1573, %v1575
      %v1577 = vrot.slane %v1479, 1
      %v1578 = vrot.slane %v1480, 1
      %v1579 = vsel %vm458, %v1577, %v1578
      %v1580 = vrot.slane %v1481, 1
      %v1581 = vsel %vm458, %v1578, %v1580
      %v1582 = vrot.slane %v1482, 1
      %v1583 = vrot.slane %v1483, 1
      %v1584 = vsel %vm458, %v1582, %v1583
      %v1585 = vrot.slane %v1484, 1
      %v1586 = vsel %vm458, %v1583, %v1585
      %v1587 = vrot.slane %v1485, 1
      %v1588 = vrot.slane %v1486, 1
      %v1589 = vsel %vm458, %v1587, %v1588
      %v1590 = vrot.slane %v1487, 1
      %v1591 = vsel %vm458, %v1588, %v1590
      %v1592 = vrot.slane %v1488, 1
      %v1593 = vrot.slane %v1489, 1
      %v1594 = vsel %vm458, %v1592, %v1593
      %v1595 = vrot.slane %v1490, 1
      %v1596 = vsel %vm458, %v1593, %v1595
      %v1597 = vrot.slane %v1491, 1
      %v1598 = vrot.slane %v1492, 1
      %v1599 = vsel %vm458, %v1597, %v1598
      %v1600 = vrot.slane %v1493, 1
      %v1601 = vsel %vm458, %v1598, %v1600
      %v1602 = vrot.slane %v1494, 1
      %v1603 = vrot.slane %v1495, 1
      %v1604 = vsel %vm458, %v1602, %v1603
      %v1605 = vrot.slane %v1496, 1
      %v1606 = vsel %vm458, %v1603, %v1605
      %v1607 = vrot.slane %v1497, 1
      %v1608 = vrot.slane %v1498, 1
      %v1609 = vsel %vm458, %v1607, %v1608
      %v1610 = vrot.slane %v1499, 1
      %v1611 = vsel %vm458, %v1608, %v1610
      %v1612 = vrot.slane %v1500, 1
      %v1613 = vrot.slane %v1501, 1
      %v1614 = vsel %vm458, %v1612, %v1613
      %v1615 = vrot.slane %v1502, 1
      %v1616 = vsel %vm458, %v1613, %v1615
      %v1617 = vrot.slane %v1503, 1
      %v1618 = vrot.slane %v1504, 1
      %v1619 = vsel %vm458, %v1617, %v1618
      %v1620 = vrot.slane %v1505, 1
      %v1621 = vsel %vm458, %v1618, %v1620
      %v1622 = vrot.slane %v1506, 1
      %v1623 = vrot.slane %v1507, 1
      %v1624 = vsel %vm458, %v1622, %v1623
      %v1625 = vrot.slane %v1508, 1
      %v1626 = vsel %vm458, %v1623, %v1625
      %v1627 = vrot.slane %v1509, 1
      %v1628 = vrot.slane %v1510, 1
      %v1629 = vsel %vm458, %v1627, %v1628
      %v1630 = vrot.slane %v1511, 1
      %v1631 = vsel %vm458, %v1628, %v1630
      %v1632 = vrot.slane %v1512, 1
      %v1633 = vrot.slane %v1513, 1
      %v1634 = vsel %vm458, %v1632, %v1633
      %v1635 = vrot.slane %v1514, 1
      %v1636 = vsel %vm458, %v1633, %v1635
      %v1637 = vrot.slane %v1515, 1
      %v1638 = vrot.slane %v1516, 1
      %v1639 = vsel %vm458, %v1637, %v1638
      %v1640 = vrot.slane %v1517, 1
      %v1641 = vsel %vm458, %v1638, %v1640
      %v1642 = vrot.slane %v1518, 1
      %v1643 = vrot.slane %v1519, 1
      %v1644 = vsel %vm458, %v1642, %v1643
      %v1645 = vrot.slane %v1520, 1
      %v1646 = vsel %vm458, %v1643, %v1645
      %v1647 = vrot.slane %v1521, 1
      %v1648 = vrot.slane %v1522, 1
      %v1649 = vsel %vm458, %v1647, %v1648
      %v1650 = vrot.slane %v1523, 1
      %v1651 = vsel %vm458, %v1648, %v1650
      %v1684 = vadd.f32 %v1440, %v1574
      %v1685 = vadd.f32 %v1441, %v1576
      %v1686 = vadd.f32 %v1442, %v1579
      %v1687 = vadd.f32 %v1443, %v1581
      %v1688 = vadd.f32 %v1444, %v1584
      %v1689 = vadd.f32 %v1445, %v1586
      %v1690 = vadd.f32 %v1446, %v1589
      %v1691 = vadd.f32 %v1447, %v1591
      %v1692 = vadd.f32 %v1448, %v1594
      %v1693 = vadd.f32 %v1449, %v1596
      %v1694 = vadd.f32 %v1450, %v1599
      %v1695 = vadd.f32 %v1451, %v1601
      %v1696 = vadd.f32 %v1452, %v1604
      %v1697 = vadd.f32 %v1453, %v1606
      %v1698 = vadd.f32 %v1454, %v1609
      %v1699 = vadd.f32 %v1455, %v1611
      %v1700 = vadd.f32 %v1456, %v1614
      %v1701 = vadd.f32 %v1457, %v1616
      %v1702 = vadd.f32 %v1458, %v1619
      %v1703 = vadd.f32 %v1459, %v1621
      %v1704 = vadd.f32 %v1460, %v1624
      %v1705 = vadd.f32 %v1461, %v1626
      %v1706 = vadd.f32 %v1462, %v1629
      %v1707 = vadd.f32 %v1463, %v1631
      %v1708 = vadd.f32 %v1464, %v1634
      %v1709 = vadd.f32 %v1465, %v1636
      %v1710 = vadd.f32 %v1466, %v1639
      %v1711 = vadd.f32 %v1467, %v1641
      %v1712 = vadd.f32 %v1468, %v1644
      %v1713 = vadd.f32 %v1469, %v1646
      %v1714 = vadd.f32 %v1470, %v1649
      %v1715 = vadd.f32 %v1471, %v1651
      %v1716 = vlaneseq
      %v1717 = vshrl.u32 %v1716, 7
      %v1718 = vsub.s32 2, %v1717
      %v1719 = vrot.slane %v289, %v1718
      %v1720 = vmul.f32 %v239, %v1719
      %v1721 = vmul.f32 %v240, %v1719
      %v1722 = vmul.f32 %v241, %v1719
      %v1723 = vmul.f32 %v242, %v1719
      %v1724 = vmul.f32 %v243, %v1719
      %v1725 = vmul.f32 %v244, %v1719
      %v1726 = vmul.f32 %v245, %v1719
      %v1727 = vmul.f32 %v246, %v1719
      %v1728 = vmul.f32 %v247, %v1719
      %v1729 = vmul.f32 %v248, %v1719
      %v1730 = vmul.f32 %v249, %v1719
      %v1731 = vmul.f32 %v250, %v1719
      %v1732 = vmul.f32 %v251, %v1719
      %v1733 = vmul.f32 %v252, %v1719
      %v1734 = vmul.f32 %v253, %v1719
      %v1735 = vmul.f32 %v254, %v1719
      %v1736 = vmul.f32 %v255, %v1719
      %v1737 = vmul.f32 %v256, %v1719
      %v1738 = vmul.f32 %v257, %v1719
      %v1739 = vmul.f32 %v258, %v1719
      %v1740 = vmul.f32 %v259, %v1719
      %v1741 = vmul.f32 %v260, %v1719
      %v1742 = vmul.f32 %v261, %v1719
      %v1743 = vmul.f32 %v262, %v1719
      %v1744 = vmul.f32 %v263, %v1719
      %v1745 = vmul.f32 %v264, %v1719
      %v1746 = vmul.f32 %v265, %v1719
      %v1747 = vmul.f32 %v266, %v1719
      %v1748 = vmul.f32 %v267, %v1719
      %v1749 = vmul.f32 %v268, %v1719
      %v1750 = vmul.f32 %v269, %v1719
      %v1751 = vmul.f32 %v270, %v1719
      %v1752 = vmul.f32 %v271, %v1719
      %v1753 = vmul.f32 %v272, %v1719
      %v1754 = vmul.f32 %v273, %v1719
      %v1755 = vmul.f32 %v274, %v1719
      %v1756 = vmul.f32 %v275, %v1719
      %v1757 = vmul.f32 %v276, %v1719
      %v1758 = vmul.f32 %v277, %v1719
      %v1759 = vmul.f32 %v278, %v1719
      %v1760 = vmul.f32 %v279, %v1719
      %v1761 = vmul.f32 %v280, %v1719
      %v1762 = vmul.f32 %v281, %v1719
      %v1763 = vmul.f32 %v282, %v1719
      %v1764 = vmul.f32 %v283, %v1719
      %v1765 = vmul.f32 %v284, %v1719
      %v1766 = vmul.f32 %v285, %v1719
      %v1767 = vmul.f32 %v286, %v1719
      %v1816 = vrot.slane %v1720, 2
      %v1817 = vrot.slane %v1721, 2
      %v1818 = vsel %vm703, %v1816, %v1817
      %v1819 = vrot.slane %v1722, 2
      %v1820 = vsel %vm703, %v1817, %v1819
      %v1821 = vrot.slane %v1723, 2
      %v1822 = vrot.slane %v1724, 2
      %v1823 = vsel %vm703, %v1821, %v1822
      %v1824 = vrot.slane %v1725, 2
      %v1825 = vsel %vm703, %v1822, %v1824
      %v1826 = vrot.slane %v1726, 2
      %v1827 = vrot.slane %v1727, 2
      %v1828 = vsel %vm703, %v1826, %v1827
      %v1829 = vrot.slane %v1728, 2
      %v1830 = vsel %vm703, %v1827, %v1829
      %v1831 = vrot.slane %v1729, 2
      %v1832 = vrot.slane %v1730, 2
      %v1833 = vsel %vm703, %v1831, %v1832
      %v1834 = vrot.slane %v1731, 2
      %v1835 = vsel %vm703, %v1832, %v1834
      %v1836 = vrot.slane %v1732, 2
      %v1837 = vrot.slane %v1733, 2
      %v1838 = vsel %vm703, %v1836, %v1837
      %v1839 = vrot.slane %v1734, 2
      %v1840 = vsel %vm703, %v1837, %v1839
      %v1841 = vrot.slane %v1735, 2
      %v1842 = vrot.slane %v1736, 2
      %v1843 = vsel %vm703, %v1841, %v1842
      %v1844 = vrot.slane %v1737, 2
      %v1845 = vsel %vm703, %v1842, %v1844
      %v1846 = vrot.slane %v1738, 2
      %v1847 = vrot.slane %v1739, 2
      %v1848 = vsel %vm703, %v1846, %v1847
      %v1849 = vrot.slane %v1740, 2
      %v1850 = vsel %vm703, %v1847, %v1849
      %v1851 = vrot.slane %v1741, 2
      %v1852 = vrot.slane %v1742, 2
      %v1853 = vsel %vm703, %v1851, %v1852
      %v1854 = vrot.slane %v1743, 2
      %v1855 = vsel %vm703, %v1852, %v1854
      %v1856 = vrot.slane %v1744, 2
      %v1857 = vrot.slane %v1745, 2
      %v1858 = vsel %vm703, %v1856, %v1857
      %v1859 = vrot.slane %v1746, 2
      %v1860 = vsel %vm703, %v1857, %v1859
      %v1861 = vrot.slane %v1747, 2
      %v1862 = vrot.slane %v1748, 2
      %v1863 = vsel %vm703, %v1861, %v1862
      %v1864 = vrot.slane %v1749, 2
      %v1865 = vsel %vm703, %v1862, %v1864
      %v1866 = vrot.slane %v1750, 2
      %v1867 = vrot.slane %v1751, 2
      %v1868 = vsel %vm703, %v1866, %v1867
      %v1869 = vrot.slane %v1752, 2
      %v1870 = vsel %vm703, %v1867, %v1869
      %v1871 = vrot.slane %v1753, 2
      %v1872 = vrot.slane %v1754, 2
      %v1873 = vsel %vm703, %v1871, %v1872
      %v1874 = vrot.slane %v1755, 2
      %v1875 = vsel %vm703, %v1872, %v1874
      %v1876 = vrot.slane %v1756, 2
      %v1877 = vrot.slane %v1757, 2
      %v1878 = vsel %vm703, %v1876, %v1877
      %v1879 = vrot.slane %v1758, 2
      %v1880 = vsel %vm703, %v1877, %v1879
      %v1881 = vrot.slane %v1759, 2
      %v1882 = vrot.slane %v1760, 2
      %v1883 = vsel %vm703, %v1881, %v1882
      %v1884 = vrot.slane %v1761, 2
      %v1885 = vsel %vm703, %v1882, %v1884
      %v1886 = vrot.slane %v1762, 2
      %v1887 = vrot.slane %v1763, 2
      %v1888 = vsel %vm703, %v1886, %v1887
      %v1889 = vrot.slane %v1764, 2
      %v1890 = vsel %vm703, %v1887, %v1889
      %v1891 = vrot.slane %v1765, 2
      %v1892 = vrot.slane %v1766, 2
      %v1893 = vsel %vm703, %v1891, %v1892
      %v1894 = vrot.slane %v1767, 2
      %v1895 = vsel %vm703, %v1892, %v1894
      %v1928 = vadd.f32 %v1684, %v1818
      %v1929 = vadd.f32 %v1685, %v1820
      %v1930 = vadd.f32 %v1686, %v1823
      %v1931 = vadd.f32 %v1687, %v1825
      %v1932 = vadd.f32 %v1688, %v1828
      %v1933 = vadd.f32 %v1689, %v1830
      %v1934 = vadd.f32 %v1690, %v1833
      %v1935 = vadd.f32 %v1691, %v1835
      %v1936 = vadd.f32 %v1692, %v1838
      %v1937 = vadd.f32 %v1693, %v1840
      %v1938 = vadd.f32 %v1694, %v1843
      %v1939 = vadd.f32 %v1695, %v1845
      %v1940 = vadd.f32 %v1696, %v1848
      %v1941 = vadd.f32 %v1697, %v1850
      %v1942 = vadd.f32 %v1698, %v1853
      %v1943 = vadd.f32 %v1699, %v1855
      %v1944 = vadd.f32 %v1700, %v1858
      %v1945 = vadd.f32 %v1701, %v1860
      %v1946 = vadd.f32 %v1702, %v1863
      %v1947 = vadd.f32 %v1703, %v1865
      %v1948 = vadd.f32 %v1704, %v1868
      %v1949 = vadd.f32 %v1705, %v1870
      %v1950 = vadd.f32 %v1706, %v1873
      %v1951 = vadd.f32 %v1707, %v1875
      %v1952 = vadd.f32 %v1708, %v1878
      %v1953 = vadd.f32 %v1709, %v1880
      %v1954 = vadd.f32 %v1710, %v1883
      %v1955 = vadd.f32 %v1711, %v1885
      %v1956 = vadd.f32 %v1712, %v1888
      %v1957 = vadd.f32 %v1713, %v1890
      %v1958 = vadd.f32 %v1714, %v1893
      %v1959 = vadd.f32 %v1715, %v1895
      %v1960 = vld [vmem:[%s224] sm:$0x1]
      %v1962 = vlaneseq
      %v1963 = vshrl.u32 %v1962, 7
      %v1964 = vsub.s32 0, %v1963
      %v1965 = vrot.slane %v1960, %v1964
      %v1967 = vadd.f32 %v1928, %v1965
      %v1968 = vadd.f32 %v1929, %v1965
      %v1969 = vadd.f32 %v1930, %v1965
      %v1970 = vadd.f32 %v1931, %v1965
      %v1971 = vadd.f32 %v1932, %v1965
      %v1972 = vadd.f32 %v1933, %v1965
      %v1973 = vadd.f32 %v1934, %v1965
      %v1974 = vadd.f32 %v1935, %v1965
      %v1975 = vadd.f32 %v1936, %v1965
      %v1976 = vadd.f32 %v1937, %v1965
      %v1977 = vadd.f32 %v1938, %v1965
      %v1978 = vadd.f32 %v1939, %v1965
      %v1979 = vadd.f32 %v1940, %v1965
      %v1980 = vadd.f32 %v1941, %v1965
      %v1981 = vadd.f32 %v1942, %v1965
      %v1982 = vadd.f32 %v1943, %v1965
      %v1983 = vadd.f32 %v1944, %v1965
      %v1984 = vadd.f32 %v1945, %v1965
      %v1985 = vadd.f32 %v1946, %v1965
      %v1986 = vadd.f32 %v1947, %v1965
      %v1987 = vadd.f32 %v1948, %v1965
      %v1988 = vadd.f32 %v1949, %v1965
      %v1989 = vadd.f32 %v1950, %v1965
      %v1990 = vadd.f32 %v1951, %v1965
      %v1991 = vadd.f32 %v1952, %v1965
      %v1992 = vadd.f32 %v1953, %v1965
      %v1993 = vadd.f32 %v1954, %v1965
      %v1994 = vadd.f32 %v1955, %v1965
      %v1995 = vadd.f32 %v1956, %v1965
      %v1996 = vadd.f32 %v1957, %v1965
      %v1997 = vadd.f32 %v1958, %v1965
      %v1998 = vadd.f32 %v1959, %v1965
      %v1999 = vmax.f32 %v1967, 0.0
      %v2000 = vmax.f32 %v1968, 0.0
      %v2001 = vmax.f32 %v1969, 0.0
      %v2002 = vmax.f32 %v1970, 0.0
      %v2003 = vmax.f32 %v1971, 0.0
      %v2004 = vmax.f32 %v1972, 0.0
      %v2005 = vmax.f32 %v1973, 0.0
      %v2006 = vmax.f32 %v1974, 0.0
      %v2007 = vmax.f32 %v1975, 0.0
      %v2008 = vmax.f32 %v1976, 0.0
      %v2009 = vmax.f32 %v1977, 0.0
      %v2010 = vmax.f32 %v1978, 0.0
      %v2011 = vmax.f32 %v1979, 0.0
      %v2012 = vmax.f32 %v1980, 0.0
      %v2013 = vmax.f32 %v1981, 0.0
      %v2014 = vmax.f32 %v1982, 0.0
      %v2015 = vmax.f32 %v1983, 0.0
      %v2016 = vmax.f32 %v1984, 0.0
      %v2017 = vmax.f32 %v1985, 0.0
      %v2018 = vmax.f32 %v1986, 0.0
      %v2019 = vmax.f32 %v1987, 0.0
      %v2020 = vmax.f32 %v1988, 0.0
      %v2021 = vmax.f32 %v1989, 0.0
      %v2022 = vmax.f32 %v1990, 0.0
      %v2023 = vmax.f32 %v1991, 0.0
      %v2024 = vmax.f32 %v1992, 0.0
      %v2025 = vmax.f32 %v1993, 0.0
      %v2026 = vmax.f32 %v1994, 0.0
      %v2027 = vmax.f32 %v1995, 0.0
      %v2028 = vmax.f32 %v1996, 0.0
      %v2029 = vmax.f32 %v1997, 0.0
      %v2030 = vmax.f32 %v1998, 0.0
      %2031 = vst [vmem:[%s232] sm:$0xff] %v1999
      %2032 = vst [vmem:[%s232 + $0x8] sm:$0xff] %v2000
      %2033 = vst [vmem:[%s232 + $0x10] sm:$0xff] %v2001
      %2034 = vst [vmem:[%s232 + $0x18] sm:$0xff] %v2002
      %2035 = vst [vmem:[%s232 + $0x20] sm:$0xff] %v2003
      %2036 = vst [vmem:[%s232 + $0x28] sm:$0xff] %v2004
      %2037 = vst [vmem:[%s232 + $0x30] sm:$0xff] %v2005
      %2038 = vst [vmem:[%s232 + $0x38] sm:$0xff] %v2006
      %2039 = vst [vmem:[%s232 + $0x40] sm:$0xff] %v2007
      %2040 = vst [vmem:[%s232 + $0x48] sm:$0xff] %v2008
      %2041 = vst [vmem:[%s232 + $0x50] sm:$0xff] %v2009
      %2042 = vst [vmem:[%s232 + $0x58] sm:$0xff] %v2010
      %2043 = vst [vmem:[%s232 + $0x60] sm:$0xff] %v2011
      %2044 = vst [vmem:[%s232 + $0x68] sm:$0xff] %v2012
      %2045 = vst [vmem:[%s232 + $0x70] sm:$0xff] %v2013
      %2046 = vst [vmem:[%s232 + $0x78] sm:$0xff] %v2014
      %2047 = vst [vmem:[%s232 + $0x80] sm:$0xff] %v2015
      %2048 = vst [vmem:[%s232 + $0x88] sm:$0xff] %v2016
      %2049 = vst [vmem:[%s232 + $0x90] sm:$0xff] %v2017
      %2050 = vst [vmem:[%s232 + $0x98] sm:$0xff] %v2018
      %2051 = vst [vmem:[%s232 + $0xa0] sm:$0xff] %v2019
      %2052 = vst [vmem:[%s232 + $0xa8] sm:$0xff] %v2020
      %2053 = vst [vmem:[%s232 + $0xb0] sm:$0xff] %v2021
      %2054 = vst [vmem:[%s232 + $0xb8] sm:$0xff] %v2022
      %2055 = vst [vmem:[%s232 + $0xc0] sm:$0xff] %v2023
      %2056 = vst [vmem:[%s232 + $0xc8] sm:$0xff] %v2024
      %2057 = vst [vmem:[%s232 + $0xd0] sm:$0xff] %v2025
      %2058 = vst [vmem:[%s232 + $0xd8] sm:$0xff] %v2026
      %2059 = vst [vmem:[%s232 + $0xe0] sm:$0xff] %v2027
      %2060 = vst [vmem:[%s232 + $0xe8] sm:$0xff] %v2028
      %2061 = vst [vmem:[%s232 + $0xf0] sm:$0xff] %v2029
      %2062 = vst [vmem:[%s232 + $0xf8] sm:$0xff] %v2030
      %p2063 = scmp.lt.s32.totalorder %s18, 1
      %s2064 = scalar_select %p2063, %s18, 1
      %p2065 = scmp.lt.s32.totalorder %s19, 0
      %s2066 = scalar_select %p2065, %s19, 0
      %s2067 = smul.addr %s2064, 32
      %s2068 = sadd.s32 %s2066, %s2067
      %s2069 = smul.addr %s2068, 8
      %s2070 = scalar_lea.vmem %s3, %s2069
      // Predicated region
      $region33: #{run.11} parent=31 // pred_check
        %p2071 = pneg %p126
      $region34: #{run.11} parent=31 // pred_check_branch
        %2073 = sbr.rel (%p2071) target = $region36
      $region35: #{run.11} parent=31 // pred_region
        _
      $region36: #{run.11} parent=31 // pred_fallthru
        _
    $region32: #{run.11} parent=5 // pred_fallthru
      _
    %p2074 = scmp.le.s32.totalorder 2, %s9
    // Predicated region
    $region37: #{run.11} parent=5 // pred_check
      %p2075 = pneg %p2074
    $region38: #{run.11} parent=5 // pred_check_branch
      %2077 = sbr.rel (%p2075) target = $region40
    $region39: #{run.11} parent=5 // pred_region
      %s2078 = ssub.s32 %s9, 2
      // Predicated region
      $region41: #{run.11} parent=39 // pred_check
        %p2079 = pneg %p132
      $region42: #{run.11} parent=39 // pred_check_branch
        %2081 = sbr.rel (%p2079) target = $region44
      $region43: #{run.11} parent=39 // pred_region
        %p2082 = scmp.lt.s32.totalorder %s20, 1
        %s2083 = scalar_select %p2082, %s20, 1
        %p2084 = scmp.lt.s32.totalorder %s21, 0
        %s2085 = scalar_select %p2084, %s21, 0
        %s2086 = smul.addr %s2083, 32
        %s2087 = sadd.s32 %s2085, %s2086
        %s2088 = smul.addr %s2087, 8
        %s2089 = scalar_lea.vmem %s3, %s2088
      $region44: #{run.11} parent=39 // pred_fallthru
        _
    $region40: #{run.11} parent=5 // pred_fallthru
      _
  $region6: #{run.11} parent=0 // loop_footer
    %s13 = sadd.s32 1, %s9
  $region7: #{run.11} parent=0 // loop_footer_branch
    %8 = sbr.rel target = $region3
  $region8: #{run.11} parent=0 // loop_exit
    _

// kernel: run.14
$region0: #{run.14}
  #allocation0 [shape = 'u32[]', space=smem, size = 0x4, offset = 0x4, fixed_abs, tag = 'smem constant byte address 0x4 - core index']
  #allocation1 [shape = 'u32[144,128]{1,0:T(1,128)}', space=vmem, size = 0x12000, scoped, tag = 'internal scratch']
  %s0 = inlined_call_operand.vmem [shape: f32[32,128], index: 0, kind: input, shape index: {}]
  %s1 = inlined_call_operand.vmem [shape: bf16[128,128], index: 1, kind: input, shape index: {}]
  %s2 = inlined_call_operand.vmem [shape: f32[1,128], index: 2, kind: input, shape index: {}]
  %s3 = inlined_call_operand.vmem [shape: f32[32,128], index: 3, kind: output, shape index: {}]
  %s4 = sld [smem:[#allocation0]]
  $region22: #{run.14} parent=0
    _
  %s6 = ssub.s32 1, %s4
  %s7 = scalar_select 0, %s6, %s4
  // Predicated region
  $region2: #{run.14} parent=0 // pred_check
    _
  $region3: #{run.14} parent=0 // pred_check_branch
    %9 = sbr.rel (0) target = $region5
  $region4: #{run.14} parent=0 // pred_region
    _
  $region5: #{run.14} parent=0 // pred_fallthru
    _
  // Predicated region
  $region6: #{run.14} parent=0 // pred_check
    _
  $region7: #{run.14} parent=0 // pred_check_branch
    %11 = sbr.rel (0) target = $region9
  $region8: #{run.14} parent=0 // pred_region
    _
  $region9: #{run.14} parent=0 // pred_fallthru
    _
  // Predicated region
  $region10: #{run.14} parent=0 // pred_check
    _
  $region11: #{run.14} parent=0 // pred_check_branch
    %13 = sbr.rel (0) target = $region13
  $region12: #{run.14} parent=0 // pred_region
    _
  $region13: #{run.14} parent=0 // pred_fallthru
    _
  %v15 = vld [vmem:[%s0] sm:$0xff]
  %v16 = vld [vmem:[%s0 + $0x8] sm:$0xff]
  %v17 = vld [vmem:[%s0 + $0x10] sm:$0xff]
  %v18 = vld [vmem:[%s0 + $0x18] sm:$0xff]
  %v19 = vpack.c.bf16 %v16, %v15
  %v20 = vpack.c.bf16 %v18, %v17
  %v21 = vld [vmem:[%s1] sm:$0xf]
  %v22 = vld [vmem:[%s1 + $0x4] sm:$0xf]
  %v23 = vld [vmem:[%s1 + $0x8] sm:$0xf]
  %v24 = vld [vmem:[%s1 + $0xc] sm:$0xf]
  %v25 = vld [vmem:[%s1 + $0x10] sm:$0xf]
  %v26 = vld [vmem:[%s1 + $0x14] sm:$0xf]
  %v27 = vld [vmem:[%s1 + $0x18] sm:$0xf]
  %v28 = vld [vmem:[%s1 + $0x1c] sm:$0xf]
  %v29 = vld [vmem:[%s1 + $0x20] sm:$0xf]
  %v30 = vld [vmem:[%s1 + $0x24] sm:$0xf]
  %v31 = vld [vmem:[%s1 + $0x28] sm:$0xf]
  %v32 = vld [vmem:[%s1 + $0x2c] sm:$0xf]
  %v33 = vld [vmem:[%s1 + $0x30] sm:$0xf]
  %v34 = vld [vmem:[%s1 + $0x34] sm:$0xf]
  %v35 = vld [vmem:[%s1 + $0x38] sm:$0xf]
  %v36 = vld [vmem:[%s1 + $0x3c] sm:$0xf]
  %v37 = vld [vmem:[%s2] sm:$0x1]
  %v39 = vlaneseq
  %v40 = vshrl.u32 %v39, 7
  %v41 = vsub.s32 0, %v40
  %v42 = vrot.slane %v37, %v41
  %v60 = vunpack.c.l.b16 %v21
  %v61 = vunpack.c.l.b16 %v22
  %v62 = vunpack.c.l.b16 %v23
  %v63 = vunpack.c.l.b16 %v24
  %v64 = vunpack.c.l.b16 %v25
  %v65 = vunpack.c.l.b16 %v26
  %v66 = vunpack.c.l.b16 %v27
  %v67 = vunpack.c.l.b16 %v28
  %v68 = vunpack.c.l.b16 %v29
  %v69 = vunpack.c.l.b16 %v30
  %v70 = vunpack.c.l.b16 %v31
  %v71 = vunpack.c.l.b16 %v32
  %v72 = vunpack.c.l.b16 %v33
  %v73 = vunpack.c.l.b16 %v34
  %v74 = vunpack.c.l.b16 %v35
  %v75 = vunpack.c.l.b16 %v36
  %v76 = vpack.c.b16 %v61, %v60
  %v77 = vpack.c.b16 %v63, %v62
  %v78 = vpack.c.b16 %v65, %v64
  %v79 = vpack.c.b16 %v67, %v66
  %v80 = vpack.c.b16 %v69, %v68
  %v81 = vpack.c.b16 %v71, %v70
  %v82 = vpack.c.b16 %v73, %v72
  %v83 = vpack.c.b16 %v75, %v74
  %92 = vmatprep.subr.bf16.mxu0 0
  %93 = vmatpush1.bf16.msra.mxu0 %v83
  %94 = vmatprep.subr.bf16.mxu0 0
  %95 = vmatpush1.bf16.msra.mxu0 %v82
  %96 = vmatprep.subr.bf16.mxu0 0
  %97 = vmatpush1.bf16.msra.mxu0 %v81
  %98 = vmatprep.subr.bf16.mxu0 0
  %99 = vmatpush1.bf16.msra.mxu0 %v80
  %100 = vmatprep.subr.bf16.mxu0 0
  %101 = vmatpush1.bf16.msra.mxu0 %v79
  %102 = vmatprep.subr.bf16.mxu0 0
  %103 = vmatpush1.bf16.msra.mxu0 %v78
  %104 = vmatprep.subr.bf16.mxu0 0
  %105 = vmatpush1.bf16.msra.mxu0 %v77
  %106 = vmatprep.subr.bf16.mxu0 0
  %107 = vmatpush1.bf16.msra.mxu0 %v76
  %108 = vmatprep.subr.bf16.mxu0 0
  %109 = vmatpush2.bf16.msra.mxu0 0
  %110 = vmatprep.subr.bf16.mxu0 0
  %111 = vmatpush2.bf16.msra.mxu0 0
  %112 = vmatprep.subr.bf16.mxu0 0
  %113 = vmatpush2.bf16.msra.mxu0 0
  %114 = vmatprep.subr.bf16.mxu0 0
  %115 = vmatpush2.bf16.msra.mxu0 0
  %116 = vmatprep.subr.bf16.mxu0 0
  %117 = vmatpush2.bf16.msra.mxu0 0
  %118 = vmatprep.subr.bf16.mxu0 0
  %119 = vmatpush2.bf16.msra.mxu0 0
  %120 = vmatprep.subr.bf16.mxu0 0
  %121 = vmatpush2.bf16.msra.mxu0 0
  %122 = vmatprep.subr.bf16.mxu0 0
  %123 = vmatpush2.bf16.msra.mxu0 0
  %124 = vmatprep.mubr.bf16.mxu0 0
  %125 = vmatmul.mubr.bf16.gmra.mxu0 %v19
  %v126 = vpop.f32.mrf.mxu0
  %v127 = vadd.f32 %v42, %v126
  %v128 = vpop.f32.mrf.mxu0
  %v129 = vpop.f32.mrf.mxu0
  %v130 = vadd.f32 %v42, %v129
  %v131 = vpop.f32.mrf.mxu0
  %132 = vmatprep.mubr.bf16.mxu0 0
  %133 = vmatmul.mubr.bf16.gmra.mxu0 %v20
  %v134 = vpop.f32.mrf.mxu0
  %v135 = vadd.f32 %v42, %v134
  %v136 = vpop.f32.mrf.mxu0
  %v137 = vpop.f32.mrf.mxu0
  %v138 = vadd.f32 %v42, %v137
  %v139 = vpop.f32.mrf.mxu0
  %140 = vdwg.mxu0
  %v141 = vmax.f32 %v127, 0.0
  %v142 = vmax.f32 %v130, 0.0
  %v143 = vmax.f32 %v135, 0.0
  %v144 = vmax.f32 %v138, 0.0
  %145 = vst [vmem:[%s3] sm:$0xff] %v141
  %146 = vst [vmem:[%s3 + $0x8] sm:$0xff] %v142
  %147 = vst [vmem:[%s3 + $0x10] sm:$0xff] %v143
  %148 = vst [vmem:[%s3 + $0x18] sm:$0xff] %v144
  // Predicated region
  $region14: #{run.14} parent=0 // pred_check
    _
  $region15: #{run.14} parent=0 // pred_check_branch
    %150 = sbr.rel (0) target = $region17
  $region16: #{run.14} parent=0 // pred_region
    _
  $region17: #{run.14} parent=0 // pred_fallthru
    _
  // Predicated region
  $region18: #{run.14} parent=0 // pred_check
    _
  $region19: #{run.14} parent=0 // pred_check_branch
    %152 = sbr.rel (0) target = $region21
  $region20: #{run.14} parent=0 // pred_region
    _
  $region21: #{run.14} parent=0 // pred_fallthru
    _

// kernel: run.13
$region0: #{run.13}
  #allocation0 [shape = 'u32[]', space=smem, size = 0x4, offset = 0x4, fixed_abs, tag = 'smem constant byte address 0x4 - core index']
  #allocation1 [shape = 'u32[144,128]{1,0:T(1,128)}', space=vmem, size = 0x12000, scoped, tag = 'internal scratch']
  %s0 = inlined_call_operand.vmem [shape: f32[2,10,10,128], index: 0, kind: input, shape index: {}]
  %s1 = inlined_call_operand.vmem [shape: f32[3,3,128], index: 1, kind: input, shape index: {}]
  %s2 = inlined_call_operand.vmem [shape: f32[1,128], index: 2, kind: input, shape index: {}]
  %s3 = inlined_call_operand.vmem [shape: f32[2,8,8,128], index: 3, kind: output, shape index: {}]
  %s4 = sld [smem:[#allocation0]]
  $region45: #{run.13} parent=0
    _
  %s6 = ssub.s32 1, %s4
  %s7 = scalar_select 0, %s6, %s4
  loop: start=0, step=1, limit=4
  $region2: #{run.13} parent=0 // loop_pre_header
    _
  $region3: #{run.13} parent=0 // loop_header
    %s9 = sphi 0, %s13
    %p10 = scmp.ge.s32.totalorder %s9, 4
    %s16 = sphi 0, %s28
    %s17 = sphi 0, %s24
    %s18 = sphi 0, %s16
    %s19 = sphi 0, %s17
    %s20 = sphi 0, %s18
    %s21 = sphi 0, %s19
    %s33 = sphi 0, %s35
    %s36 = sphi 0, %s33
    %s37 = sphi 0, %s36
    %s53 = sphi 0, %s37
    %s59 = sphi 0, %s61
    %s62 = sphi 0, %s59
    %s63 = sphi 0, %s62
    %s79 = sphi 0, %s63
    %s85 = sphi 0, %s87
    %s88 = sphi 0, %s85
    %s89 = sphi 0, %s88
    %s105 = sphi 0, %s89
    %s113 = sphi 0, %s115
    %s116 = sphi 0, %s113
    %s117 = sphi 0, %s116
    %s133 = sphi 0, %s117
  $region4: #{run.13} parent=0 // loop_header_branch
    %12 = sbr.rel (%p10) target = $region8
  $region5: #{run.13} parent=0 // loop_body
    %s14 = ssub.s32 %s9, 1
    %s15 = ssub.s32 %s9, 2
    %s22 = sadd.s32 1, %s17
    %p23 = scmp.ge.s32.totalorder %s22, 1
    %s24 = scalar_select %p23, 0, %s22
    %s25 = sadd.s32 1, %s16
    %s26 = scalar_select %p23, %s25, %s16
    %p27 = scmp.ge.s32.totalorder %s26, 2
    %s28 = scalar_select %p27, 0, %s26
    %s29 = ssub.s32 %s16, %s28
    %s30 = ssub.s32 %s17, %s24
    %s31 = sor.u32 %s29, %s30
    %p32 = scmp.eq.s32.totalorder %s31, 0
    %s34 = sadd.s32 %s33, 1
    %s35 = scalar_select %p32, %s33, %s34
    %p38 = pneg %p32
    %p39 = scmp.eq.s32.totalorder %s9, 1
    %p40 = por %p38, %p39
    %p41 = scmp.ne.s32.totalorder %s33, %s36
    %p42 = scmp.eq.s32.totalorder %s9, 0
    %p43 = por %p41, %p42
    %p44 = scmp.ne.s32.totalorder %s33, %s36
    %p45 = scmp.eq.s32.totalorder %s14, 1
    %p46 = por %p44, %p45
    %p47 = scmp.ne.s32.totalorder %s36, %s37
    %p48 = scmp.eq.s32.totalorder %s14, 0
    %p49 = por %p47, %p48
    %p50 = scmp.ne.s32.totalorder %s36, %s37
    %p51 = scmp.eq.s32.totalorder %s15, 1
    %p52 = por %p50, %p51
    %p54 = scmp.ne.s32.totalorder %s37, %s53
    %p55 = scmp.eq.s32.totalorder %s15, 0
    %p56 = por %p54, %p55
    %s57 = ssub.s32 %s17, %s24
    %p58 = scmp.eq.s32.totalorder %s57, 0
    %s60 = sadd.s32 %s59, 1
    %s61 = scalar_select %p58, %s59, %s60
    %p64 = pneg %p58
    %p65 = scmp.eq.s32.totalorder %s9, 1
    %p66 = por %p64, %p65
    %p67 = scmp.ne.s32.totalorder %s59, %s62
    %p68 = scmp.eq.s32.totalorder %s9, 0
    %p69 = por %p67, %p68
    %p70 = scmp.ne.s32.totalorder %s59, %s62
    %p71 = scmp.eq.s32.totalorder %s14, 1
    %p72 = por %p70, %p71
    %p73 = scmp.ne.s32.totalorder %s62, %s63
    %p74 = scmp.eq.s32.totalorder %s14, 0
    %p75 = por %p73, %p74
    %p76 = scmp.ne.s32.totalorder %s62, %s63
    %p77 = scmp.eq.s32.totalorder %s15, 1
    %p78 = por %p76, %p77
    %p80 = scmp.ne.s32.totalorder %s63, %s79
    %p81 = scmp.eq.s32.totalorder %s15, 0
    %p82 = por %p80, %p81
    %s83 = ssub.s32 %s17, %s24
    %p84 = scmp.eq.s32.totalorder %s83, 0
    %s86 = sadd.s32 %s85, 1
    %s87 = scalar_select %p84, %s85, %s86
    %p90 = pneg %p84
    %p91 = scmp.eq.s32.totalorder %s9, 1
    %p92 = por %p90, %p91
    %p93 = scmp.ne.s32.totalorder %s85, %s88
    %p94 = scmp.eq.s32.totalorder %s9, 0
    %p95 = por %p93, %p94
    %p96 = scmp.ne.s32.totalorder %s85, %s88
    %p97 = scmp.eq.s32.totalorder %s14, 1
    %p98 = por %p96, %p97
    %p99 = scmp.ne.s32.totalorder %s88, %s89
    %p100 = scmp.eq.s32.totalorder %s14, 0
    %p101 = por %p99, %p100
    %p102 = scmp.ne.s32.totalorder %s88, %s89
    %p103 = scmp.eq.s32.totalorder %s15, 1
    %p104 = por %p102, %p103
    %p106 = scmp.ne.s32.totalorder %s89, %s105
    %p107 = scmp.eq.s32.totalorder %s15, 0
    %p108 = por %p106, %p107
    %s109 = ssub.s32 %s16, %s28
    %s110 = ssub.s32 %s17, %s24
    %s111 = sor.u32 %s109, %s110
    %p112 = scmp.eq.s32.totalorder %s111, 0
    %s114 = sadd.s32 %s113, 1
    %s115 = scalar_select %p112, %s113, %s114
    %p118 = pneg %p112
    %p119 = scmp.eq.s32.totalorder %s9, 1
    %p120 = por %p118, %p119
    %p121 = scmp.ne.s32.totalorder %s113, %s116
    %p122 = scmp.eq.s32.totalorder %s9, 0
    %p123 = por %p121, %p122
    %p124 = scmp.ne.s32.totalorder %s113, %s116
    %p125 = scmp.eq.s32.totalorder %s14, 1
    %p126 = por %p124, %p125
    %p127 = scmp.ne.s32.totalorder %s116, %s117
    %p128 = scmp.eq.s32.totalorder %s14, 0
    %p129 = por %p127, %p128
    %p130 = scmp.ne.s32.totalorder %s116, %s117
    %p131 = scmp.eq.s32.totalorder %s15, 1
    %p132 = por %p130, %p131
    %p134 = scmp.ne.s32.totalorder %s117, %s133
    %p135 = scmp.eq.s32.totalorder %s15, 0
    %p136 = por %p134, %p135
    %p137 = scmp.le.s32.totalorder 1, %s9
    %p138 = scmp.lt.s32.totalorder %s9, 3
    %p139 = pnand %p137, %p138
    %p140 = pneg %p139
    // Predicated region
    $region9: #{run.13} parent=5 // pred_check
      _
    $region10: #{run.13} parent=5 // pred_check_branch
      %142 = sbr.rel (%p139) target = $region12
    $region11: #{run.13} parent=5 // pred_region
      %s143 = ssub.s32 %s9, 1
      // Predicated region
      $region13: #{run.13} parent=11 // pred_check
        %p144 = pneg %p75
      $region14: #{run.13} parent=11 // pred_check_branch
        %146 = sbr.rel (%p144) target = $region16
      $region15: #{run.13} parent=11 // pred_region
        %p147 = scmp.lt.s32.totalorder %s19, 0
        %s148 = scalar_select %p147, %s19, 0
        %s149 = smul.addr %s148, 4
        %s150 = scalar_lea.vmem %s1, %s149
      $region16: #{run.13} parent=11 // pred_fallthru
        _
      // Predicated region
      $region17: #{run.13} parent=11 // pred_check
        %p151 = pneg %p101
      $region18: #{run.13} parent=11 // pred_check_branch
        %153 = sbr.rel (%p151) target = $region20
      $region19: #{run.13} parent=11 // pred_region
        %p154 = scmp.lt.s32.totalorder %s19, 0
        %s155 = scalar_select %p154, %s19, 0
        %s156 = scalar_lea.vmem %s2, %s155
      $region20: #{run.13} parent=11 // pred_fallthru
        _
    $region12: #{run.13} parent=5 // pred_fallthru
      _
    %p157 = scmp.lt.s32.totalorder %s9, 2
    // Predicated region
    $region21: #{run.13} parent=5 // pred_check
      %p158 = pneg %p157
    $region22: #{run.13} parent=5 // pred_check_branch
      %160 = sbr.rel (%p158) target = $region24
    $region23: #{run.13} parent=5 // pred_region
      // Predicated region
      $region25: #{run.13} parent=23 // pred_check
        %p161 = pneg %p43
      $region26: #{run.13} parent=23 // pred_check_branch
        %163 = sbr.rel (%p161) target = $region28
      $region27: #{run.13} parent=23 // pred_region
        %p164 = scmp.lt.s32.totalorder %s16, 1
        %s165 = scalar_select %p164, %s16, 1
        %p166 = scmp.lt.s32.totalorder %s17, 0
        %s167 = scalar_select %p166, %s17, 0
        %s168 = smul.addr %s165, 20
        %s169 = sadd.s32 %s167, %s168
        %s170 = smul.addr %s169, 8
        %s171 = scalar_lea.vmem %s0, %s170
      $region28: #{run.13} parent=23 // pred_fallthru
        _
    $region24: #{run.13} parent=5 // pred_fallthru
      _
    %p172 = scmp.le.s32.totalorder 1, %s9
    %p173 = scmp.lt.s32.totalorder %s9, 3
    %p174 = pnand %p172, %p173
    %p175 = pneg %p174
    // Predicated region
    $region29: #{run.13} parent=5 // pred_check
      _
    $region30: #{run.13} parent=5 // pred_check_branch
      %177 = sbr.rel (%p174) target = $region32
    $region31: #{run.13} parent=5 // pred_region
      %s178 = ssub.s32 %s9, 1
      %p179 = scmp.lt.s32.totalorder %s18, 1
      %s180 = scalar_select %p179, %s18, 1
      %p181 = scmp.lt.s32.totalorder %s19, 0
      %s182 = scalar_select %p181, %s19, 0
      %s183 = smul.addr %s180, 20
      %s184 = sadd.s32 %s182, %s183
      %s185 = smul.addr %s184, 8
      %s186 = scalar_lea.vmem %s0, %s185
      %p187 = pneg %p49
      %p188 = pneg %p46
      %p189 = scmp.lt.s32.totalorder %s19, 0
      %s190 = scalar_select %p189, %s19, 0
      %s191 = smul.addr %s190, 4
      %s192 = scalar_lea.vmem %s1, %s191
      %p193 = pneg %p75
      %p194 = pneg %p72
      %p195 = scmp.lt.s32.totalorder %s19, 0
      %s196 = scalar_select %p195, %s19, 0
      %s197 = scalar_lea.vmem %s2, %s196
      %p198 = pneg %p101
      %p199 = pneg %p98
      %p200 = pneg %p129
      %p201 = pneg %p126
      %p202 = scmp.lt.s32.totalorder %s18, 1
      %s203 = scalar_select %p202, %s18, 1
      %p204 = scmp.lt.s32.totalorder %s19, 0
      %s205 = scalar_select %p204, %s19, 0
      %s206 = smul.addr %s203, 8
      %s207 = sadd.s32 %s205, %s206
      %s208 = smul.addr %s207, 8
      %s209 = scalar_lea.vmem %s3, %s208
      %p210 = scmp.lt.s32.totalorder %s18, 1
      %s211 = scalar_select %p210, %s18, 1
      %p212 = scmp.lt.s32.totalorder %s19, 0
      %s213 = scalar_select %p212, %s19, 0
      %s214 = smul.addr %s211, 20
      %s215 = sadd.s32 %s213, %s214
      %s216 = smul.addr %s215, 8
      %s217 = scalar_lea.vmem %s0, %s216
      %p218 = scmp.lt.s32.totalorder %s19, 0
      %s219 = scalar_select %p218, %s19, 0
      %s220 = smul.addr %s219, 4
      %s221 = scalar_lea.vmem %s1, %s220
      %p222 = scmp.lt.s32.totalorder %s19, 0
      %s223 = scalar_select %p222, %s19, 0
      %s224 = scalar_lea.vmem %s2, %s223
      %p225 = scmp.lt.s32.totalorder %s18, 1
      %s226 = scalar_select %p225, %s18, 1
      %p227 = scmp.lt.s32.totalorder %s19, 0
      %s228 = scalar_select %p227, %s19, 0
      %s229 = smul.addr %s226, 8
      %s230 = sadd.s32 %s228, %s229
      %s231 = smul.addr %s230, 8
      %s232 = scalar_lea.vmem %s3, %s231
      %v233 = vld [vmem:[%s217] sm:$0xff]
      %v234 = vld [vmem:[%s217 + $0x8] sm:$0x3]
      %v235 = vld [vmem:[%s217 + $0x10] sm:$0xff]
      %v236 = vld [vmem:[%s217 + $0x18] sm:$0x3]
      %v237 = vld [vmem:[%s217 + $0x20] sm:$0xff]
      %v238 = vld [vmem:[%s217 + $0x28] sm:$0x3]
      %v239 = vld [vmem:[%s217 + $0x30] sm:$0xff]
      %v240 = vld [vmem:[%s217 + $0x38] sm:$0x3]
      %v241 = vld [vmem:[%s217 + $0x40] sm:$0xff]
      %v242 = vld [vmem:[%s217 + $0x48] sm:$0x3]
      %v243 = vld [vmem:[%s217 + $0x50] sm:$0xff]
      %v244 = vld [vmem:[%s217 + $0x58] sm:$0x3]
      %v245 = vld [vmem:[%s217 + $0x60] sm:$0xff]
      %v246 = vld [vmem:[%s217 + $0x68] sm:$0x3]
      %v247 = vld [vmem:[%s217 + $0x70] sm:$0xff]
      %v248 = vld [vmem:[%s217 + $0x78] sm:$0x3]
      %v249 = vld [vmem:[%s217 + $0x80] sm:$0xff]
      %v250 = vld [vmem:[%s217 + $0x88] sm:$0x3]
      %v251 = vld [vmem:[%s217 + $0x90] sm:$0xff]
      %v252 = vld [vmem:[%s217 + $0x98] sm:$0x3]
      %v253 = vld [vmem:[%s221] sm:$0x7]
      %v254 = vld [vmem:[%s221 + $0x4] sm:$0x7]
      %v255 = vld [vmem:[%s221 + $0x8] sm:$0x7]
      %v256 = vlaneseq
      %v257 = vshrl.u32 %v256, 7
      %v258 = vsub.s32 0, %v257
      %v259 = vrot.slane %v253, %v258
      %v260 = vmul.f32 %v233, %v259
      %v261 = vmul.f32 %v235, %v259
      %v262 = vmul.f32 %v237, %v259
      %v263 = vmul.f32 %v239, %v259
      %v264 = vmul.f32 %v241, %v259
      %v265 = vmul.f32 %v243, %v259
      %v266 = vmul.f32 %v245, %v259
      %v267 = vmul.f32 %v247, %v259
      %v268 = vadd.f32 %v260, 0.0
      %v269 = vadd.f32 %v261, 0.0
      %v270 = vadd.f32 %v262, 0.0
      %v271 = vadd.f32 %v263, 0.0
      %v272 = vadd.f32 %v264, 0.0
      %v273 = vadd.f32 %v265, 0.0
      %v274 = vadd.f32 %v266, 0.0
      %v275 = vadd.f32 %v267, 0.0
      %v276 = vlaneseq
      %v277 = vshrl.u32 %v276, 7
      %v278 = vsub.s32 1, %v277
      %v279 = vrot.slane %v253, %v278
      %v280 = vmul.f32 %v233, %v279
      %v281 = vmul.f32 %v234, %v279
      %v282 = vmul.f32 %v235, %v279
      %v283 = vmul.f32 %v236, %v279
      %v284 = vmul.f32 %v237, %v279
      %v285 = vmul.f32 %v238, %v279
      %v286 = vmul.f32 %v239, %v279
      %v287 = vmul.f32 %v240, %v279
      %v288 = vmul.f32 %v241, %v279
      %v289 = vmul.f32 %v242, %v279
      %v290 = vmul.f32 %v243, %v279
      %v291 = vmul.f32 %v244, %v279
      %v292 = vmul.f32 %v245, %v279
      %v293 = vmul.f32 %v246, %v279
      %v294 = vmul.f32 %v247, %v279
      %v295 = vmul.f32 %v248, %v279
      %vm312 = vcmask 1046528
      %v313 = vrot.slane %v280, 1
      %v314 = vrot.slane %v281, 1
      %v315 = vsel %vm312, %v313, %v314
      %v316 = vrot.slane %v282, 1
      %v317 = vrot.slane %v283, 1
      %v318 = vsel %vm312, %v316, %v317
      %v319 = vrot.slane %v284, 1
      %v320 = vrot.slane %v285, 1
      %v321 = vsel %vm312, %v319, %v320
      %v322 = vrot.slane %v286, 1
      %v323 = vrot.slane %v287, 1
      %v324 = vsel %vm312, %v322, %v323
      %v325 = vrot.slane %v288, 1
      %v326 = vrot.slane %v289, 1
      %v327 = vsel %vm312, %v325, %v326
      %v328 = vrot.slane %v290, 1
      %v329 = vrot.slane %v291, 1
      %v330 = vsel %vm312, %v328, %v329
      %v331 = vrot.slane %v292, 1
      %v332 = vrot.slane %v293, 1
      %v333 = vsel %vm312, %v331, %v332
      %v334 = vrot.slane %v294, 1
      %v335 = vrot.slane %v295, 1
      %v336 = vsel %vm312, %v334, %v335
      %v345 = vadd.f32 %v268, %v315
      %v346 = vadd.f32 %v269, %v318
      %v347 = vadd.f32 %v270, %v321
      %v348 = vadd.f32 %v271, %v324
      %v349 = vadd.f32 %v272, %v327
      %v350 = vadd.f32 %v273, %v330
      %v351 = vadd.f32 %v274, %v333
      %v352 = vadd.f32 %v275, %v336
      %v353 = vlaneseq
      %v354 = vshrl.u32 %v353, 7
      %v355 = vsub.s32 2, %v354
      %v356 = vrot.slane %v253, %v355
      %v357 = vmul.f32 %v233, %v356
      %v358 = vmul.f32 %v234, %v356
      %v359 = vmul.f32 %v235, %v356
      %v360 = vmul.f32 %v236, %v356
      %v361 = vmul.f32 %v237, %v356
      %v362 = vmul.f32 %v238, %v356
      %v363 = vmul.f32 %v239, %v356
      %v364 = vmul.f32 %v240, %v356
      %v365 = vmul.f32 %v241, %v356
      %v366 = vmul.f32 %v242, %v356
      %v367 = vmul.f32 %v243, %v356
      %v368 = vmul.f32 %v244, %v356
      %v369 = vmul.f32 %v245, %v356
      %v370 = vmul.f32 %v246, %v356
      %v371 = vmul.f32 %v247, %v356
      %v372 = vmul.f32 %v248, %v356
      %vm389 = vcmask 1045504
      %v390 = vrot.slane %v357, 2
      %v391 = vrot.slane %v358, 2
      %v392 = vsel %vm389, %v390, %v391
      %v393 = vrot.slane %v359, 2
      %v394 = vrot.slane %v360, 2
      %v395 = vsel %vm389, %v393, %v394
      %v396 = vrot.slane %v361, 2
      %v397 = vrot.slane %v362, 2
      %v398 = vsel %vm389, %v396, %v397
      %v399 = vrot.slane %v363, 2
      %v400 = vrot.slane %v364, 2
      %v401 = vsel %vm389, %v399, %v400
      %v402 = vrot.slane %v365, 2
      %v403 = vrot.slane %v366, 2
      %v404 = vsel %vm389, %v402, %v403
      %v405 = vrot.slane %v367, 2
      %v406 = vrot.slane %v368, 2
      %v407 = vsel %vm389, %v405, %v406
      %v408 = vrot.slane %v369, 2
      %v409 = vrot.slane %v370, 2
      %v410 = vsel %vm389, %v408, %v409
      %v411 = vrot.slane %v371, 2
      %v412 = vrot.slane %v372, 2
      %v413 = vsel %vm389, %v411, %v412
      %v422 = vadd.f32 %v345, %v392
      %v423 = vadd.f32 %v346, %v395
      %v424 = vadd.f32 %v347, %v398
      %v425 = vadd.f32 %v348, %v401
      %v426 = vadd.f32 %v349, %v404
      %v427 = vadd.f32 %v350, %v407
      %v428 = vadd.f32 %v351, %v410
      %v429 = vadd.f32 %v352, %v413
      %v430 = vlaneseq
      %v431 = vshrl.u32 %v430, 7
      %v432 = vsub.s32 0, %v431
      %v433 = vrot.slane %v254, %v432
      %v434 = vmul.f32 %v235, %v433
      %v435 = vmul.f32 %v237, %v433
      %v436 = vmul.f32 %v239, %v433
      %v437 = vmul.f32 %v241, %v433
      %v438 = vmul.f32 %v243, %v433
      %v439 = vmul.f32 %v245, %v433
      %v440 = vmul.f32 %v247, %v433
      %v441 = vmul.f32 %v249, %v433
      %v442 = vadd.f32 %v422, %v434
      %v443 = vadd.f32 %v423, %v435
      %v444 = vadd.f32 %v424, %v436
      %v445 = vadd.f32 %v425, %v437
      %v446 = vadd.f32 %v426, %v438
      %v447 = vadd.f32 %v427, %v439
      %v448 = vadd.f32 %v428, %v440
      %v449 = vadd.f32 %v429, %v441
      %v450 = vlaneseq
      %v451 = vshrl.u32 %v450, 7
      %v452 = vsub.s32 1, %v451
      %v453 = vrot.slane %v254, %v452
      %v454 = vmul.f32 %v235, %v453
      %v455 = vmul.f32 %v236, %v453
      %v456 = vmul.f32 %v237, %v453
      %v457 = vmul.f32 %v238, %v453
      %v458 = vmul.f32 %v239, %v453
      %v459 = vmul.f32 %v240, %v453
      %v460 = vmul.f32 %v241, %v453
      %v461 = vmul.f32 %v242, %v453
      %v462 = vmul.f32 %v243, %v453
      %v463 = vmul.f32 %v244, %v453
      %v464 = vmul.f32 %v245, %v453
      %v465 = vmul.f32 %v246, %v453
      %v466 = vmul.f32 %v247, %v453
      %v467 = vmul.f32 %v248, %v453
      %v468 = vmul.f32 %v249, %v453
      %v469 = vmul.f32 %v250, %v453
      %v486 = vrot.slane %v454, 1
      %v487 = vrot.slane %v455, 1
      %v488 = vsel %vm312, %v486, %v487
      %v489 = vrot.slane %v456, 1
      %v490 = vrot.slane %v457, 1
      %v491 = vsel %vm312, %v489, %v490
      %v492 = vrot.slane %v458, 1
      %v493 = vrot.slane %v459, 1
      %v494 = vsel %vm312, %v492, %v493
      %v495 = vrot.slane %v460, 1
      %v496 = vrot.slane %v461, 1
      %v497 = vsel %vm312, %v495, %v496
      %v498 = vrot.slane %v462, 1
      %v499 = vrot.slane %v463, 1
      %v500 = vsel %vm312, %v498, %v499
      %v501 = vrot.slane %v464, 1
      %v502 = vrot.slane %v465, 1
      %v503 = vsel %vm312, %v501, %v502
      %v504 = vrot.slane %v466, 1
      %v505 = vrot.slane %v467, 1
      %v506 = vsel %vm312, %v504, %v505
      %v507 = vrot.slane %v468, 1
      %v508 = vrot.slane %v469, 1
      %v509 = vsel %vm312, %v507, %v508
      %v518 = vadd.f32 %v442, %v488
      %v519 = vadd.f32 %v443, %v491
      %v520 = vadd.f32 %v444, %v494
      %v521 = vadd.f32 %v445, %v497
      %v522 = vadd.f32 %v446, %v500
      %v523 = vadd.f32 %v447, %v503
      %v524 = vadd.f32 %v448, %v506
      %v525 = vadd.f32 %v449, %v509
      %v526 = vlaneseq
      %v527 = vshrl.u32 %v526, 7
      %v528 = vsub.s32 2, %v527
      %v529 = vrot.slane %v254, %v528
      %v530 = vmul.f32 %v235, %v529
      %v531 = vmul.f32 %v236, %v529
      %v532 = vmul.f32 %v237, %v529
      %v533 = vmul.f32 %v238, %v529
      %v534 = vmul.f32 %v239, %v529
      %v535 = vmul.f32 %v240, %v529
      %v536 = vmul.f32 %v241, %v529
      %v537 = vmul.f32 %v242, %v529
      %v538 = vmul.f32 %v243, %v529
      %v539 = vmul.f32 %v244, %v529
      %v540 = vmul.f32 %v245, %v529
      %v541 = vmul.f32 %v246, %v529
      %v542 = vmul.f32 %v247, %v529
      %v543 = vmul.f32 %v248, %v529
      %v544 = vmul.f32 %v249, %v529
      %v545 = vmul.f32 %v250, %v529
      %v562 = vrot.slane %v530, 2
      %v563 = vrot.slane %v531, 2
      %v564 = vsel %vm389, %v562, %v563
      %v565 = vrot.slane %v532, 2
      %v566 = vrot.slane %v533, 2
      %v567 = vsel %vm389, %v565, %v566
      %v568 = vrot.slane %v534, 2
      %v569 = vrot.slane %v535, 2
      %v570 = vsel %vm389, %v568, %v569
      %v571 = vrot.slane %v536, 2
      %v572 = vrot.slane %v537, 2
      %v573 = vsel %vm389, %v571, %v572
      %v574 = vrot.slane %v538, 2
      %v575 = vrot.slane %v539, 2
      %v576 = vsel %vm389, %v574, %v575
      %v577 = vrot.slane %v540, 2
      %v578 = vrot.slane %v541, 2
      %v579 = vsel %vm389, %v577, %v578
      %v580 = vrot.slane %v542, 2
      %v581 = vrot.slane %v543, 2
      %v582 = vsel %vm389, %v580, %v581
      %v583 = vrot.slane %v544, 2
      %v584 = vrot.slane %v545, 2
      %v585 = vsel %vm389, %v583, %v584
      %v594 = vadd.f32 %v518, %v564
      %v595 = vadd.f32 %v519, %v567
      %v596 = vadd.f32 %v520, %v570
      %v597 = vadd.f32 %v521, %v573
      %v598 = vadd.f32 %v522, %v576
      %v599 = vadd.f32 %v523, %v579
      %v600 = vadd.f32 %v524, %v582
      %v601 = vadd.f32 %v525, %v585
      %v602 = vlaneseq
      %v603 = vshrl.u32 %v602, 7
      %v604 = vsub.s32 0, %v603
      %v605 = vrot.slane %v255, %v604
      %v606 = vmul.f32 %v237, %v605
      %v607 = vmul.f32 %v239, %v605
      %v608 = vmul.f32 %v241, %v605
      %v609 = vmul.f32 %v243, %v605
      %v610 = vmul.f32 %v245, %v605
      %v611 = vmul.f32 %v247, %v605
      %v612 = vmul.f32 %v249, %v605
      %v613 = vmul.f32 %v251, %v605
      %v614 = vadd.f32 %v594, %v606
      %v615 = vadd.f32 %v595, %v607
      %v616 = vadd.f32 %v596, %v608
      %v617 = vadd.f32 %v597, %v609
      %v618 = vadd.f32 %v598, %v610
      %v619 = vadd.f32 %v599, %v611
      %v620 = vadd.f32 %v600, %v612
      %v621 = vadd.f32 %v601, %v613
      %v622 = vlaneseq
      %v623 = vshrl.u32 %v622, 7
      %v624 = vsub.s32 1, %v623
      %v625 = vrot.slane %v255, %v624
      %v626 = vmul.f32 %v237, %v625
      %v627 = vmul.f32 %v238, %v625
      %v628 = vmul.f32 %v239, %v625
      %v629 = vmul.f32 %v240, %v625
      %v630 = vmul.f32 %v241, %v625
      %v631 = vmul.f32 %v242, %v625
      %v632 = vmul.f32 %v243, %v625
      %v633 = vmul.f32 %v244, %v625
      %v634 = vmul.f32 %v245, %v625
      %v635 = vmul.f32 %v246, %v625
      %v636 = vmul.f32 %v247, %v625
      %v637 = vmul.f32 %v248, %v625
      %v638 = vmul.f32 %v249, %v625
      %v639 = vmul.f32 %v250, %v625
      %v640 = vmul.f32 %v251, %v625
      %v641 = vmul.f32 %v252, %v625
      %v658 = vrot.slane %v626, 1
      %v659 = vrot.slane %v627, 1
      %v660 = vsel %vm312, %v658, %v659
      %v661 = vrot.slane %v628, 1
      %v662 = vrot.slane %v629, 1
      %v663 = vsel %vm312, %v661, %v662
      %v664 = vrot.slane %v630, 1
      %v665 = vrot.slane %v631, 1
      %v666 = vsel %vm312, %v664, %v665
      %v667 = vrot.slane %v632, 1
      %v668 = vrot.slane %v633, 1
      %v669 = vsel %vm312, %v667, %v668
      %v670 = vrot.slane %v634, 1
      %v671 = vrot.slane %v635, 1
      %v672 = vsel %vm312, %v670, %v671
      %v673 = vrot.slane %v636, 1
      %v674 = vrot.slane %v637, 1
      %v675 = vsel %vm312, %v673, %v674
      %v676 = vrot.slane %v638, 1
      %v677 = vrot.slane %v639, 1
      %v678 = vsel %vm312, %v676, %v677
      %v679 = vrot.slane %v640, 1
      %v680 = vrot.slane %v641, 1
      %v681 = vsel %vm312, %v679, %v680
      %v690 = vadd.f32 %v614, %v660
      %v691 = vadd.f32 %v615, %v663
      %v692 = vadd.f32 %v616, %v666
      %v693 = vadd.f32 %v617, %v669
      %v694 = vadd.f32 %v618, %v672
      %v695 = vadd.f32 %v619, %v675
      %v696 = vadd.f32 %v620, %v678
      %v697 = vadd.f32 %v621, %v681
      %v698 = vlaneseq
      %v699 = vshrl.u32 %v698, 7
      %v700 = vsub.s32 2, %v699
      %v701 = vrot.slane %v255, %v700
      %v702 = vmul.f32 %v237, %v701
      %v703 = vmul.f32 %v238, %v701
      %v704 = vmul.f32 %v239, %v701
      %v705 = vmul.f32 %v240, %v701
      %v706 = vmul.f32 %v241, %v701
      %v707 = vmul.f32 %v242, %v701
      %v708 = vmul.f32 %v243, %v701
      %v709 = vmul.f32 %v244, %v701
      %v710 = vmul.f32 %v245, %v701
      %v711 = vmul.f32 %v246, %v701
      %v712 = vmul.f32 %v247, %v701
      %v713 = vmul.f32 %v248, %v701
      %v714 = vmul.f32 %v249, %v701
      %v715 = vmul.f32 %v250, %v701
      %v716 = vmul.f32 %v251, %v701
      %v717 = vmul.f32 %v252, %v701
      %v734 = vrot.slane %v702, 2
      %v735 = vrot.slane %v703, 2
      %v736 = vsel %vm389, %v734, %v735
      %v737 = vrot.slane %v704, 2
      %v738 = vrot.slane %v705, 2
      %v739 = vsel %vm389, %v737, %v738
      %v740 = vrot.slane %v706, 2
      %v741 = vrot.slane %v707, 2
      %v742 = vsel %vm389, %v740, %v741
      %v743 = vrot.slane %v708, 2
      %v744 = vrot.slane %v709, 2
      %v745 = vsel %vm389, %v743, %v744
      %v746 = vrot.slane %v710, 2
      %v747 = vrot.slane %v711, 2
      %v748 = vsel %vm389, %v746, %v747
      %v749 = vrot.slane %v712, 2
      %v750 = vrot.slane %v713, 2
      %v751 = vsel %vm389, %v749, %v750
      %v752 = vrot.slane %v714, 2
      %v753 = vrot.slane %v715, 2
      %v754 = vsel %vm389, %v752, %v753
      %v755 = vrot.slane %v716, 2
      %v756 = vrot.slane %v717, 2
      %v757 = vsel %vm389, %v755, %v756
      %v766 = vadd.f32 %v690, %v736
      %v767 = vadd.f32 %v691, %v739
      %v768 = vadd.f32 %v692, %v742
      %v769 = vadd.f32 %v693, %v745
      %v770 = vadd.f32 %v694, %v748
      %v771 = vadd.f32 %v695, %v751
      %v772 = vadd.f32 %v696, %v754
      %v773 = vadd.f32 %v697, %v757
      %v774 = vld [vmem:[%s224] sm:$0x1]
      %v776 = vlaneseq
      %v777 = vshrl.u32 %v776, 7
      %v778 = vsub.s32 0, %v777
      %v779 = vrot.slane %v774, %v778
      %v781 = vadd.f32 %v766, %v779
      %v782 = vadd.f32 %v767, %v779
      %v783 = vadd.f32 %v768, %v779
      %v784 = vadd.f32 %v769, %v779
      %v785 = vadd.f32 %v770, %v779
      %v786 = vadd.f32 %v771, %v779
      %v787 = vadd.f32 %v772, %v779
      %v788 = vadd.f32 %v773, %v779
      %v789 = vmax.f32 %v781, 0.0
      %v790 = vmax.f32 %v782, 0.0
      %v791 = vmax.f32 %v783, 0.0
      %v792 = vmax.f32 %v784, 0.0
      %v793 = vmax.f32 %v785, 0.0
      %v794 = vmax.f32 %v786, 0.0
      %v795 = vmax.f32 %v787, 0.0
      %v796 = vmax.f32 %v788, 0.0
      %797 = vst [vmem:[%s232] sm:$0xff] %v789
      %798 = vst [vmem:[%s232 + $0x8] sm:$0xff] %v790
      %799 = vst [vmem:[%s232 + $0x10] sm:$0xff] %v791
      %800 = vst [vmem:[%s232 + $0x18] sm:$0xff] %v792
      %801 = vst [vmem:[%s232 + $0x20] sm:$0xff] %v793
      %802 = vst [vmem:[%s232 + $0x28] sm:$0xff] %v794
      %803 = vst [vmem:[%s232 + $0x30] sm:$0xff] %v795
      %804 = vst [vmem:[%s232 + $0x38] sm:$0xff] %v796
      %p805 = scmp.lt.s32.totalorder %s18, 1
      %s806 = scalar_select %p805, %s18, 1
      %p807 = scmp.lt.s32.totalorder %s19, 0
      %s808 = scalar_select %p807, %s19, 0
      %s809 = smul.addr %s806, 8
      %s810 = sadd.s32 %s808, %s809
      %s811 = smul.addr %s810, 8
      %s812 = scalar_lea.vmem %s3, %s811
      // Predicated region
      $region33: #{run.13} parent=31 // pred_check
        %p813 = pneg %p126
      $region34: #{run.13} parent=31 // pred_check_branch
        %815 = sbr.rel (%p813) target = $region36
      $region35: #{run.13} parent=31 // pred_region
        _
      $region36: #{run.13} parent=31 // pred_fallthru
        _
    $region32: #{run.13} parent=5 // pred_fallthru
      _
    %p816 = scmp.le.s32.totalorder 2, %s9
    // Predicated region
    $region37: #{run.13} parent=5 // pred_check
      %p817 = pneg %p816
    $region38: #{run.13} parent=5 // pred_check_branch
      %819 = sbr.rel (%p817) target = $region40
    $region39: #{run.13} parent=5 // pred_region
      %s820 = ssub.s32 %s9, 2
      // Predicated region
      $region41: #{run.13} parent=39 // pred_check
        %p821 = pneg %p132
      $region42: #{run.13} parent=39 // pred_check_branch
        %823 = sbr.rel (%p821) target = $region44
      $region43: #{run.13} parent=39 // pred_region
        %p824 = scmp.lt.s32.totalorder %s20, 1
        %s825 = scalar_select %p824, %s20, 1
        %p826 = scmp.lt.s32.totalorder %s21, 0
        %s827 = scalar_select %p826, %s21, 0
        %s828 = smul.addr %s825, 8
        %s829 = sadd.s32 %s827, %s828
        %s830 = smul.addr %s829, 8
        %s831 = scalar_lea.vmem %s3, %s830
      $region44: #{run.13} parent=39 // pred_fallthru
        _
    $region40: #{run.13} parent=5 // pred_fallthru
      _
  $region6: #{run.13} parent=0 // loop_footer
    %s13 = sadd.s32 1, %s9
  $region7: #{run.13} parent=0 // loop_footer_branch
    %8 = sbr.rel target = $region3
  $region8: #{run.13} parent=0 // loop_exit
    _

// kernel: run.15
$region0: #{run.15}
  #allocation0 [shape = 'u32[]', space=smem, size = 0x4, offset = 0x4, fixed_abs, tag = 'smem constant byte address 0x4 - core index']
  #allocation1 [shape = 'u32[144,128]{1,0:T(1,128)}', space=vmem, size = 0x12000, scoped, tag = 'internal scratch']
  %s0 = inlined_call_operand.vmem [shape: f32[2,6,6,128], index: 0, kind: input, shape index: {}]
  %s1 = inlined_call_operand.vmem [shape: f32[3,3,128], index: 1, kind: input, shape index: {}]
  %s2 = inlined_call_operand.vmem [shape: f32[1,128], index: 2, kind: input, shape index: {}]
  %s3 = inlined_call_operand.vmem [shape: f32[2,4,4,128], index: 3, kind: output, shape index: {}]
  %s4 = sld [smem:[#allocation0]]
  $region45: #{run.15} parent=0
    _
  %s6 = ssub.s32 1, %s4
  %s7 = scalar_select 0, %s6, %s4
  loop: start=0, step=1, limit=4
  $region2: #{run.15} parent=0 // loop_pre_header
    _
  $region3: #{run.15} parent=0 // loop_header
    %s9 = sphi 0, %s13
    %p10 = scmp.ge.s32.totalorder %s9, 4
    %s16 = sphi 0, %s28
    %s17 = sphi 0, %s24
    %s18 = sphi 0, %s16
    %s19 = sphi 0, %s17
    %s20 = sphi 0, %s18
    %s21 = sphi 0, %s19
    %s33 = sphi 0, %s35
    %s36 = sphi 0, %s33
    %s37 = sphi 0, %s36
    %s53 = sphi 0, %s37
    %s59 = sphi 0, %s61
    %s62 = sphi 0, %s59
    %s63 = sphi 0, %s62
    %s79 = sphi 0, %s63
    %s85 = sphi 0, %s87
    %s88 = sphi 0, %s85
    %s89 = sphi 0, %s88
    %s105 = sphi 0, %s89
    %s113 = sphi 0, %s115
    %s116 = sphi 0, %s113
    %s117 = sphi 0, %s116
    %s133 = sphi 0, %s117
  $region4: #{run.15} parent=0 // loop_header_branch
    %12 = sbr.rel (%p10) target = $region8
  $region5: #{run.15} parent=0 // loop_body
    %s14 = ssub.s32 %s9, 1
    %s15 = ssub.s32 %s9, 2
    %s22 = sadd.s32 1, %s17
    %p23 = scmp.ge.s32.totalorder %s22, 1
    %s24 = scalar_select %p23, 0, %s22
    %s25 = sadd.s32 1, %s16
    %s26 = scalar_select %p23, %s25, %s16
    %p27 = scmp.ge.s32.totalorder %s26, 2
    %s28 = scalar_select %p27, 0, %s26
    %s29 = ssub.s32 %s16, %s28
    %s30 = ssub.s32 %s17, %s24
    %s31 = sor.u32 %s29, %s30
    %p32 = scmp.eq.s32.totalorder %s31, 0
    %s34 = sadd.s32 %s33, 1
    %s35 = scalar_select %p32, %s33, %s34
    %p38 = pneg %p32
    %p39 = scmp.eq.s32.totalorder %s9, 1
    %p40 = por %p38, %p39
    %p41 = scmp.ne.s32.totalorder %s33, %s36
    %p42 = scmp.eq.s32.totalorder %s9, 0
    %p43 = por %p41, %p42
    %p44 = scmp.ne.s32.totalorder %s33, %s36
    %p45 = scmp.eq.s32.totalorder %s14, 1
    %p46 = por %p44, %p45
    %p47 = scmp.ne.s32.totalorder %s36, %s37
    %p48 = scmp.eq.s32.totalorder %s14, 0
    %p49 = por %p47, %p48
    %p50 = scmp.ne.s32.totalorder %s36, %s37
    %p51 = scmp.eq.s32.totalorder %s15, 1
    %p52 = por %p50, %p51
    %p54 = scmp.ne.s32.totalorder %s37, %s53
    %p55 = scmp.eq.s32.totalorder %s15, 0
    %p56 = por %p54, %p55
    %s57 = ssub.s32 %s17, %s24
    %p58 = scmp.eq.s32.totalorder %s57, 0
    %s60 = sadd.s32 %s59, 1
    %s61 = scalar_select %p58, %s59, %s60
    %p64 = pneg %p58
    %p65 = scmp.eq.s32.totalorder %s9, 1
    %p66 = por %p64, %p65
    %p67 = scmp.ne.s32.totalorder %s59, %s62
    %p68 = scmp.eq.s32.totalorder %s9, 0
    %p69 = por %p67, %p68
    %p70 = scmp.ne.s32.totalorder %s59, %s62
    %p71 = scmp.eq.s32.totalorder %s14, 1
    %p72 = por %p70, %p71
    %p73 = scmp.ne.s32.totalorder %s62, %s63
    %p74 = scmp.eq.s32.totalorder %s14, 0
    %p75 = por %p73, %p74
    %p76 = scmp.ne.s32.totalorder %s62, %s63
    %p77 = scmp.eq.s32.totalorder %s15, 1
    %p78 = por %p76, %p77
    %p80 = scmp.ne.s32.totalorder %s63, %s79
    %p81 = scmp.eq.s32.totalorder %s15, 0
    %p82 = por %p80, %p81
    %s83 = ssub.s32 %s17, %s24
    %p84 = scmp.eq.s32.totalorder %s83, 0
    %s86 = sadd.s32 %s85, 1
    %s87 = scalar_select %p84, %s85, %s86
    %p90 = pneg %p84
    %p91 = scmp.eq.s32.totalorder %s9, 1
    %p92 = por %p90, %p91
    %p93 = scmp.ne.s32.totalorder %s85, %s88
    %p94 = scmp.eq.s32.totalorder %s9, 0
    %p95 = por %p93, %p94
    %p96 = scmp.ne.s32.totalorder %s85, %s88
    %p97 = scmp.eq.s32.totalorder %s14, 1
    %p98 = por %p96, %p97
    %p99 = scmp.ne.s32.totalorder %s88, %s89
    %p100 = scmp.eq.s32.totalorder %s14, 0
    %p101 = por %p99, %p100
    %p102 = scmp.ne.s32.totalorder %s88, %s89
    %p103 = scmp.eq.s32.totalorder %s15, 1
    %p104 = por %p102, %p103
    %p106 = scmp.ne.s32.totalorder %s89, %s105
    %p107 = scmp.eq.s32.totalorder %s15, 0
    %p108 = por %p106, %p107
    %s109 = ssub.s32 %s16, %s28
    %s110 = ssub.s32 %s17, %s24
    %s111 = sor.u32 %s109, %s110
    %p112 = scmp.eq.s32.totalorder %s111, 0
    %s114 = sadd.s32 %s113, 1
    %s115 = scalar_select %p112, %s113, %s114
    %p118 = pneg %p112
    %p119 = scmp.eq.s32.totalorder %s9, 1
    %p120 = por %p118, %p119
    %p121 = scmp.ne.s32.totalorder %s113, %s116
    %p122 = scmp.eq.s32.totalorder %s9, 0
    %p123 = por %p121, %p122
    %p124 = scmp.ne.s32.totalorder %s113, %s116
    %p125 = scmp.eq.s32.totalorder %s14, 1
    %p126 = por %p124, %p125
    %p127 = scmp.ne.s32.totalorder %s116, %s117
    %p128 = scmp.eq.s32.totalorder %s14, 0
    %p129 = por %p127, %p128
    %p130 = scmp.ne.s32.totalorder %s116, %s117
    %p131 = scmp.eq.s32.totalorder %s15, 1
    %p132 = por %p130, %p131
    %p134 = scmp.ne.s32.totalorder %s117, %s133
    %p135 = scmp.eq.s32.totalorder %s15, 0
    %p136 = por %p134, %p135
    %p137 = scmp.le.s32.totalorder 1, %s9
    %p138 = scmp.lt.s32.totalorder %s9, 3
    %p139 = pnand %p137, %p138
    %p140 = pneg %p139
    // Predicated region
    $region9: #{run.15} parent=5 // pred_check
      _
    $region10: #{run.15} parent=5 // pred_check_branch
      %142 = sbr.rel (%p139) target = $region12
    $region11: #{run.15} parent=5 // pred_region
      %s143 = ssub.s32 %s9, 1
      // Predicated region
      $region13: #{run.15} parent=11 // pred_check
        %p144 = pneg %p75
      $region14: #{run.15} parent=11 // pred_check_branch
        %146 = sbr.rel (%p144) target = $region16
      $region15: #{run.15} parent=11 // pred_region
        %p147 = scmp.lt.s32.totalorder %s19, 0
        %s148 = scalar_select %p147, %s19, 0
        %s149 = smul.addr %s148, 4
        %s150 = scalar_lea.vmem %s1, %s149
      $region16: #{run.15} parent=11 // pred_fallthru
        _
      // Predicated region
      $region17: #{run.15} parent=11 // pred_check
        %p151 = pneg %p101
      $region18: #{run.15} parent=11 // pred_check_branch
        %153 = sbr.rel (%p151) target = $region20
      $region19: #{run.15} parent=11 // pred_region
        %p154 = scmp.lt.s32.totalorder %s19, 0
        %s155 = scalar_select %p154, %s19, 0
        %s156 = scalar_lea.vmem %s2, %s155
      $region20: #{run.15} parent=11 // pred_fallthru
        _
    $region12: #{run.15} parent=5 // pred_fallthru
      _
    %p157 = scmp.lt.s32.totalorder %s9, 2
    // Predicated region
    $region21: #{run.15} parent=5 // pred_check
      %p158 = pneg %p157
    $region22: #{run.15} parent=5 // pred_check_branch
      %160 = sbr.rel (%p158) target = $region24
    $region23: #{run.15} parent=5 // pred_region
      // Predicated region
      $region25: #{run.15} parent=23 // pred_check
        %p161 = pneg %p43
      $region26: #{run.15} parent=23 // pred_check_branch
        %163 = sbr.rel (%p161) target = $region28
      $region27: #{run.15} parent=23 // pred_region
        %p164 = scmp.lt.s32.totalorder %s16, 1
        %s165 = scalar_select %p164, %s16, 1
        %p166 = scmp.lt.s32.totalorder %s17, 0
        %s167 = scalar_select %p166, %s17, 0
        %s168 = smul.addr %s165, 6
        %s169 = sadd.s32 %s167, %s168
        %s170 = smul.addr %s169, 8
        %s171 = scalar_lea.vmem %s0, %s170
      $region28: #{run.15} parent=23 // pred_fallthru
        _
    $region24: #{run.15} parent=5 // pred_fallthru
      _
    %p172 = scmp.le.s32.totalorder 1, %s9
    %p173 = scmp.lt.s32.totalorder %s9, 3
    %p174 = pnand %p172, %p173
    %p175 = pneg %p174
    // Predicated region
    $region29: #{run.15} parent=5 // pred_check
      _
    $region30: #{run.15} parent=5 // pred_check_branch
      %177 = sbr.rel (%p174) target = $region32
    $region31: #{run.15} parent=5 // pred_region
      %s178 = ssub.s32 %s9, 1
      %p179 = scmp.lt.s32.totalorder %s18, 1
      %s180 = scalar_select %p179, %s18, 1
      %p181 = scmp.lt.s32.totalorder %s19, 0
      %s182 = scalar_select %p181, %s19, 0
      %s183 = smul.addr %s180, 6
      %s184 = sadd.s32 %s182, %s183
      %s185 = smul.addr %s184, 8
      %s186 = scalar_lea.vmem %s0, %s185
      %p187 = pneg %p49
      %p188 = pneg %p46
      %p189 = scmp.lt.s32.totalorder %s19, 0
      %s190 = scalar_select %p189, %s19, 0
      %s191 = smul.addr %s190, 4
      %s192 = scalar_lea.vmem %s1, %s191
      %p193 = pneg %p75
      %p194 = pneg %p72
      %p195 = scmp.lt.s32.totalorder %s19, 0
      %s196 = scalar_select %p195, %s19, 0
      %s197 = scalar_lea.vmem %s2, %s196
      %p198 = pneg %p101
      %p199 = pneg %p98
      %p200 = pneg %p129
      %p201 = pneg %p126
      %p202 = scmp.lt.s32.totalorder %s18, 1
      %s203 = scalar_select %p202, %s18, 1
      %p204 = scmp.lt.s32.totalorder %s19, 0
      %s205 = scalar_select %p204, %s19, 0
      %s206 = smul.addr %s203, 4
      %s207 = sadd.s32 %s205, %s206
      %s208 = smul.addr %s207, 4
      %s209 = scalar_lea.vmem %s3, %s208
      %p210 = scmp.lt.s32.totalorder %s18, 1
      %s211 = scalar_select %p210, %s18, 1
      %p212 = scmp.lt.s32.totalorder %s19, 0
      %s213 = scalar_select %p212, %s19, 0
      %s214 = smul.addr %s211, 6
      %s215 = sadd.s32 %s213, %s214
      %s216 = smul.addr %s215, 8
      %s217 = scalar_lea.vmem %s0, %s216
      %p218 = scmp.lt.s32.totalorder %s19, 0
      %s219 = scalar_select %p218, %s19, 0
      %s220 = smul.addr %s219, 4
      %s221 = scalar_lea.vmem %s1, %s220
      %p222 = scmp.lt.s32.totalorder %s19, 0
      %s223 = scalar_select %p222, %s19, 0
      %s224 = scalar_lea.vmem %s2, %s223
      %p225 = scmp.lt.s32.totalorder %s18, 1
      %s226 = scalar_select %p225, %s18, 1
      %p227 = scmp.lt.s32.totalorder %s19, 0
      %s228 = scalar_select %p227, %s19, 0
      %s229 = smul.addr %s226, 4
      %s230 = sadd.s32 %s228, %s229
      %s231 = smul.addr %s230, 4
      %s232 = scalar_lea.vmem %s3, %s231
      %v233 = vld [vmem:[%s217] sm:$0x3f]
      %v234 = vld [vmem:[%s217 + $0x8] sm:$0x3f]
      %v235 = vld [vmem:[%s217 + $0x10] sm:$0x3f]
      %v236 = vld [vmem:[%s217 + $0x18] sm:$0x3f]
      %v237 = vld [vmem:[%s217 + $0x20] sm:$0x3f]
      %v238 = vld [vmem:[%s217 + $0x28] sm:$0x3f]
      %v239 = vld [vmem:[%s221] sm:$0x7]
      %v240 = vld [vmem:[%s221 + $0x4] sm:$0x7]
      %v241 = vld [vmem:[%s221 + $0x8] sm:$0x7]
      %v242 = vlaneseq
      %v243 = vshrl.u32 %v242, 7
      %v244 = vsub.s32 0, %v243
      %v245 = vrot.slane %v239, %v244
      %v246 = vmul.f32 %v233, %v245
      %v247 = vmul.f32 %v234, %v245
      %v248 = vmul.f32 %v235, %v245
      %v249 = vmul.f32 %v236, %v245
      %v250 = vadd.f32 %v246, 0.0
      %v251 = vadd.f32 %v247, 0.0
      %v252 = vadd.f32 %v248, 0.0
      %v253 = vadd.f32 %v249, 0.0
      %v254 = vlaneseq
      %v255 = vshrl.u32 %v254, 7
      %v256 = vsub.s32 1, %v255
      %v257 = vrot.slane %v239, %v256
      %v258 = vmul.f32 %v233, %v257
      %v259 = vmul.f32 %v234, %v257
      %v260 = vmul.f32 %v235, %v257
      %v261 = vmul.f32 %v236, %v257
      %v266 = vrot.slane %v258, 1
      %v267 = vrot.slane %v259, 1
      %v268 = vrot.slane %v260, 1
      %v269 = vrot.slane %v261, 1
      %v274 = vadd.f32 %v250, %v266
      %v275 = vadd.f32 %v251, %v267
      %v276 = vadd.f32 %v252, %v268
      %v277 = vadd.f32 %v253, %v269
      %v278 = vlaneseq
      %v279 = vshrl.u32 %v278, 7
      %v280 = vsub.s32 2, %v279
      %v281 = vrot.slane %v239, %v280
      %v282 = vmul.f32 %v233, %v281
      %v283 = vmul.f32 %v234, %v281
      %v284 = vmul.f32 %v235, %v281
      %v285 = vmul.f32 %v236, %v281
      %v290 = vrot.slane %v282, 2
      %v291 = vrot.slane %v283, 2
      %v292 = vrot.slane %v284, 2
      %v293 = vrot.slane %v285, 2
      %v298 = vadd.f32 %v274, %v290
      %v299 = vadd.f32 %v275, %v291
      %v300 = vadd.f32 %v276, %v292
      %v301 = vadd.f32 %v277, %v293
      %v302 = vlaneseq
      %v303 = vshrl.u32 %v302, 7
      %v304 = vsub.s32 0, %v303
      %v305 = vrot.slane %v240, %v304
      %v306 = vmul.f32 %v234, %v305
      %v307 = vmul.f32 %v235, %v305
      %v308 = vmul.f32 %v236, %v305
      %v309 = vmul.f32 %v237, %v305
      %v310 = vadd.f32 %v298, %v306
      %v311 = vadd.f32 %v299, %v307
      %v312 = vadd.f32 %v300, %v308
      %v313 = vadd.f32 %v301, %v309
      %v314 = vlaneseq
      %v315 = vshrl.u32 %v314, 7
      %v316 = vsub.s32 1, %v315
      %v317 = vrot.slane %v240, %v316
      %v318 = vmul.f32 %v234, %v317
      %v319 = vmul.f32 %v235, %v317
      %v320 = vmul.f32 %v236, %v317
      %v321 = vmul.f32 %v237, %v317
      %v326 = vrot.slane %v318, 1
      %v327 = vrot.slane %v319, 1
      %v328 = vrot.slane %v320, 1
      %v329 = vrot.slane %v321, 1
      %v334 = vadd.f32 %v310, %v326
      %v335 = vadd.f32 %v311, %v327
      %v336 = vadd.f32 %v312, %v328
      %v337 = vadd.f32 %v313, %v329
      %v338 = vlaneseq
      %v339 = vshrl.u32 %v338, 7
      %v340 = vsub.s32 2, %v339
      %v341 = vrot.slane %v240, %v340
      %v342 = vmul.f32 %v234, %v341
      %v343 = vmul.f32 %v235, %v341
      %v344 = vmul.f32 %v236, %v341
      %v345 = vmul.f32 %v237, %v341
      %v350 = vrot.slane %v342, 2
      %v351 = vrot.slane %v343, 2
      %v352 = vrot.slane %v344, 2
      %v353 = vrot.slane %v345, 2
      %v358 = vadd.f32 %v334, %v350
      %v359 = vadd.f32 %v335, %v351
      %v360 = vadd.f32 %v336, %v352
      %v361 = vadd.f32 %v337, %v353
      %v362 = vlaneseq
      %v363 = vshrl.u32 %v362, 7
      %v364 = vsub.s32 0, %v363
      %v365 = vrot.slane %v241, %v364
      %v366 = vmul.f32 %v235, %v365
      %v367 = vmul.f32 %v236, %v365
      %v368 = vmul.f32 %v237, %v365
      %v369 = vmul.f32 %v238, %v365
      %v370 = vadd.f32 %v358, %v366
      %v371 = vadd.f32 %v359, %v367
      %v372 = vadd.f32 %v360, %v368
      %v373 = vadd.f32 %v361, %v369
      %v374 = vlaneseq
      %v375 = vshrl.u32 %v374, 7
      %v376 = vsub.s32 1, %v375
      %v377 = vrot.slane %v241, %v376
      %v378 = vmul.f32 %v235, %v377
      %v379 = vmul.f32 %v236, %v377
      %v380 = vmul.f32 %v237, %v377
      %v381 = vmul.f32 %v238, %v377
      %v386 = vrot.slane %v378, 1
      %v387 = vrot.slane %v379, 1
      %v388 = vrot.slane %v380, 1
      %v389 = vrot.slane %v381, 1
      %v394 = vadd.f32 %v370, %v386
      %v395 = vadd.f32 %v371, %v387
      %v396 = vadd.f32 %v372, %v388
      %v397 = vadd.f32 %v373, %v389
      %v398 = vlaneseq
      %v399 = vshrl.u32 %v398, 7
      %v400 = vsub.s32 2, %v399
      %v401 = vrot.slane %v241, %v400
      %v402 = vmul.f32 %v235, %v401
      %v403 = vmul.f32 %v236, %v401
      %v404 = vmul.f32 %v237, %v401
      %v405 = vmul.f32 %v238, %v401
      %v410 = vrot.slane %v402, 2
      %v411 = vrot.slane %v403, 2
      %v412 = vrot.slane %v404, 2
      %v413 = vrot.slane %v405, 2
      %v418 = vadd.f32 %v394, %v410
      %v419 = vadd.f32 %v395, %v411
      %v420 = vadd.f32 %v396, %v412
      %v421 = vadd.f32 %v397, %v413
      %v422 = vld [vmem:[%s224] sm:$0x1]
      %v424 = vlaneseq
      %v425 = vshrl.u32 %v424, 7
      %v426 = vsub.s32 0, %v425
      %v427 = vrot.slane %v422, %v426
      %v429 = vadd.f32 %v418, %v427
      %v430 = vadd.f32 %v419, %v427
      %v431 = vadd.f32 %v420, %v427
      %v432 = vadd.f32 %v421, %v427
      %v433 = vmax.f32 %v429, 0.0
      %v434 = vmax.f32 %v430, 0.0
      %v435 = vmax.f32 %v431, 0.0
      %v436 = vmax.f32 %v432, 0.0
      %437 = vst [vmem:[%s232] sm:$0xf] %v433
      %438 = vst [vmem:[%s232 + $0x4] sm:$0xf] %v434
      %439 = vst [vmem:[%s232 + $0x8] sm:$0xf] %v435
      %440 = vst [vmem:[%s232 + $0xc] sm:$0xf] %v436
      %p441 = scmp.lt.s32.totalorder %s18, 1
      %s442 = scalar_select %p441, %s18, 1
      %p443 = scmp.lt.s32.totalorder %s19, 0
      %s444 = scalar_select %p443, %s19, 0
      %s445 = smul.addr %s442, 4
      %s446 = sadd.s32 %s444, %s445
      %s447 = smul.addr %s446, 4
      %s448 = scalar_lea.vmem %s3, %s447
      // Predicated region
      $region33: #{run.15} parent=31 // pred_check
        %p449 = pneg %p126
      $region34: #{run.15} parent=31 // pred_check_branch
        %451 = sbr.rel (%p449) target = $region36
      $region35: #{run.15} parent=31 // pred_region
        _
      $region36: #{run.15} parent=31 // pred_fallthru
        _
    $region32: #{run.15} parent=5 // pred_fallthru
      _
    %p452 = scmp.le.s32.totalorder 2, %s9
    // Predicated region
    $region37: #{run.15} parent=5 // pred_check
      %p453 = pneg %p452
    $region38: #{run.15} parent=5 // pred_check_branch
      %455 = sbr.rel (%p453) target = $region40
    $region39: #{run.15} parent=5 // pred_region
      %s456 = ssub.s32 %s9, 2
      // Predicated region
      $region41: #{run.15} parent=39 // pred_check
        %p457 = pneg %p132
      $region42: #{run.15} parent=39 // pred_check_branch
        %459 = sbr.rel (%p457) target = $region44
      $region43: #{run.15} parent=39 // pred_region
        %p460 = scmp.lt.s32.totalorder %s20, 1
        %s461 = scalar_select %p460, %s20, 1
        %p462 = scmp.lt.s32.totalorder %s21, 0
        %s463 = scalar_select %p462, %s21, 0
        %s464 = smul.addr %s461, 4
        %s465 = sadd.s32 %s463, %s464
        %s466 = smul.addr %s465, 4
        %s467 = scalar_lea.vmem %s3, %s466
      $region44: #{run.15} parent=39 // pred_fallthru
        _
    $region40: #{run.15} parent=5 // pred_fallthru
      _
  $region6: #{run.15} parent=0 // loop_footer
    %s13 = sadd.s32 1, %s9
  $region7: #{run.15} parent=0 // loop_footer_branch
    %8 = sbr.rel target = $region3
  $region8: #{run.15} parent=0 // loop_exit
    _

// kernel: run.16
$region0: #{run.16}
  #allocation0 [shape = 'u32[]', space=smem, size = 0x4, offset = 0x4, fixed_abs, tag = 'smem constant byte address 0x4 - core index']
  #allocation1 [shape = 'u32[144,128]{1,0:T(1,128)}', space=vmem, size = 0x12000, scoped, tag = 'internal scratch']
  %s0 = inlined_call_operand.vmem [shape: f32[8,128], index: 0, kind: input, shape index: {}]
  %s1 = inlined_call_operand.vmem [shape: bf16[128,128], index: 1, kind: input, shape index: {}]
  %s2 = inlined_call_operand.vmem [shape: f32[1,128], index: 2, kind: input, shape index: {}]
  %s3 = inlined_call_operand.vmem [shape: f32[8,128], index: 3, kind: output, shape index: {}]
  %s4 = sld [smem:[#allocation0]]
  $region22: #{run.16} parent=0
    _
  %s6 = ssub.s32 1, %s4
  %s7 = scalar_select 0, %s6, %s4
  // Predicated region
  $region2: #{run.16} parent=0 // pred_check
    _
  $region3: #{run.16} parent=0 // pred_check_branch
    %9 = sbr.rel (0) target = $region5
  $region4: #{run.16} parent=0 // pred_region
    _
  $region5: #{run.16} parent=0 // pred_fallthru
    _
  // Predicated region
  $region6: #{run.16} parent=0 // pred_check
    _
  $region7: #{run.16} parent=0 // pred_check_branch
    %11 = sbr.rel (0) target = $region9
  $region8: #{run.16} parent=0 // pred_region
    _
  $region9: #{run.16} parent=0 // pred_fallthru
    _
  // Predicated region
  $region10: #{run.16} parent=0 // pred_check
    _
  $region11: #{run.16} parent=0 // pred_check_branch
    %13 = sbr.rel (0) target = $region13
  $region12: #{run.16} parent=0 // pred_region
    _
  $region13: #{run.16} parent=0 // pred_fallthru
    _
  %v15 = vld [vmem:[%s0] sm:$0xff]
  %v16 = vpack.c.bf16 %v15, %v15
  %v17 = vld [vmem:[%s1] sm:$0xf]
  %v18 = vld [vmem:[%s1 + $0x4] sm:$0xf]
  %v19 = vld [vmem:[%s1 + $0x8] sm:$0xf]
  %v20 = vld [vmem:[%s1 + $0xc] sm:$0xf]
  %v21 = vld [vmem:[%s1 + $0x10] sm:$0xf]
  %v22 = vld [vmem:[%s1 + $0x14] sm:$0xf]
  %v23 = vld [vmem:[%s1 + $0x18] sm:$0xf]
  %v24 = vld [vmem:[%s1 + $0x1c] sm:$0xf]
  %v25 = vld [vmem:[%s1 + $0x20] sm:$0xf]
  %v26 = vld [vmem:[%s1 + $0x24] sm:$0xf]
  %v27 = vld [vmem:[%s1 + $0x28] sm:$0xf]
  %v28 = vld [vmem:[%s1 + $0x2c] sm:$0xf]
  %v29 = vld [vmem:[%s1 + $0x30] sm:$0xf]
  %v30 = vld [vmem:[%s1 + $0x34] sm:$0xf]
  %v31 = vld [vmem:[%s1 + $0x38] sm:$0xf]
  %v32 = vld [vmem:[%s1 + $0x3c] sm:$0xf]
  %v33 = vld [vmem:[%s2] sm:$0x1]
  %v35 = vlaneseq
  %v36 = vshrl.u32 %v35, 7
  %v37 = vsub.s32 0, %v36
  %v38 = vrot.slane %v33, %v37
  %v56 = vunpack.c.l.b16 %v17
  %v57 = vunpack.c.l.b16 %v18
  %v58 = vunpack.c.l.b16 %v19
  %v59 = vunpack.c.l.b16 %v20
  %v60 = vunpack.c.l.b16 %v21
  %v61 = vunpack.c.l.b16 %v22
  %v62 = vunpack.c.l.b16 %v23
  %v63 = vunpack.c.l.b16 %v24
  %v64 = vunpack.c.l.b16 %v25
  %v65 = vunpack.c.l.b16 %v26
  %v66 = vunpack.c.l.b16 %v27
  %v67 = vunpack.c.l.b16 %v28
  %v68 = vunpack.c.l.b16 %v29
  %v69 = vunpack.c.l.b16 %v30
  %v70 = vunpack.c.l.b16 %v31
  %v71 = vunpack.c.l.b16 %v32
  %v72 = vpack.c.b16 %v57, %v56
  %v73 = vpack.c.b16 %v59, %v58
  %v74 = vpack.c.b16 %v61, %v60
  %v75 = vpack.c.b16 %v63, %v62
  %v76 = vpack.c.b16 %v65, %v64
  %v77 = vpack.c.b16 %v67, %v66
  %v78 = vpack.c.b16 %v69, %v68
  %v79 = vpack.c.b16 %v71, %v70
  %88 = vmatprep.subr.bf16.mxu0 0
  %89 = vmatpush1.bf16.msra.mxu0 %v79
  %90 = vmatprep.subr.bf16.mxu0 0
  %91 = vmatpush1.bf16.msra.mxu0 %v78
  %92 = vmatprep.subr.bf16.mxu0 0
  %93 = vmatpush1.bf16.msra.mxu0 %v77
  %94 = vmatprep.subr.bf16.mxu0 0
  %95 = vmatpush1.bf16.msra.mxu0 %v76
  %96 = vmatprep.subr.bf16.mxu0 0
  %97 = vmatpush1.bf16.msra.mxu0 %v75
  %98 = vmatprep.subr.bf16.mxu0 0
  %99 = vmatpush1.bf16.msra.mxu0 %v74
  %100 = vmatprep.subr.bf16.mxu0 0
  %101 = vmatpush1.bf16.msra.mxu0 %v73
  %102 = vmatprep.subr.bf16.mxu0 0
  %103 = vmatpush1.bf16.msra.mxu0 %v72
  %104 = vmatprep.subr.bf16.mxu0 0
  %105 = vmatpush2.bf16.msra.mxu0 0
  %106 = vmatprep.subr.bf16.mxu0 0
  %107 = vmatpush2.bf16.msra.mxu0 0
  %108 = vmatprep.subr.bf16.mxu0 0
  %109 = vmatpush2.bf16.msra.mxu0 0
  %110 = vmatprep.subr.bf16.mxu0 0
  %111 = vmatpush2.bf16.msra.mxu0 0
  %112 = vmatprep.subr.bf16.mxu0 0
  %113 = vmatpush2.bf16.msra.mxu0 0
  %114 = vmatprep.subr.bf16.mxu0 0
  %115 = vmatpush2.bf16.msra.mxu0 0
  %116 = vmatprep.subr.bf16.mxu0 0
  %117 = vmatpush2.bf16.msra.mxu0 0
  %118 = vmatprep.subr.bf16.mxu0 0
  %119 = vmatpush2.bf16.msra.mxu0 0
  %120 = vmatprep.mubr.bf16.mxu0 0
  %121 = vmatmul.mubr.bf16.gmra.mxu0 %v16
  %v122 = vpop.f32.mrf.mxu0
  %v123 = vadd.f32 %v38, %v122
  %v124 = vpop.f32.mrf.mxu0
  %v125 = vpop.f32.mrf.mxu0
  %v126 = vpop.f32.mrf.mxu0
  %127 = vdwg.mxu0
  %v128 = vmax.f32 %v123, 0.0
  %129 = vst [vmem:[%s3] sm:$0xff] %v128
  // Predicated region
  $region14: #{run.16} parent=0 // pred_check
    _
  $region15: #{run.16} parent=0 // pred_check_branch
    %131 = sbr.rel (0) target = $region17
  $region16: #{run.16} parent=0 // pred_region
    _
  $region17: #{run.16} parent=0 // pred_fallthru
    _
  // Predicated region
  $region18: #{run.16} parent=0 // pred_check
    _
  $region19: #{run.16} parent=0 // pred_check_branch
    %133 = sbr.rel (0) target = $region21
  $region20: #{run.16} parent=0 // pred_region
    _
  $region21: #{run.16} parent=0 // pred_fallthru
    _

// kernel: run.17
$region0: #{run.17}
  #allocation0 [shape = 'u32[]', space=smem, size = 0x4, offset = 0x4, fixed_abs, tag = 'smem constant byte address 0x4 - core index']
  #allocation1 [shape = 'u32[144,128]{1,0:T(1,128)}', space=vmem, size = 0x12000, scoped, tag = 'internal scratch']
  %s0 = inlined_call_operand.vmem [shape: f32[2,4,4,128], index: 0, kind: input, shape index: {}]
  %s1 = inlined_call_operand.vmem [shape: f32[3,3,128], index: 1, kind: input, shape index: {}]
  %s2 = inlined_call_operand.vmem [shape: f32[1,128], index: 2, kind: input, shape index: {}]
  %s3 = inlined_call_operand.vmem [shape: f32[2,2,2,128], index: 3, kind: output, shape index: {}]
  %s4 = sld [smem:[#allocation0]]
  $region45: #{run.17} parent=0
    _
  %s6 = ssub.s32 1, %s4
  %s7 = scalar_select 0, %s6, %s4
  loop: start=0, step=1, limit=4
  $region2: #{run.17} parent=0 // loop_pre_header
    _
  $region3: #{run.17} parent=0 // loop_header
    %s9 = sphi 0, %s13
    %p10 = scmp.ge.s32.totalorder %s9, 4
    %s16 = sphi 0, %s28
    %s17 = sphi 0, %s24
    %s18 = sphi 0, %s16
    %s19 = sphi 0, %s17
    %s20 = sphi 0, %s18
    %s21 = sphi 0, %s19
    %s33 = sphi 0, %s35
    %s36 = sphi 0, %s33
    %s37 = sphi 0, %s36
    %s53 = sphi 0, %s37
    %s59 = sphi 0, %s61
    %s62 = sphi 0, %s59
    %s63 = sphi 0, %s62
    %s79 = sphi 0, %s63
    %s85 = sphi 0, %s87
    %s88 = sphi 0, %s85
    %s89 = sphi 0, %s88
    %s105 = sphi 0, %s89
    %s113 = sphi 0, %s115
    %s116 = sphi 0, %s113
    %s117 = sphi 0, %s116
    %s133 = sphi 0, %s117
  $region4: #{run.17} parent=0 // loop_header_branch
    %12 = sbr.rel (%p10) target = $region8
  $region5: #{run.17} parent=0 // loop_body
    %s14 = ssub.s32 %s9, 1
    %s15 = ssub.s32 %s9, 2
    %s22 = sadd.s32 1, %s17
    %p23 = scmp.ge.s32.totalorder %s22, 1
    %s24 = scalar_select %p23, 0, %s22
    %s25 = sadd.s32 1, %s16
    %s26 = scalar_select %p23, %s25, %s16
    %p27 = scmp.ge.s32.totalorder %s26, 2
    %s28 = scalar_select %p27, 0, %s26
    %s29 = ssub.s32 %s16, %s28
    %s30 = ssub.s32 %s17, %s24
    %s31 = sor.u32 %s29, %s30
    %p32 = scmp.eq.s32.totalorder %s31, 0
    %s34 = sadd.s32 %s33, 1
    %s35 = scalar_select %p32, %s33, %s34
    %p38 = pneg %p32
    %p39 = scmp.eq.s32.totalorder %s9, 1
    %p40 = por %p38, %p39
    %p41 = scmp.ne.s32.totalorder %s33, %s36
    %p42 = scmp.eq.s32.totalorder %s9, 0
    %p43 = por %p41, %p42
    %p44 = scmp.ne.s32.totalorder %s33, %s36
    %p45 = scmp.eq.s32.totalorder %s14, 1
    %p46 = por %p44, %p45
    %p47 = scmp.ne.s32.totalorder %s36, %s37
    %p48 = scmp.eq.s32.totalorder %s14, 0
    %p49 = por %p47, %p48
    %p50 = scmp.ne.s32.totalorder %s36, %s37
    %p51 = scmp.eq.s32.totalorder %s15, 1
    %p52 = por %p50, %p51
    %p54 = scmp.ne.s32.totalorder %s37, %s53
    %p55 = scmp.eq.s32.totalorder %s15, 0
    %p56 = por %p54, %p55
    %s57 = ssub.s32 %s17, %s24
    %p58 = scmp.eq.s32.totalorder %s57, 0
    %s60 = sadd.s32 %s59, 1
    %s61 = scalar_select %p58, %s59, %s60
    %p64 = pneg %p58
    %p65 = scmp.eq.s32.totalorder %s9, 1
    %p66 = por %p64, %p65
    %p67 = scmp.ne.s32.totalorder %s59, %s62
    %p68 = scmp.eq.s32.totalorder %s9, 0
    %p69 = por %p67, %p68
    %p70 = scmp.ne.s32.totalorder %s59, %s62
    %p71 = scmp.eq.s32.totalorder %s14, 1
    %p72 = por %p70, %p71
    %p73 = scmp.ne.s32.totalorder %s62, %s63
    %p74 = scmp.eq.s32.totalorder %s14, 0
    %p75 = por %p73, %p74
    %p76 = scmp.ne.s32.totalorder %s62, %s63
    %p77 = scmp.eq.s32.totalorder %s15, 1
    %p78 = por %p76, %p77
    %p80 = scmp.ne.s32.totalorder %s63, %s79
    %p81 = scmp.eq.s32.totalorder %s15, 0
    %p82 = por %p80, %p81
    %s83 = ssub.s32 %s17, %s24
    %p84 = scmp.eq.s32.totalorder %s83, 0
    %s86 = sadd.s32 %s85, 1
    %s87 = scalar_select %p84, %s85, %s86
    %p90 = pneg %p84
    %p91 = scmp.eq.s32.totalorder %s9, 1
    %p92 = por %p90, %p91
    %p93 = scmp.ne.s32.totalorder %s85, %s88
    %p94 = scmp.eq.s32.totalorder %s9, 0
    %p95 = por %p93, %p94
    %p96 = scmp.ne.s32.totalorder %s85, %s88
    %p97 = scmp.eq.s32.totalorder %s14, 1
    %p98 = por %p96, %p97
    %p99 = scmp.ne.s32.totalorder %s88, %s89
    %p100 = scmp.eq.s32.totalorder %s14, 0
    %p101 = por %p99, %p100
    %p102 = scmp.ne.s32.totalorder %s88, %s89
    %p103 = scmp.eq.s32.totalorder %s15, 1
    %p104 = por %p102, %p103
    %p106 = scmp.ne.s32.totalorder %s89, %s105
    %p107 = scmp.eq.s32.totalorder %s15, 0
    %p108 = por %p106, %p107
    %s109 = ssub.s32 %s16, %s28
    %s110 = ssub.s32 %s17, %s24
    %s111 = sor.u32 %s109, %s110
    %p112 = scmp.eq.s32.totalorder %s111, 0
    %s114 = sadd.s32 %s113, 1
    %s115 = scalar_select %p112, %s113, %s114
    %p118 = pneg %p112
    %p119 = scmp.eq.s32.totalorder %s9, 1
    %p120 = por %p118, %p119
    %p121 = scmp.ne.s32.totalorder %s113, %s116
    %p122 = scmp.eq.s32.totalorder %s9, 0
    %p123 = por %p121, %p122
    %p124 = scmp.ne.s32.totalorder %s113, %s116
    %p125 = scmp.eq.s32.totalorder %s14, 1
    %p126 = por %p124, %p125
    %p127 = scmp.ne.s32.totalorder %s116, %s117
    %p128 = scmp.eq.s32.totalorder %s14, 0
    %p129 = por %p127, %p128
    %p130 = scmp.ne.s32.totalorder %s116, %s117
    %p131 = scmp.eq.s32.totalorder %s15, 1
    %p132 = por %p130, %p131
    %p134 = scmp.ne.s32.totalorder %s117, %s133
    %p135 = scmp.eq.s32.totalorder %s15, 0
    %p136 = por %p134, %p135
    %p137 = scmp.le.s32.totalorder 1, %s9
    %p138 = scmp.lt.s32.totalorder %s9, 3
    %p139 = pnand %p137, %p138
    %p140 = pneg %p139
    // Predicated region
    $region9: #{run.17} parent=5 // pred_check
      _
    $region10: #{run.17} parent=5 // pred_check_branch
      %142 = sbr.rel (%p139) target = $region12
    $region11: #{run.17} parent=5 // pred_region
      %s143 = ssub.s32 %s9, 1
      // Predicated region
      $region13: #{run.17} parent=11 // pred_check
        %p144 = pneg %p75
      $region14: #{run.17} parent=11 // pred_check_branch
        %146 = sbr.rel (%p144) target = $region16
      $region15: #{run.17} parent=11 // pred_region
        %p147 = scmp.lt.s32.totalorder %s19, 0
        %s148 = scalar_select %p147, %s19, 0
        %s149 = smul.addr %s148, 4
        %s150 = scalar_lea.vmem %s1, %s149
      $region16: #{run.17} parent=11 // pred_fallthru
        _
      // Predicated region
      $region17: #{run.17} parent=11 // pred_check
        %p151 = pneg %p101
      $region18: #{run.17} parent=11 // pred_check_branch
        %153 = sbr.rel (%p151) target = $region20
      $region19: #{run.17} parent=11 // pred_region
        %p154 = scmp.lt.s32.totalorder %s19, 0
        %s155 = scalar_select %p154, %s19, 0
        %s156 = scalar_lea.vmem %s2, %s155
      $region20: #{run.17} parent=11 // pred_fallthru
        _
    $region12: #{run.17} parent=5 // pred_fallthru
      _
    %p157 = scmp.lt.s32.totalorder %s9, 2
    // Predicated region
    $region21: #{run.17} parent=5 // pred_check
      %p158 = pneg %p157
    $region22: #{run.17} parent=5 // pred_check_branch
      %160 = sbr.rel (%p158) target = $region24
    $region23: #{run.17} parent=5 // pred_region
      // Predicated region
      $region25: #{run.17} parent=23 // pred_check
        %p161 = pneg %p43
      $region26: #{run.17} parent=23 // pred_check_branch
        %163 = sbr.rel (%p161) target = $region28
      $region27: #{run.17} parent=23 // pred_region
        %p164 = scmp.lt.s32.totalorder %s16, 1
        %s165 = scalar_select %p164, %s16, 1
        %p166 = scmp.lt.s32.totalorder %s17, 0
        %s167 = scalar_select %p166, %s17, 0
        %s168 = smul.addr %s165, 4
        %s169 = sadd.s32 %s167, %s168
        %s170 = smul.addr %s169, 4
        %s171 = scalar_lea.vmem %s0, %s170
      $region28: #{run.17} parent=23 // pred_fallthru
        _
    $region24: #{run.17} parent=5 // pred_fallthru
      _
    %p172 = scmp.le.s32.totalorder 1, %s9
    %p173 = scmp.lt.s32.totalorder %s9, 3
    %p174 = pnand %p172, %p173
    %p175 = pneg %p174
    // Predicated region
    $region29: #{run.17} parent=5 // pred_check
      _
    $region30: #{run.17} parent=5 // pred_check_branch
      %177 = sbr.rel (%p174) target = $region32
    $region31: #{run.17} parent=5 // pred_region
      %s178 = ssub.s32 %s9, 1
      %p179 = scmp.lt.s32.totalorder %s18, 1
      %s180 = scalar_select %p179, %s18, 1
      %p181 = scmp.lt.s32.totalorder %s19, 0
      %s182 = scalar_select %p181, %s19, 0
      %s183 = smul.addr %s180, 4
      %s184 = sadd.s32 %s182, %s183
      %s185 = smul.addr %s184, 4
      %s186 = scalar_lea.vmem %s0, %s185
      %p187 = pneg %p49
      %p188 = pneg %p46
      %p189 = scmp.lt.s32.totalorder %s19, 0
      %s190 = scalar_select %p189, %s19, 0
      %s191 = smul.addr %s190, 4
      %s192 = scalar_lea.vmem %s1, %s191
      %p193 = pneg %p75
      %p194 = pneg %p72
      %p195 = scmp.lt.s32.totalorder %s19, 0
      %s196 = scalar_select %p195, %s19, 0
      %s197 = scalar_lea.vmem %s2, %s196
      %p198 = pneg %p101
      %p199 = pneg %p98
      %p200 = pneg %p129
      %p201 = pneg %p126
      %p202 = scmp.lt.s32.totalorder %s18, 1
      %s203 = scalar_select %p202, %s18, 1
      %p204 = scmp.lt.s32.totalorder %s19, 0
      %s205 = scalar_select %p204, %s19, 0
      %s206 = smul.addr %s203, 2
      %s207 = sadd.s32 %s205, %s206
      %s208 = smul.addr %s207, 2
      %s209 = scalar_lea.vmem %s3, %s208
      %p210 = scmp.lt.s32.totalorder %s18, 1
      %s211 = scalar_select %p210, %s18, 1
      %p212 = scmp.lt.s32.totalorder %s19, 0
      %s213 = scalar_select %p212, %s19, 0
      %s214 = smul.addr %s211, 4
      %s215 = sadd.s32 %s213, %s214
      %s216 = smul.addr %s215, 4
      %s217 = scalar_lea.vmem %s0, %s216
      %p218 = scmp.lt.s32.totalorder %s19, 0
      %s219 = scalar_select %p218, %s19, 0
      %s220 = smul.addr %s219, 4
      %s221 = scalar_lea.vmem %s1, %s220
      %p222 = scmp.lt.s32.totalorder %s19, 0
      %s223 = scalar_select %p222, %s19, 0
      %s224 = scalar_lea.vmem %s2, %s223
      %p225 = scmp.lt.s32.totalorder %s18, 1
      %s226 = scalar_select %p225, %s18, 1
      %p227 = scmp.lt.s32.totalorder %s19, 0
      %s228 = scalar_select %p227, %s19, 0
      %s229 = smul.addr %s226, 2
      %s230 = sadd.s32 %s228, %s229
      %s231 = smul.addr %s230, 2
      %s232 = scalar_lea.vmem %s3, %s231
      %v233 = vld [vmem:[%s217] sm:$0xf]
      %v234 = vld [vmem:[%s217 + $0x4] sm:$0xf]
      %v235 = vld [vmem:[%s217 + $0x8] sm:$0xf]
      %v236 = vld [vmem:[%s217 + $0xc] sm:$0xf]
      %v237 = vld [vmem:[%s221] sm:$0x7]
      %v238 = vld [vmem:[%s221 + $0x4] sm:$0x7]
      %v239 = vld [vmem:[%s221 + $0x8] sm:$0x7]
      %v240 = vlaneseq
      %v241 = vshrl.u32 %v240, 7
      %v242 = vsub.s32 0, %v241
      %v243 = vrot.slane %v237, %v242
      %v244 = vmul.f32 %v233, %v243
      %v245 = vmul.f32 %v234, %v243
      %v246 = vadd.f32 %v244, 0.0
      %v247 = vadd.f32 %v245, 0.0
      %v248 = vlaneseq
      %v249 = vshrl.u32 %v248, 7
      %v250 = vsub.s32 1, %v249
      %v251 = vrot.slane %v237, %v250
      %v252 = vmul.f32 %v233, %v251
      %v253 = vmul.f32 %v234, %v251
      %v256 = vrot.slane %v252, 1
      %v257 = vrot.slane %v253, 1
      %v260 = vadd.f32 %v246, %v256
      %v261 = vadd.f32 %v247, %v257
      %v262 = vlaneseq
      %v263 = vshrl.u32 %v262, 7
      %v264 = vsub.s32 2, %v263
      %v265 = vrot.slane %v237, %v264
      %v266 = vmul.f32 %v233, %v265
      %v267 = vmul.f32 %v234, %v265
      %v270 = vrot.slane %v266, 2
      %v271 = vrot.slane %v267, 2
      %v274 = vadd.f32 %v260, %v270
      %v275 = vadd.f32 %v261, %v271
      %v276 = vlaneseq
      %v277 = vshrl.u32 %v276, 7
      %v278 = vsub.s32 0, %v277
      %v279 = vrot.slane %v238, %v278
      %v280 = vmul.f32 %v234, %v279
      %v281 = vmul.f32 %v235, %v279
      %v282 = vadd.f32 %v274, %v280
      %v283 = vadd.f32 %v275, %v281
      %v284 = vlaneseq
      %v285 = vshrl.u32 %v284, 7
      %v286 = vsub.s32 1, %v285
      %v287 = vrot.slane %v238, %v286
      %v288 = vmul.f32 %v234, %v287
      %v289 = vmul.f32 %v235, %v287
      %v292 = vrot.slane %v288, 1
      %v293 = vrot.slane %v289, 1
      %v296 = vadd.f32 %v282, %v292
      %v297 = vadd.f32 %v283, %v293
      %v298 = vlaneseq
      %v299 = vshrl.u32 %v298, 7
      %v300 = vsub.s32 2, %v299
      %v301 = vrot.slane %v238, %v300
      %v302 = vmul.f32 %v234, %v301
      %v303 = vmul.f32 %v235, %v301
      %v306 = vrot.slane %v302, 2
      %v307 = vrot.slane %v303, 2
      %v310 = vadd.f32 %v296, %v306
      %v311 = vadd.f32 %v297, %v307
      %v312 = vlaneseq
      %v313 = vshrl.u32 %v312, 7
      %v314 = vsub.s32 0, %v313
      %v315 = vrot.slane %v239, %v314
      %v316 = vmul.f32 %v235, %v315
      %v317 = vmul.f32 %v236, %v315
      %v318 = vadd.f32 %v310, %v316
      %v319 = vadd.f32 %v311, %v317
      %v320 = vlaneseq
      %v321 = vshrl.u32 %v320, 7
      %v322 = vsub.s32 1, %v321
      %v323 = vrot.slane %v239, %v322
      %v324 = vmul.f32 %v235, %v323
      %v325 = vmul.f32 %v236, %v323
      %v328 = vrot.slane %v324, 1
      %v329 = vrot.slane %v325, 1
      %v332 = vadd.f32 %v318, %v328
      %v333 = vadd.f32 %v319, %v329
      %v334 = vlaneseq
      %v335 = vshrl.u32 %v334, 7
      %v336 = vsub.s32 2, %v335
      %v337 = vrot.slane %v239, %v336
      %v338 = vmul.f32 %v235, %v337
      %v339 = vmul.f32 %v236, %v337
      %v342 = vrot.slane %v338, 2
      %v343 = vrot.slane %v339, 2
      %v346 = vadd.f32 %v332, %v342
      %v347 = vadd.f32 %v333, %v343
      %v348 = vld [vmem:[%s224] sm:$0x1]
      %v350 = vlaneseq
      %v351 = vshrl.u32 %v350, 7
      %v352 = vsub.s32 0, %v351
      %v353 = vrot.slane %v348, %v352
      %v355 = vadd.f32 %v346, %v353
      %v356 = vadd.f32 %v347, %v353
      %v357 = vmax.f32 %v355, 0.0
      %v358 = vmax.f32 %v356, 0.0
      %359 = vst [vmem:[%s232] sm:$0x3] %v357
      %360 = vst [vmem:[%s232 + $0x2] sm:$0x3] %v358
      %p361 = scmp.lt.s32.totalorder %s18, 1
      %s362 = scalar_select %p361, %s18, 1
      %p363 = scmp.lt.s32.totalorder %s19, 0
      %s364 = scalar_select %p363, %s19, 0
      %s365 = smul.addr %s362, 2
      %s366 = sadd.s32 %s364, %s365
      %s367 = smul.addr %s366, 2
      %s368 = scalar_lea.vmem %s3, %s367
      // Predicated region
      $region33: #{run.17} parent=31 // pred_check
        %p369 = pneg %p126
      $region34: #{run.17} parent=31 // pred_check_branch
        %371 = sbr.rel (%p369) target = $region36
      $region35: #{run.17} parent=31 // pred_region
        _
      $region36: #{run.17} parent=31 // pred_fallthru
        _
    $region32: #{run.17} parent=5 // pred_fallthru
      _
    %p372 = scmp.le.s32.totalorder 2, %s9
    // Predicated region
    $region37: #{run.17} parent=5 // pred_check
      %p373 = pneg %p372
    $region38: #{run.17} parent=5 // pred_check_branch
      %375 = sbr.rel (%p373) target = $region40
    $region39: #{run.17} parent=5 // pred_region
      %s376 = ssub.s32 %s9, 2
      // Predicated region
      $region41: #{run.17} parent=39 // pred_check
        %p377 = pneg %p132
      $region42: #{run.17} parent=39 // pred_check_branch
        %379 = sbr.rel (%p377) target = $region44
      $region43: #{run.17} parent=39 // pred_region
        %p380 = scmp.lt.s32.totalorder %s20, 1
        %s381 = scalar_select %p380, %s20, 1
        %p382 = scmp.lt.s32.totalorder %s21, 0
        %s383 = scalar_select %p382, %s21, 0
        %s384 = smul.addr %s381, 2
        %s385 = sadd.s32 %s383, %s384
        %s386 = smul.addr %s385, 2
        %s387 = scalar_lea.vmem %s3, %s386
      $region44: #{run.17} parent=39 // pred_fallthru
        _
    $region40: #{run.17} parent=5 // pred_fallthru
      _
  $region6: #{run.17} parent=0 // loop_footer
    %s13 = sadd.s32 1, %s9
  $region7: #{run.17} parent=0 // loop_footer_branch
    %8 = sbr.rel target = $region3
  $region8: #{run.17} parent=0 // loop_exit
    _

// kernel: run.19
$region0: #{run.19}
  #allocation0 [shape = 'u32[]', space=smem, size = 0x4, offset = 0x4, fixed_abs, tag = 'smem constant byte address 0x4 - core index']
  #allocation1 [shape = 'u32[144,128]{1,0:T(1,128)}', space=vmem, size = 0x12000, scoped, tag = 'internal scratch']
  %s0 = inlined_call_operand.vmem [shape: f32[8,1,128], index: 0, kind: input, shape index: {}]
  %s1 = inlined_call_operand.vmem [shape: bf16[128,128], index: 1, kind: input, shape index: {}]
  %s2 = inlined_call_operand.vmem [shape: f32[1,128], index: 2, kind: input, shape index: {}]
  %s3 = inlined_call_operand.vmem [shape: f32[8,128], index: 3, kind: output, shape index: {}]
  %s4 = sld [smem:[#allocation0]]
  $region22: #{run.19} parent=0
    _
  %s6 = ssub.s32 1, %s4
  %s7 = scalar_select 0, %s6, %s4
  // Predicated region
  $region2: #{run.19} parent=0 // pred_check
    _
  $region3: #{run.19} parent=0 // pred_check_branch
    %9 = sbr.rel (0) target = $region5
  $region4: #{run.19} parent=0 // pred_region
    _
  $region5: #{run.19} parent=0 // pred_fallthru
    _
  // Predicated region
  $region6: #{run.19} parent=0 // pred_check
    _
  $region7: #{run.19} parent=0 // pred_check_branch
    %11 = sbr.rel (0) target = $region9
  $region8: #{run.19} parent=0 // pred_region
    _
  $region9: #{run.19} parent=0 // pred_fallthru
    _
  // Predicated region
  $region10: #{run.19} parent=0 // pred_check
    _
  $region11: #{run.19} parent=0 // pred_check_branch
    %13 = sbr.rel (0) target = $region13
  $region12: #{run.19} parent=0 // pred_region
    _
  $region13: #{run.19} parent=0 // pred_fallthru
    _
  %v15 = vld [vmem:[%s0] sm:$0x1]
  %v16 = vld [vmem:[%s0 + $0x1] sm:$0x1]
  %v17 = vld [vmem:[%s0 + $0x2] sm:$0x1]
  %v18 = vld [vmem:[%s0 + $0x3] sm:$0x1]
  %v19 = vld [vmem:[%s0 + $0x4] sm:$0x1]
  %v20 = vld [vmem:[%s0 + $0x5] sm:$0x1]
  %v21 = vld [vmem:[%s0 + $0x6] sm:$0x1]
  %v22 = vld [vmem:[%s0 + $0x7] sm:$0x1]
  %v23 = vadd.f32 %v15, 0.0
  %v24 = vadd.f32 %v16, 0.0
  %v25 = vadd.f32 %v17, 0.0
  %v26 = vadd.f32 %v18, 0.0
  %v27 = vadd.f32 %v19, 0.0
  %v28 = vadd.f32 %v20, 0.0
  %v29 = vadd.f32 %v21, 0.0
  %v30 = vadd.f32 %v22, 0.0
  %v31 = vpack.c.bf16 %v23, %v23
  %v32 = vpack.c.bf16 %v24, %v24
  %v33 = vpack.c.bf16 %v25, %v25
  %v34 = vpack.c.bf16 %v26, %v26
  %v35 = vpack.c.bf16 %v27, %v27
  %v36 = vpack.c.bf16 %v28, %v28
  %v37 = vpack.c.bf16 %v29, %v29
  %v38 = vpack.c.bf16 %v30, %v30
  %v39 = vld [vmem:[%s1] sm:$0xf]
  %v40 = vld [vmem:[%s1 + $0x4] sm:$0xf]
  %v41 = vld [vmem:[%s1 + $0x8] sm:$0xf]
  %v42 = vld [vmem:[%s1 + $0xc] sm:$0xf]
  %v43 = vld [vmem:[%s1 + $0x10] sm:$0xf]
  %v44 = vld [vmem:[%s1 + $0x14] sm:$0xf]
  %v45 = vld [vmem:[%s1 + $0x18] sm:$0xf]
  %v46 = vld [vmem:[%s1 + $0x1c] sm:$0xf]
  %v47 = vld [vmem:[%s1 + $0x20] sm:$0xf]
  %v48 = vld [vmem:[%s1 + $0x24] sm:$0xf]
  %v49 = vld [vmem:[%s1 + $0x28] sm:$0xf]
  %v50 = vld [vmem:[%s1 + $0x2c] sm:$0xf]
  %v51 = vld [vmem:[%s1 + $0x30] sm:$0xf]
  %v52 = vld [vmem:[%s1 + $0x34] sm:$0xf]
  %v53 = vld [vmem:[%s1 + $0x38] sm:$0xf]
  %v54 = vld [vmem:[%s1 + $0x3c] sm:$0xf]
  %v55 = vld [vmem:[%s2] sm:$0x1]
  %v57 = vlaneseq
  %v58 = vshrl.u32 %v57, 7
  %v59 = vsub.s32 0, %v58
  %v60 = vrot.slane %v55, %v59
  %v70 = vunpack.c.l.b16 %v31
  %v71 = vunpack.c.l.b16 %v32
  %v72 = vunpack.c.l.b16 %v33
  %v73 = vunpack.c.l.b16 %v34
  %v74 = vunpack.c.l.b16 %v35
  %v75 = vunpack.c.l.b16 %v36
  %v76 = vunpack.c.l.b16 %v37
  %v77 = vunpack.c.l.b16 %v38
  %v78 = vrot.slane %v71, 7
  %vm79 = vcmask 1041409
  %v80 = vsel %vm79, %v78, %v70
  %v81 = vrot.slane %v72, 6
  %vm82 = vcmask 1042434
  %v83 = vsel %vm82, %v81, %v80
  %v84 = vrot.slane %v73, 5
  %vm85 = vcmask 1043459
  %v86 = vsel %vm85, %v84, %v83
  %v87 = vrot.slane %v74, 4
  %vm88 = vcmask 1044484
  %v89 = vsel %vm88, %v87, %v86
  %v90 = vrot.slane %v75, 3
  %vm91 = vcmask 1045509
  %v92 = vsel %vm91, %v90, %v89
  %v93 = vrot.slane %v76, 2
  %vm94 = vcmask 1046534
  %v95 = vsel %vm94, %v93, %v92
  %v96 = vrot.slane %v77, 1
  %vm97 = vcmask 1047559
  %v98 = vsel %vm97, %v96, %v95
  %v99 = vpack.c.b16 %v98, %v98
  %v117 = vunpack.c.l.b16 %v39
  %v118 = vunpack.c.l.b16 %v40
  %v119 = vunpack.c.l.b16 %v41
  %v120 = vunpack.c.l.b16 %v42
  %v121 = vunpack.c.l.b16 %v43
  %v122 = vunpack.c.l.b16 %v44
  %v123 = vunpack.c.l.b16 %v45
  %v124 = vunpack.c.l.b16 %v46
  %v125 = vunpack.c.l.b16 %v47
  %v126 = vunpack.c.l.b16 %v48
  %v127 = vunpack.c.l.b16 %v49
  %v128 = vunpack.c.l.b16 %v50
  %v129 = vunpack.c.l.b16 %v51
  %v130 = vunpack.c.l.b16 %v52
  %v131 = vunpack.c.l.b16 %v53
  %v132 = vunpack.c.l.b16 %v54
  %v133 = vpack.c.b16 %v118, %v117
  %v134 = vpack.c.b16 %v120, %v119
  %v135 = vpack.c.b16 %v122, %v121
  %v136 = vpack.c.b16 %v124, %v123
  %v137 = vpack.c.b16 %v126, %v125
  %v138 = vpack.c.b16 %v128, %v127
  %v139 = vpack.c.b16 %v130, %v129
  %v140 = vpack.c.b16 %v132, %v131
  %149 = vmatprep.subr.bf16.mxu0 0
  %150 = vmatpush1.bf16.msra.mxu0 %v140
  %151 = vmatprep.subr.bf16.mxu0 0
  %152 = vmatpush1.bf16.msra.mxu0 %v139
  %153 = vmatprep.subr.bf16.mxu0 0
  %154 = vmatpush1.bf16.msra.mxu0 %v138
  %155 = vmatprep.subr.bf16.mxu0 0
  %156 = vmatpush1.bf16.msra.mxu0 %v137
  %157 = vmatprep.subr.bf16.mxu0 0
  %158 = vmatpush1.bf16.msra.mxu0 %v136
  %159 = vmatprep.subr.bf16.mxu0 0
  %160 = vmatpush1.bf16.msra.mxu0 %v135
  %161 = vmatprep.subr.bf16.mxu0 0
  %162 = vmatpush1.bf16.msra.mxu0 %v134
  %163 = vmatprep.subr.bf16.mxu0 0
  %164 = vmatpush1.bf16.msra.mxu0 %v133
  %165 = vmatprep.subr.bf16.mxu0 0
  %166 = vmatpush2.bf16.msra.mxu0 0
  %167 = vmatprep.subr.bf16.mxu0 0
  %168 = vmatpush2.bf16.msra.mxu0 0
  %169 = vmatprep.subr.bf16.mxu0 0
  %170 = vmatpush2.bf16.msra.mxu0 0
  %171 = vmatprep.subr.bf16.mxu0 0
  %172 = vmatpush2.bf16.msra.mxu0 0
  %173 = vmatprep.subr.bf16.mxu0 0
  %174 = vmatpush2.bf16.msra.mxu0 0
  %175 = vmatprep.subr.bf16.mxu0 0
  %176 = vmatpush2.bf16.msra.mxu0 0
  %177 = vmatprep.subr.bf16.mxu0 0
  %178 = vmatpush2.bf16.msra.mxu0 0
  %179 = vmatprep.subr.bf16.mxu0 0
  %180 = vmatpush2.bf16.msra.mxu0 0
  %181 = vmatprep.mubr.bf16.mxu0 0
  %182 = vmatmul.mubr.bf16.gmra.mxu0 %v99
  %v183 = vpop.f32.mrf.mxu0
  %v184 = vadd.f32 %v60, %v183
  %v185 = vpop.f32.mrf.mxu0
  %v186 = vpop.f32.mrf.mxu0
  %v187 = vpop.f32.mrf.mxu0
  %188 = vdwg.mxu0
  %189 = vst [vmem:[%s3] sm:$0xff] %v184
  // Predicated region
  $region14: #{run.19} parent=0 // pred_check
    _
  $region15: #{run.19} parent=0 // pred_check_branch
    %191 = sbr.rel (0) target = $region17
  $region16: #{run.19} parent=0 // pred_region
    _
  $region17: #{run.19} parent=0 // pred_fallthru
    _
  // Predicated region
  $region18: #{run.19} parent=0 // pred_check
    _
  $region19: #{run.19} parent=0 // pred_check_branch
    %193 = sbr.rel (0) target = $region21
  $region20: #{run.19} parent=0 // pred_region
    _
  $region21: #{run.19} parent=0 // pred_fallthru
    _

</llo_original>
